<compile_context>
chip_gen: v7x
topology: tpu7x:2x2x1
jax: 0.10.0
libtpu: 0.0.40
codegen_flags: <defaults>
</compile_context>

<pallas_src>
import functools

import jax
import jax.numpy as jnp
import numpy as np
from jax.experimental import pallas as pl
from jax.experimental.pallas import tpu as pltpu


def _layer_norm(x, gamma, beta, eps=1e-5):
    mu = jnp.mean(x, axis=-1, keepdims=True)
    var = jnp.mean((x - mu) ** 2, axis=-1, keepdims=True)
    return (x - mu) * jax.lax.rsqrt(var + eps) * gamma + beta


def han_kernel(B, T, D, nhead, dff, compute_dtype,
               q_ref, v_ref,
               cm_wq_ref, cm_bq_ref, cm_wkv_ref, cm_bkv_ref, cm_wo_ref, cm_bo_ref,
               sa_wq_ref, sa_bq_ref, sa_wkv_ref, sa_bkv_ref, sa_wo_ref, sa_bo_ref,
               w1_ref, b1_ref, w2_ref, b2_ref,
               g1_ref, be1_ref, g2_ref, be2_ref,
               out_ref):
    hd = D // nhead
    G = B * nhead                        # flattened (batch, head) einsum batch dim
    scale = 1.0 / float(np.sqrt(hd))

    def tile_b(w):
        # (nhead, ...) -> (B*nhead, ...): replicate head-major weights over the
        # batch so every einsum below is a plain single-batch-dim 3-D matmul.
        return jnp.broadcast_to(w[None], (B,) + w.shape).reshape((G,) + w.shape[1:])

    def heads(x):
        # (B, T, D) -> (B*nhead, T, D): replicate activations over heads.
        return jnp.broadcast_to(x[:, None], (B, nhead, T, D)).reshape(G, T, D)

    q_f32 = q_ref[...]                                   # (B, T, D) f32 (residual path)
    qc = q_f32.astype(compute_dtype)
    vc = v_ref[...].astype(compute_dtype)

    def mha(xq, xkv, wq_ref, bq_ref, wkv_ref, bkv_ref, wo_ref, bo_ref):
        xq_g = heads(xq)                                  # (G, T, D)   bf16
        xkv_g = heads(xkv)                                # (G, T, D)   bf16
        wq = tile_b(wq_ref[...])                          # (G, D, hd)  bf16
        wkv = tile_b(wkv_ref[...])                        # (G, D, 2hd) bf16 (fused K|V)
        bq = tile_b(bq_ref[...])                          # (G, 1, hd)  f32
        bkv = tile_b(bkv_ref[...])                        # (G, 1, 2hd) f32
        wo = tile_b(wo_ref[...])                          # (G, hd, D)  bf16

        # head-major projections (weights pre-transposed on host, no .T here)
        q = jnp.einsum('gtd,gdk->gtk', xq_g, wq,
                       preferred_element_type=jnp.float32) + bq          # (G, T, hd)
        kv = jnp.einsum('gtd,gdk->gtk', xkv_g, wkv,
                        preferred_element_type=jnp.float32) + bkv        # (G, T, 2hd)
        k = kv[:, :, :hd]
        v = kv[:, :, hd:]

        # scores + softmax (f32, numerically stable)
        s = jnp.einsum('gtk,gsk->gts', q.astype(compute_dtype),
                       k.astype(compute_dtype),
                       preferred_element_type=jnp.float32) * scale       # (G, T, T)
        s = s - jnp.max(s, axis=-1, keepdims=True)
        p = jnp.exp(s)
        p = p * pl.reciprocal(jnp.sum(p, axis=-1, keepdims=True), approx=True)

        ctx = jnp.einsum('gts,gsk->gtk', p.astype(compute_dtype),
                         v.astype(compute_dtype),
                         preferred_element_type=jnp.float32)             # (G, T, hd)

        # per-head output projection, heads reduced in registers
        out_h = jnp.einsum('gtk,gkd->gtd', ctx.astype(compute_dtype), wo,
                           preferred_element_type=jnp.float32)           # (G, T, D)
        out = jnp.sum(out_h.reshape(B, nhead, T, D), axis=1)             # (B, T, D)
        return out + bo_ref[...]

    # cross-modal attention: Q = src_q, K = V = src_v
    src1 = mha(qc, vc, cm_wq_ref, cm_bq_ref, cm_wkv_ref, cm_bkv_ref,
               cm_wo_ref, cm_bo_ref)
    # self attention: Q = K = V = src_q
    src2 = mha(qc, qc, sa_wq_ref, sa_bq_ref, sa_wkv_ref, sa_bkv_ref,
               sa_wo_ref, sa_bo_ref)

    x = q_f32 + src1 + src2                               # dropout11/12 = identity
    x = _layer_norm(x, g1_ref[...], be1_ref[...])

    # feed-forward (weights pre-transposed on host: w1t (D,dff), w2t (dff,D))
    h1 = jnp.einsum('btd,bdf->btf', x.astype(compute_dtype),
                    jnp.broadcast_to(w1_ref[...][None], (B, D, dff)),
                    preferred_element_type=jnp.float32) + b1_ref[...]
    h1 = jnp.maximum(h1, 0.0)
    ff = jnp.einsum('btf,bfd->btd', h1.astype(compute_dtype),
                    jnp.broadcast_to(w2_ref[...][None], (B, dff, D)),
                    preferred_element_type=jnp.float32) + b2_ref[...]
    x = x + ff                                            # dropout / dropout2 = identity
    x = _layer_norm(x, g2_ref[...], be2_ref[...])

    out_ref[...] = x.astype(out_ref.dtype)


_WEIGHT_NAMES = [
    "cm_wq", "cm_bq", "cm_wkv", "cm_bkv", "cm_wo", "cm_bo",
    "sa_wq", "sa_bq", "sa_wkv", "sa_bkv", "sa_wo", "sa_bo",
    "w1t", "b1", "w2t", "b2",
    "g1", "be1", "g2", "be2",
]


def prepare_params(params, *, d_model, nhead, compute_dtype=jnp.bfloat16):
    """Repack PyTorch-layout params into head-major, pre-transposed kernel params."""
    D = d_model
    assert D % nhead == 0
    hd = D // nhead

    def attn_params(in_w, in_b, out_w, out_b):
        Wq, Wk, Wv = in_w[:D], in_w[D:2 * D], in_w[2 * D:]
        bq, bk, bv = in_b[0, :D], in_b[0, D:2 * D], in_b[0, 2 * D:]
        wq_hm = jnp.transpose(Wq.reshape(nhead, hd, D), (0, 2, 1))       # (n, D, hd)
        wk_hm = jnp.transpose(Wk.reshape(nhead, hd, D), (0, 2, 1))
        wv_hm = jnp.transpose(Wv.reshape(nhead, hd, D), (0, 2, 1))
        wkv_hm = jnp.concatenate([wk_hm, wv_hm], axis=-1)                # (n, D, 2hd)
        bq_hm = bq.reshape(nhead, 1, hd)
        bkv_hm = jnp.concatenate([bk.reshape(nhead, 1, hd),
                                  bv.reshape(nhead, 1, hd)], axis=-1)    # (n, 1, 2hd)
        wo_hm = jnp.transpose(out_w).reshape(nhead, hd, D)               # (n, hd, D)
        bo = out_b.reshape(1, 1, D)
        return (wq_hm.astype(compute_dtype), bq_hm.astype(jnp.float32),
                wkv_hm.astype(compute_dtype), bkv_hm.astype(jnp.float32),
                wo_hm.astype(compute_dtype), bo.astype(jnp.float32))

    cm = attn_params(params["cm_in_w"], params["cm_in_b"],
                     params["cm_out_w"], params["cm_out_b"])
    sa = attn_params(params["sa_in_w"], params["sa_in_b"],
                     params["sa_out_w"], params["sa_out_b"])

    kp = {}
    for name, val in zip(_WEIGHT_NAMES[0:6], cm):
        kp[name] = val
    for name, val in zip(_WEIGHT_NAMES[6:12], sa):
        kp[name] = val
    kp["w1t"] = jnp.transpose(params["w1"]).astype(compute_dtype)        # (D, dff)
    kp["b1"] = params["b1"].reshape(1, 1, -1).astype(jnp.float32)
    kp["w2t"] = jnp.transpose(params["w2"]).astype(compute_dtype)        # (dff, D)
    kp["b2"] = params["b2"].reshape(1, 1, -1).astype(jnp.float32)
    kp["g1"] = params["g1"].reshape(1, 1, -1).astype(jnp.float32)
    kp["be1"] = params["be1"].reshape(1, 1, -1).astype(jnp.float32)
    kp["g2"] = params["g2"].reshape(1, 1, -1).astype(jnp.float32)
    kp["be2"] = params["be2"].reshape(1, 1, -1).astype(jnp.float32)
    return kp


def han_layer(src_q, src_v, kparams, *, d_model, nhead, dim_feedforward):
    """src_q, src_v: (B, T, D) float32.  Returns (B, T, D) float32."""
    B, T, D = src_q.shape
    assert D == d_model and D % nhead == 0
    dff = dim_feedforward

    weights = [kparams[n] for n in _WEIGHT_NAMES]

    def full_spec(a):
        nd = a.ndim
        return pl.BlockSpec(a.shape, lambda i, nd=nd: (0,) * nd)

    in_specs = [full_spec(src_q), full_spec(src_v)] + [full_spec(w) for w in weights]

    kernel = functools.partial(han_kernel, B, T, D, nhead, dff, jnp.bfloat16)

    # Whole batch per step: grid=(1,) amortises the per-step pipeline overhead.
    # TODO(synk): for larger B on v7x, re-introduce a size>=2 "parallel" grid
    # axis over batch blocks so both TensorCores are used.
    return pl.pallas_call(
        kernel,
        out_shape=jax.ShapeDtypeStruct((B, T, D), jnp.float32),
        grid_spec=pltpu.PrefetchScalarGridSpec(
            num_scalar_prefetch=0,
            grid=(1,),
            in_specs=in_specs,
            out_specs=pl.BlockSpec((B, T, D), lambda i: (0, 0, 0)),
        ),
        compiler_params=pltpu.CompilerParams(
            dimension_semantics=("arbitrary",),
            vmem_limit_bytes=32 * 1024 * 1024,   # explicit budget, safe on v7x (64 MiB)
        ),
    )(src_q, src_v, *weights)


# ----------------------------- reference (pure JAX, f32) ------------------- #
def _ref_mha(x_q, x_kv, in_w, in_b, out_w, out_b, nhead):
    T, D = x_q.shape
    hd = D // nhead
    Wq, Wk, Wv = in_w[:D], in_w[D:2 * D], in_w[2 * D:]
    bq, bk, bv = in_b[0, :D], in_b[0, D:2 * D], in_b[0, 2 * D:]
    Q = x_q @ Wq.T + bq
    K = x_kv @ Wk.T + bk
    V = x_kv @ Wv.T + bv
    outs = []
    for h in range(nhead):
        Qh, Kh, Vh = (M[:, h * hd:(h + 1) * hd] for M in (Q, K, V))
        s = (Qh @ Kh.T) / np.sqrt(hd)
        p = jax.nn.softmax(s, axis=-1)
        outs.append(p @ Vh)
    return jnp.concatenate(outs, axis=-1) @ out_w.T + out_b[0]


def _ref_ln(x, g, b, eps=1e-5):
    mu = x.mean(-1, keepdims=True)
    var = ((x - mu) ** 2).mean(-1, keepdims=True)
    return (x - mu) / jnp.sqrt(var + eps) * g[0] + b[0]


def han_layer_ref(src_q, src_v, p, *, nhead):
    outs = []
    for b in range(src_q.shape[0]):
        q, v = src_q[b], src_v[b]
        src1 = _ref_mha(q, v, p["cm_in_w"], p["cm_in_b"], p["cm_out_w"], p["cm_out_b"], nhead)
        src2 = _ref_mha(q, q, p["sa_in_w"], p["sa_in_b"], p["sa_out_w"], p["sa_out_b"], nhead)
        x = _ref_ln(q + src1 + src2, p["g1"], p["be1"])
        ff = jnp.maximum(x @ p["w1"].T + p["b1"][0], 0.0) @ p["w2"].T + p["b2"][0]
        x = _ref_ln(x + ff, p["g2"], p["be2"])
        outs.append(x)
    return jnp.stack(outs, axis=0)


# ---------------------------------- main ----------------------------------- #
if __name__ == "__main__":
    B, T, D, NHEAD, DFF = 2, 8, 32, 4, 64

    key = jax.random.PRNGKey(0)
    ks = jax.random.split(key, 16)
    s = 0.1

    params = {
        # cross-modal attention (nn.MultiheadAttention packed projections)
        "cm_in_w": jax.random.normal(ks[0], (3 * D, D), jnp.float32) * s,
        "cm_in_b": jax.random.normal(ks[1], (1, 3 * D), jnp.float32) * s,
        "cm_out_w": jax.random.normal(ks[2], (D, D), jnp.float32) * s,
        "cm_out_b": jax.random.normal(ks[3], (1, D), jnp.float32) * s,
        # self attention
        "sa_in_w": jax.random.normal(ks[4], (3 * D, D), jnp.float32) * s,
        "sa_in_b": jax.random.normal(ks[5], (1, 3 * D), jnp.float32) * s,
        "sa_out_w": jax.random.normal(ks[6], (D, D), jnp.float32) * s,
        "sa_out_b": jax.random.normal(ks[7], (1, D), jnp.float32) * s,
        # feed-forward
        "w1": jax.random.normal(ks[8], (DFF, D), jnp.float32) * s,
        "b1": jax.random.normal(ks[9], (1, DFF), jnp.float32) * s,
        "w2": jax.random.normal(ks[10], (D, DFF), jnp.float32) * s,
        "b2": jax.random.normal(ks[11], (1, D), jnp.float32) * s,
        # layer norms
        "g1": jnp.ones((1, D), jnp.float32),
        "be1": jnp.zeros((1, D), jnp.float32),
        "g2": jnp.ones((1, D), jnp.float32),
        "be2": jnp.zeros((1, D), jnp.float32),
    }

    src_q = jax.random.normal(ks[12], (B, T, D), jnp.float32)
    src_v = jax.random.normal(ks[13], (B, T, D), jnp.float32)

    kparams = prepare_params(params, d_model=D, nhead=NHEAD)

    out = han_layer(src_q, src_v, kparams, d_model=D, nhead=NHEAD, dim_feedforward=DFF)
    out = jax.block_until_ready(out)

    ref = han_layer_ref(src_q, src_v, params, nhead=NHEAD)
    # bf16 MXU inputs (f32 accumulation) -> compare with bf16-appropriate tolerance.
    np.testing.assert_allclose(np.asarray(out), np.asarray(ref), rtol=3e-2, atol=3e-2)

    print("KERNEL_OK")
</pallas_src>

<mosaic_0001>
module attributes {stable_mosaic.version = 11 : i64} {
  func.func @han_kernel(%arg0: i32, %arg1: memref<2x8x32xf32, #tpu.memory_space<vmem>>, %arg2: memref<2x8x32xf32, #tpu.memory_space<vmem>>, %arg3: memref<4x32x8xbf16, #tpu.memory_space<vmem>>, %arg4: memref<4x1x8xf32, #tpu.memory_space<vmem>>, %arg5: memref<4x32x16xbf16, #tpu.memory_space<vmem>>, %arg6: memref<4x1x16xf32, #tpu.memory_space<vmem>>, %arg7: memref<4x8x32xbf16, #tpu.memory_space<vmem>>, %arg8: memref<1x1x32xf32, #tpu.memory_space<vmem>>, %arg9: memref<4x32x8xbf16, #tpu.memory_space<vmem>>, %arg10: memref<4x1x8xf32, #tpu.memory_space<vmem>>, %arg11: memref<4x32x16xbf16, #tpu.memory_space<vmem>>, %arg12: memref<4x1x16xf32, #tpu.memory_space<vmem>>, %arg13: memref<4x8x32xbf16, #tpu.memory_space<vmem>>, %arg14: memref<1x1x32xf32, #tpu.memory_space<vmem>>, %arg15: memref<32x64xbf16, #tpu.memory_space<vmem>>, %arg16: memref<1x1x64xf32, #tpu.memory_space<vmem>>, %arg17: memref<64x32xbf16, #tpu.memory_space<vmem>>, %arg18: memref<1x1x32xf32, #tpu.memory_space<vmem>>, %arg19: memref<1x1x32xf32, #tpu.memory_space<vmem>>, %arg20: memref<1x1x32xf32, #tpu.memory_space<vmem>>, %arg21: memref<1x1x32xf32, #tpu.memory_space<vmem>>, %arg22: memref<1x1x32xf32, #tpu.memory_space<vmem>>, %arg23: memref<2x8x32xf32, #tpu.memory_space<vmem>>) attributes {dimension_semantics = [#tpu.dimension_semantics<arbitrary>], iteration_bounds = array<i64: 1>, scalar_prefetch = 0 : i64, scratch_operands = 0 : i64, tpu.core_type = #tpu.core_type<tc>, window_params = [{pipeline_mode = #tpu.pipeline_mode<synchronous>, transform_indices = @transform_0, window_bounds = array<i64: 2, 8, 32>}, {pipeline_mode = #tpu.pipeline_mode<synchronous>, transform_indices = @transform_1, window_bounds = array<i64: 2, 8, 32>}, {pipeline_mode = #tpu.pipeline_mode<synchronous>, transform_indices = @transform_2, window_bounds = array<i64: 4, 32, 8>}, {pipeline_mode = #tpu.pipeline_mode<synchronous>, transform_indices = @transform_3, window_bounds = array<i64: 4, 1, 8>}, {pipeline_mode = #tpu.pipeline_mode<synchronous>, transform_indices = @transform_4, window_bounds = array<i64: 4, 32, 16>}, {pipeline_mode = #tpu.pipeline_mode<synchronous>, transform_indices = @transform_5, window_bounds = array<i64: 4, 1, 16>}, {pipeline_mode = #tpu.pipeline_mode<synchronous>, transform_indices = @transform_6, window_bounds = array<i64: 4, 8, 32>}, {pipeline_mode = #tpu.pipeline_mode<synchronous>, transform_indices = @transform_7, window_bounds = array<i64: 1, 1, 32>}, {pipeline_mode = #tpu.pipeline_mode<synchronous>, transform_indices = @transform_8, window_bounds = array<i64: 4, 32, 8>}, {pipeline_mode = #tpu.pipeline_mode<synchronous>, transform_indices = @transform_9, window_bounds = array<i64: 4, 1, 8>}, {pipeline_mode = #tpu.pipeline_mode<synchronous>, transform_indices = @transform_10, window_bounds = array<i64: 4, 32, 16>}, {pipeline_mode = #tpu.pipeline_mode<synchronous>, transform_indices = @transform_11, window_bounds = array<i64: 4, 1, 16>}, {pipeline_mode = #tpu.pipeline_mode<synchronous>, transform_indices = @transform_12, window_bounds = array<i64: 4, 8, 32>}, {pipeline_mode = #tpu.pipeline_mode<synchronous>, transform_indices = @transform_13, window_bounds = array<i64: 1, 1, 32>}, {pipeline_mode = #tpu.pipeline_mode<synchronous>, transform_indices = @transform_14, window_bounds = array<i64: 32, 64>}, {pipeline_mode = #tpu.pipeline_mode<synchronous>, transform_indices = @transform_15, window_bounds = array<i64: 1, 1, 64>}, {pipeline_mode = #tpu.pipeline_mode<synchronous>, transform_indices = @transform_16, window_bounds = array<i64: 64, 32>}, {pipeline_mode = #tpu.pipeline_mode<synchronous>, transform_indices = @transform_17, window_bounds = array<i64: 1, 1, 32>}, {pipeline_mode = #tpu.pipeline_mode<synchronous>, transform_indices = @transform_18, window_bounds = array<i64: 1, 1, 32>}, {pipeline_mode = #tpu.pipeline_mode<synchronous>, transform_indices = @transform_19, window_bounds = array<i64: 1, 1, 32>}, {pipeline_mode = #tpu.pipeline_mode<synchronous>, transform_indices = @transform_20, window_bounds = array<i64: 1, 1, 32>}, {pipeline_mode = #tpu.pipeline_mode<synchronous>, transform_indices = @transform_21, window_bounds = array<i64: 1, 1, 32>}, {pipeline_mode = #tpu.pipeline_mode<synchronous>, transform_indices = @transform_22, window_bounds = array<i64: 2, 8, 32>}]} {
    %c0 = arith.constant 0 : index
    %c0_0 = arith.constant 0 : index
    %c0_1 = arith.constant 0 : index
    %0 = vector.load %arg1[%c0, %c0_0, %c0_1] : memref<2x8x32xf32, #tpu.memory_space<vmem>>, vector<2x8x32xf32>
    %1 = arith.truncf %0 : vector<2x8x32xf32> to vector<2x8x32xbf16>
    %c0_2 = arith.constant 0 : index
    %c0_3 = arith.constant 0 : index
    %c0_4 = arith.constant 0 : index
    %2 = vector.load %arg2[%c0_2, %c0_3, %c0_4] : memref<2x8x32xf32, #tpu.memory_space<vmem>>, vector<2x8x32xf32>
    %3 = arith.truncf %2 : vector<2x8x32xf32> to vector<2x8x32xbf16>
    %4 = vector.shape_cast %1 : vector<2x8x32xbf16> to vector<2x1x8x32xbf16>
    %5 = vector.shape_cast %4 : vector<2x1x8x32xbf16> to vector<2x1x8x32xbf16>
    %6 = vector.broadcast %5 : vector<2x1x8x32xbf16> to vector<2x4x8x32xbf16>
    %7 = vector.shape_cast %6 : vector<2x4x8x32xbf16> to vector<8x8x32xbf16>
    %8 = vector.shape_cast %3 : vector<2x8x32xbf16> to vector<2x1x8x32xbf16>
    %9 = vector.shape_cast %8 : vector<2x1x8x32xbf16> to vector<2x1x8x32xbf16>
    %10 = vector.broadcast %9 : vector<2x1x8x32xbf16> to vector<2x4x8x32xbf16>
    %11 = vector.shape_cast %10 : vector<2x4x8x32xbf16> to vector<8x8x32xbf16>
    %c0_5 = arith.constant 0 : index
    %c0_6 = arith.constant 0 : index
    %c0_7 = arith.constant 0 : index
    %12 = vector.load %arg3[%c0_5, %c0_6, %c0_7] : memref<4x32x8xbf16, #tpu.memory_space<vmem>>, vector<4x32x8xbf16>
    %13 = vector.shape_cast %12 : vector<4x32x8xbf16> to vector<1x4x32x8xbf16>
    %14 = vector.shape_cast %13 : vector<1x4x32x8xbf16> to vector<1x4x32x8xbf16>
    %15 = vector.broadcast %14 : vector<1x4x32x8xbf16> to vector<2x4x32x8xbf16>
    %16 = vector.shape_cast %15 : vector<2x4x32x8xbf16> to vector<8x32x8xbf16>
    %c0_8 = arith.constant 0 : index
    %c0_9 = arith.constant 0 : index
    %c0_10 = arith.constant 0 : index
    %17 = vector.load %arg5[%c0_8, %c0_9, %c0_10] : memref<4x32x16xbf16, #tpu.memory_space<vmem>>, vector<4x32x16xbf16>
    %18 = vector.shape_cast %17 : vector<4x32x16xbf16> to vector<1x4x32x16xbf16>
    %19 = vector.shape_cast %18 : vector<1x4x32x16xbf16> to vector<1x4x32x16xbf16>
    %20 = vector.broadcast %19 : vector<1x4x32x16xbf16> to vector<2x4x32x16xbf16>
    %21 = vector.shape_cast %20 : vector<2x4x32x16xbf16> to vector<8x32x16xbf16>
    %c0_11 = arith.constant 0 : index
    %c0_12 = arith.constant 0 : index
    %c0_13 = arith.constant 0 : index
    %22 = vector.load %arg4[%c0_11, %c0_12, %c0_13] : memref<4x1x8xf32, #tpu.memory_space<vmem>>, vector<4x1x8xf32>
    %23 = vector.shape_cast %22 : vector<4x1x8xf32> to vector<1x4x1x8xf32>
    %24 = vector.shape_cast %23 : vector<1x4x1x8xf32> to vector<1x4x1x8xf32>
    %25 = vector.broadcast %24 : vector<1x4x1x8xf32> to vector<2x4x1x8xf32>
    %26 = vector.shape_cast %25 : vector<2x4x1x8xf32> to vector<8x1x8xf32>
    %c0_14 = arith.constant 0 : index
    %c0_15 = arith.constant 0 : index
    %c0_16 = arith.constant 0 : index
    %27 = vector.load %arg6[%c0_14, %c0_15, %c0_16] : memref<4x1x16xf32, #tpu.memory_space<vmem>>, vector<4x1x16xf32>
    %28 = vector.shape_cast %27 : vector<4x1x16xf32> to vector<1x4x1x16xf32>
    %29 = vector.shape_cast %28 : vector<1x4x1x16xf32> to vector<1x4x1x16xf32>
    %30 = vector.broadcast %29 : vector<1x4x1x16xf32> to vector<2x4x1x16xf32>
    %31 = vector.shape_cast %30 : vector<2x4x1x16xf32> to vector<8x1x16xf32>
    %c0_17 = arith.constant 0 : index
    %c0_18 = arith.constant 0 : index
    %c0_19 = arith.constant 0 : index
    %32 = vector.load %arg7[%c0_17, %c0_18, %c0_19] : memref<4x8x32xbf16, #tpu.memory_space<vmem>>, vector<4x8x32xbf16>
    %33 = vector.shape_cast %32 : vector<4x8x32xbf16> to vector<1x4x8x32xbf16>
    %34 = vector.shape_cast %33 : vector<1x4x8x32xbf16> to vector<1x4x8x32xbf16>
    %35 = vector.broadcast %34 : vector<1x4x8x32xbf16> to vector<2x4x8x32xbf16>
    %36 = vector.shape_cast %35 : vector<2x4x8x32xbf16> to vector<8x8x32xbf16>
    "tpu.trace_start"() <{level = 10 : i32, message = "gtd,gdk->gtk"}> : () -> ()
    %cst = arith.constant dense<0.000000e+00> : vector<8x8x8xf32>
    %37 = tpu.matmul %7, %16, %cst {dimension_numbers = #tpu.dot_dimension_numbers<[2], [1], [1], [2], [0, 0, 0, 1, 1, 2], [0], [0]>} : vector<8x8x32xbf16>, vector<8x32x8xbf16>, vector<8x8x8xf32> -> vector<8x8x8xf32>
    "tpu.trace_stop"() : () -> ()
    %38 = vector.broadcast %26 : vector<8x1x8xf32> to vector<8x8x8xf32>
    %39 = arith.addf %37, %38 : vector<8x8x8xf32>
    "tpu.trace_start"() <{level = 10 : i32, message = "gtd,gdk->gtk"}> : () -> ()
    %cst_20 = arith.constant dense<0.000000e+00> : vector<8x8x16xf32>
    %40 = tpu.matmul %11, %21, %cst_20 {dimension_numbers = #tpu.dot_dimension_numbers<[2], [1], [1], [2], [0, 0, 0, 1, 1, 2], [0], [0]>} : vector<8x8x32xbf16>, vector<8x32x16xbf16>, vector<8x8x16xf32> -> vector<8x8x16xf32>
    "tpu.trace_stop"() : () -> ()
    %41 = vector.broadcast %31 : vector<8x1x16xf32> to vector<8x8x16xf32>
    %42 = arith.addf %40, %41 : vector<8x8x16xf32>
    %43 = vector.extract_strided_slice %42 {offsets = [0, 0, 0], sizes = [8, 8, 8], strides = [1, 1, 1]} : vector<8x8x16xf32> to vector<8x8x8xf32>
    %44 = vector.extract_strided_slice %42 {offsets = [0, 0, 8], sizes = [8, 8, 8], strides = [1, 1, 1]} : vector<8x8x16xf32> to vector<8x8x8xf32>
    %45 = arith.truncf %39 : vector<8x8x8xf32> to vector<8x8x8xbf16>
    %46 = arith.truncf %43 : vector<8x8x8xf32> to vector<8x8x8xbf16>
    "tpu.trace_start"() <{level = 10 : i32, message = "gtk,gsk->gts"}> : () -> ()
    %cst_21 = arith.constant dense<0.000000e+00> : vector<8x8x8xf32>
    %47 = tpu.matmul %45, %46, %cst_21 {dimension_numbers = #tpu.dot_dimension_numbers<[2], [2], [1], [1], [0, 0, 0, 1, 1, 1], [0], [0]>} : vector<8x8x8xbf16>, vector<8x8x8xbf16>, vector<8x8x8xf32> -> vector<8x8x8xf32>
    "tpu.trace_stop"() : () -> ()
    %cst_22 = arith.constant 0.353553385 : f32
    %48 = vector.broadcast %cst_22 : f32 to vector<8x8x8xf32>
    %49 = arith.mulf %47, %48 : vector<8x8x8xf32>
    %cst_23 = arith.constant dense<0xFF800000> : vector<8x8xf32>
    %50 = vector.multi_reduction <maximumf>, %49, %cst_23 [2] : vector<8x8x8xf32> to vector<8x8xf32>
    %51 = vector.shape_cast %50 : vector<8x8xf32> to vector<8x8x1xf32>
    %52 = vector.broadcast %51 : vector<8x8x1xf32> to vector<8x8x8xf32>
    %53 = arith.subf %49, %52 : vector<8x8x8xf32>
    %54 = math.exp %53 : vector<8x8x8xf32>
    %cst_24 = arith.constant dense<0.000000e+00> : vector<8x8xf32>
    %55 = vector.multi_reduction <add>, %54, %cst_24 [2] : vector<8x8x8xf32> to vector<8x8xf32>
    %56 = vector.shape_cast %55 : vector<8x8xf32> to vector<8x8x1xf32>
    %57 = tpu.reciprocal %56 {approx = true} : vector<8x8x1xf32> -> vector<8x8x1xf32>
    %58 = vector.broadcast %57 : vector<8x8x1xf32> to vector<8x8x8xf32>
    %59 = arith.mulf %54, %58 : vector<8x8x8xf32>
    %60 = arith.truncf %59 : vector<8x8x8xf32> to vector<8x8x8xbf16>
    %61 = arith.truncf %44 : vector<8x8x8xf32> to vector<8x8x8xbf16>
    "tpu.trace_start"() <{level = 10 : i32, message = "gts,gsk->gtk"}> : () -> ()
    %cst_25 = arith.constant dense<0.000000e+00> : vector<8x8x8xf32>
    %62 = tpu.matmul %60, %61, %cst_25 {dimension_numbers = #tpu.dot_dimension_numbers<[2], [1], [1], [2], [0, 0, 0, 1, 1, 2], [0], [0]>} : vector<8x8x8xbf16>, vector<8x8x8xbf16>, vector<8x8x8xf32> -> vector<8x8x8xf32>
    "tpu.trace_stop"() : () -> ()
    %63 = arith.truncf %62 : vector<8x8x8xf32> to vector<8x8x8xbf16>
    "tpu.trace_start"() <{level = 10 : i32, message = "gtk,gkd->gtd"}> : () -> ()
    %cst_26 = arith.constant dense<0.000000e+00> : vector<8x8x32xf32>
    %64 = tpu.matmul %63, %36, %cst_26 {dimension_numbers = #tpu.dot_dimension_numbers<[2], [1], [1], [2], [0, 0, 0, 1, 1, 2], [0], [0]>} : vector<8x8x8xbf16>, vector<8x8x32xbf16>, vector<8x8x32xf32> -> vector<8x8x32xf32>
    "tpu.trace_stop"() : () -> ()
    %65 = vector.shape_cast %64 : vector<8x8x32xf32> to vector<2x4x8x32xf32>
    %cst_27 = arith.constant dense<0.000000e+00> : vector<2x8x32xf32>
    %66 = vector.multi_reduction <add>, %65, %cst_27 [1] : vector<2x4x8x32xf32> to vector<2x8x32xf32>
    %c0_28 = arith.constant 0 : index
    %c0_29 = arith.constant 0 : index
    %c0_30 = arith.constant 0 : index
    %67 = vector.load %arg8[%c0_28, %c0_29, %c0_30] : memref<1x1x32xf32, #tpu.memory_space<vmem>>, vector<1x1x32xf32>
    %68 = vector.broadcast %67 : vector<1x1x32xf32> to vector<2x8x32xf32>
    %69 = arith.addf %66, %68 : vector<2x8x32xf32>
    %70 = vector.shape_cast %1 : vector<2x8x32xbf16> to vector<2x1x8x32xbf16>
    %71 = vector.shape_cast %70 : vector<2x1x8x32xbf16> to vector<2x1x8x32xbf16>
    %72 = vector.broadcast %71 : vector<2x1x8x32xbf16> to vector<2x4x8x32xbf16>
    %73 = vector.shape_cast %72 : vector<2x4x8x32xbf16> to vector<8x8x32xbf16>
    %74 = vector.shape_cast %1 : vector<2x8x32xbf16> to vector<2x1x8x32xbf16>
    %75 = vector.shape_cast %74 : vector<2x1x8x32xbf16> to vector<2x1x8x32xbf16>
    %76 = vector.broadcast %75 : vector<2x1x8x32xbf16> to vector<2x4x8x32xbf16>
    %77 = vector.shape_cast %76 : vector<2x4x8x32xbf16> to vector<8x8x32xbf16>
    %c0_31 = arith.constant 0 : index
    %c0_32 = arith.constant 0 : index
    %c0_33 = arith.constant 0 : index
    %78 = vector.load %arg9[%c0_31, %c0_32, %c0_33] : memref<4x32x8xbf16, #tpu.memory_space<vmem>>, vector<4x32x8xbf16>
    %79 = vector.shape_cast %78 : vector<4x32x8xbf16> to vector<1x4x32x8xbf16>
    %80 = vector.shape_cast %79 : vector<1x4x32x8xbf16> to vector<1x4x32x8xbf16>
    %81 = vector.broadcast %80 : vector<1x4x32x8xbf16> to vector<2x4x32x8xbf16>
    %82 = vector.shape_cast %81 : vector<2x4x32x8xbf16> to vector<8x32x8xbf16>
    %c0_34 = arith.constant 0 : index
    %c0_35 = arith.constant 0 : index
    %c0_36 = arith.constant 0 : index
    %83 = vector.load %arg11[%c0_34, %c0_35, %c0_36] : memref<4x32x16xbf16, #tpu.memory_space<vmem>>, vector<4x32x16xbf16>
    %84 = vector.shape_cast %83 : vector<4x32x16xbf16> to vector<1x4x32x16xbf16>
    %85 = vector.shape_cast %84 : vector<1x4x32x16xbf16> to vector<1x4x32x16xbf16>
    %86 = vector.broadcast %85 : vector<1x4x32x16xbf16> to vector<2x4x32x16xbf16>
    %87 = vector.shape_cast %86 : vector<2x4x32x16xbf16> to vector<8x32x16xbf16>
    %c0_37 = arith.constant 0 : index
    %c0_38 = arith.constant 0 : index
    %c0_39 = arith.constant 0 : index
    %88 = vector.load %arg10[%c0_37, %c0_38, %c0_39] : memref<4x1x8xf32, #tpu.memory_space<vmem>>, vector<4x1x8xf32>
    %89 = vector.shape_cast %88 : vector<4x1x8xf32> to vector<1x4x1x8xf32>
    %90 = vector.shape_cast %89 : vector<1x4x1x8xf32> to vector<1x4x1x8xf32>
    %91 = vector.broadcast %90 : vector<1x4x1x8xf32> to vector<2x4x1x8xf32>
    %92 = vector.shape_cast %91 : vector<2x4x1x8xf32> to vector<8x1x8xf32>
    %c0_40 = arith.constant 0 : index
    %c0_41 = arith.constant 0 : index
    %c0_42 = arith.constant 0 : index
    %93 = vector.load %arg12[%c0_40, %c0_41, %c0_42] : memref<4x1x16xf32, #tpu.memory_space<vmem>>, vector<4x1x16xf32>
    %94 = vector.shape_cast %93 : vector<4x1x16xf32> to vector<1x4x1x16xf32>
    %95 = vector.shape_cast %94 : vector<1x4x1x16xf32> to vector<1x4x1x16xf32>
    %96 = vector.broadcast %95 : vector<1x4x1x16xf32> to vector<2x4x1x16xf32>
    %97 = vector.shape_cast %96 : vector<2x4x1x16xf32> to vector<8x1x16xf32>
    %c0_43 = arith.constant 0 : index
    %c0_44 = arith.constant 0 : index
    %c0_45 = arith.constant 0 : index
    %98 = vector.load %arg13[%c0_43, %c0_44, %c0_45] : memref<4x8x32xbf16, #tpu.memory_space<vmem>>, vector<4x8x32xbf16>
    %99 = vector.shape_cast %98 : vector<4x8x32xbf16> to vector<1x4x8x32xbf16>
    %100 = vector.shape_cast %99 : vector<1x4x8x32xbf16> to vector<1x4x8x32xbf16>
    %101 = vector.broadcast %100 : vector<1x4x8x32xbf16> to vector<2x4x8x32xbf16>
    %102 = vector.shape_cast %101 : vector<2x4x8x32xbf16> to vector<8x8x32xbf16>
    "tpu.trace_start"() <{level = 10 : i32, message = "gtd,gdk->gtk"}> : () -> ()
    %cst_46 = arith.constant dense<0.000000e+00> : vector<8x8x8xf32>
    %103 = tpu.matmul %73, %82, %cst_46 {dimension_numbers = #tpu.dot_dimension_numbers<[2], [1], [1], [2], [0, 0, 0, 1, 1, 2], [0], [0]>} : vector<8x8x32xbf16>, vector<8x32x8xbf16>, vector<8x8x8xf32> -> vector<8x8x8xf32>
    "tpu.trace_stop"() : () -> ()
    %104 = vector.broadcast %92 : vector<8x1x8xf32> to vector<8x8x8xf32>
    %105 = arith.addf %103, %104 : vector<8x8x8xf32>
    "tpu.trace_start"() <{level = 10 : i32, message = "gtd,gdk->gtk"}> : () -> ()
    %cst_47 = arith.constant dense<0.000000e+00> : vector<8x8x16xf32>
    %106 = tpu.matmul %77, %87, %cst_47 {dimension_numbers = #tpu.dot_dimension_numbers<[2], [1], [1], [2], [0, 0, 0, 1, 1, 2], [0], [0]>} : vector<8x8x32xbf16>, vector<8x32x16xbf16>, vector<8x8x16xf32> -> vector<8x8x16xf32>
    "tpu.trace_stop"() : () -> ()
    %107 = vector.broadcast %97 : vector<8x1x16xf32> to vector<8x8x16xf32>
    %108 = arith.addf %106, %107 : vector<8x8x16xf32>
    %109 = vector.extract_strided_slice %108 {offsets = [0, 0, 0], sizes = [8, 8, 8], strides = [1, 1, 1]} : vector<8x8x16xf32> to vector<8x8x8xf32>
    %110 = vector.extract_strided_slice %108 {offsets = [0, 0, 8], sizes = [8, 8, 8], strides = [1, 1, 1]} : vector<8x8x16xf32> to vector<8x8x8xf32>
    %111 = arith.truncf %105 : vector<8x8x8xf32> to vector<8x8x8xbf16>
    %112 = arith.truncf %109 : vector<8x8x8xf32> to vector<8x8x8xbf16>
    "tpu.trace_start"() <{level = 10 : i32, message = "gtk,gsk->gts"}> : () -> ()
    %cst_48 = arith.constant dense<0.000000e+00> : vector<8x8x8xf32>
    %113 = tpu.matmul %111, %112, %cst_48 {dimension_numbers = #tpu.dot_dimension_numbers<[2], [2], [1], [1], [0, 0, 0, 1, 1, 1], [0], [0]>} : vector<8x8x8xbf16>, vector<8x8x8xbf16>, vector<8x8x8xf32> -> vector<8x8x8xf32>
    "tpu.trace_stop"() : () -> ()
    %cst_49 = arith.constant 0.353553385 : f32
    %114 = vector.broadcast %cst_49 : f32 to vector<8x8x8xf32>
    %115 = arith.mulf %113, %114 : vector<8x8x8xf32>
    %cst_50 = arith.constant dense<0xFF800000> : vector<8x8xf32>
    %116 = vector.multi_reduction <maximumf>, %115, %cst_50 [2] : vector<8x8x8xf32> to vector<8x8xf32>
    %117 = vector.shape_cast %116 : vector<8x8xf32> to vector<8x8x1xf32>
    %118 = vector.broadcast %117 : vector<8x8x1xf32> to vector<8x8x8xf32>
    %119 = arith.subf %115, %118 : vector<8x8x8xf32>
    %120 = math.exp %119 : vector<8x8x8xf32>
    %cst_51 = arith.constant dense<0.000000e+00> : vector<8x8xf32>
    %121 = vector.multi_reduction <add>, %120, %cst_51 [2] : vector<8x8x8xf32> to vector<8x8xf32>
    %122 = vector.shape_cast %121 : vector<8x8xf32> to vector<8x8x1xf32>
    %123 = tpu.reciprocal %122 {approx = true} : vector<8x8x1xf32> -> vector<8x8x1xf32>
    %124 = vector.broadcast %123 : vector<8x8x1xf32> to vector<8x8x8xf32>
    %125 = arith.mulf %120, %124 : vector<8x8x8xf32>
    %126 = arith.truncf %125 : vector<8x8x8xf32> to vector<8x8x8xbf16>
    %127 = arith.truncf %110 : vector<8x8x8xf32> to vector<8x8x8xbf16>
    "tpu.trace_start"() <{level = 10 : i32, message = "gts,gsk->gtk"}> : () -> ()
    %cst_52 = arith.constant dense<0.000000e+00> : vector<8x8x8xf32>
    %128 = tpu.matmul %126, %127, %cst_52 {dimension_numbers = #tpu.dot_dimension_numbers<[2], [1], [1], [2], [0, 0, 0, 1, 1, 2], [0], [0]>} : vector<8x8x8xbf16>, vector<8x8x8xbf16>, vector<8x8x8xf32> -> vector<8x8x8xf32>
    "tpu.trace_stop"() : () -> ()
    %129 = arith.truncf %128 : vector<8x8x8xf32> to vector<8x8x8xbf16>
    "tpu.trace_start"() <{level = 10 : i32, message = "gtk,gkd->gtd"}> : () -> ()
    %cst_53 = arith.constant dense<0.000000e+00> : vector<8x8x32xf32>
    %130 = tpu.matmul %129, %102, %cst_53 {dimension_numbers = #tpu.dot_dimension_numbers<[2], [1], [1], [2], [0, 0, 0, 1, 1, 2], [0], [0]>} : vector<8x8x8xbf16>, vector<8x8x32xbf16>, vector<8x8x32xf32> -> vector<8x8x32xf32>
    "tpu.trace_stop"() : () -> ()
    %131 = vector.shape_cast %130 : vector<8x8x32xf32> to vector<2x4x8x32xf32>
    %cst_54 = arith.constant dense<0.000000e+00> : vector<2x8x32xf32>
    %132 = vector.multi_reduction <add>, %131, %cst_54 [1] : vector<2x4x8x32xf32> to vector<2x8x32xf32>
    %c0_55 = arith.constant 0 : index
    %c0_56 = arith.constant 0 : index
    %c0_57 = arith.constant 0 : index
    %133 = vector.load %arg14[%c0_55, %c0_56, %c0_57] : memref<1x1x32xf32, #tpu.memory_space<vmem>>, vector<1x1x32xf32>
    %134 = vector.broadcast %133 : vector<1x1x32xf32> to vector<2x8x32xf32>
    %135 = arith.addf %132, %134 : vector<2x8x32xf32>
    %136 = arith.addf %0, %69 : vector<2x8x32xf32>
    %137 = arith.addf %136, %135 : vector<2x8x32xf32>
    %c0_58 = arith.constant 0 : index
    %c0_59 = arith.constant 0 : index
    %c0_60 = arith.constant 0 : index
    %138 = vector.load %arg19[%c0_58, %c0_59, %c0_60] : memref<1x1x32xf32, #tpu.memory_space<vmem>>, vector<1x1x32xf32>
    %c0_61 = arith.constant 0 : index
    %c0_62 = arith.constant 0 : index
    %c0_63 = arith.constant 0 : index
    %139 = vector.load %arg20[%c0_61, %c0_62, %c0_63] : memref<1x1x32xf32, #tpu.memory_space<vmem>>, vector<1x1x32xf32>
    %cst_64 = arith.constant dense<0.000000e+00> : vector<2x8xf32>
    %140 = vector.multi_reduction <add>, %137, %cst_64 [2] : vector<2x8x32xf32> to vector<2x8xf32>
    %141 = vector.shape_cast %140 : vector<2x8xf32> to vector<2x8x1xf32>
    %cst_65 = arith.constant 3.200000e+01 : f32
    %142 = vector.broadcast %cst_65 : f32 to vector<2x8x1xf32>
    %143 = arith.divf %141, %142 : vector<2x8x1xf32>
    %144 = vector.broadcast %143 : vector<2x8x1xf32> to vector<2x8x32xf32>
    %145 = arith.subf %137, %144 : vector<2x8x32xf32>
    %146 = arith.mulf %145, %145 : vector<2x8x32xf32>
    %cst_66 = arith.constant dense<0.000000e+00> : vector<2x8xf32>
    %147 = vector.multi_reduction <add>, %146, %cst_66 [2] : vector<2x8x32xf32> to vector<2x8xf32>
    %148 = vector.shape_cast %147 : vector<2x8xf32> to vector<2x8x1xf32>
    %cst_67 = arith.constant 3.200000e+01 : f32
    %149 = vector.broadcast %cst_67 : f32 to vector<2x8x1xf32>
    %150 = arith.divf %148, %149 : vector<2x8x1xf32>
    %151 = vector.broadcast %143 : vector<2x8x1xf32> to vector<2x8x32xf32>
    %152 = arith.subf %137, %151 : vector<2x8x32xf32>
    %cst_68 = arith.constant 9.99999974E-6 : f32
    %153 = vector.broadcast %cst_68 : f32 to vector<2x8x1xf32>
    %154 = arith.addf %150, %153 : vector<2x8x1xf32>
    %155 = math.rsqrt %154 : vector<2x8x1xf32>
    %156 = vector.broadcast %155 : vector<2x8x1xf32> to vector<2x8x32xf32>
    %157 = arith.mulf %152, %156 : vector<2x8x32xf32>
    %158 = vector.broadcast %138 : vector<1x1x32xf32> to vector<2x8x32xf32>
    %159 = arith.mulf %157, %158 : vector<2x8x32xf32>
    %160 = vector.broadcast %139 : vector<1x1x32xf32> to vector<2x8x32xf32>
    %161 = arith.addf %159, %160 : vector<2x8x32xf32>
    %162 = arith.truncf %161 : vector<2x8x32xf32> to vector<2x8x32xbf16>
    %c0_69 = arith.constant 0 : index
    %c0_70 = arith.constant 0 : index
    %163 = vector.load %arg15[%c0_69, %c0_70] : memref<32x64xbf16, #tpu.memory_space<vmem>>, vector<32x64xbf16>
    %164 = vector.shape_cast %163 : vector<32x64xbf16> to vector<1x32x64xbf16>
    %165 = vector.shape_cast %164 : vector<1x32x64xbf16> to vector<1x32x64xbf16>
    %166 = vector.broadcast %165 : vector<1x32x64xbf16> to vector<2x32x64xbf16>
    "tpu.trace_start"() <{level = 10 : i32, message = "btd,bdf->btf"}> : () -> ()
    %cst_71 = arith.constant dense<0.000000e+00> : vector<2x8x64xf32>
    %167 = tpu.matmul %162, %166, %cst_71 {dimension_numbers = #tpu.dot_dimension_numbers<[2], [1], [1], [2], [0, 0, 0, 1, 1, 2], [0], [0]>} : vector<2x8x32xbf16>, vector<2x32x64xbf16>, vector<2x8x64xf32> -> vector<2x8x64xf32>
    "tpu.trace_stop"() : () -> ()
    %c0_72 = arith.constant 0 : index
    %c0_73 = arith.constant 0 : index
    %c0_74 = arith.constant 0 : index
    %168 = vector.load %arg16[%c0_72, %c0_73, %c0_74] : memref<1x1x64xf32, #tpu.memory_space<vmem>>, vector<1x1x64xf32>
    %169 = vector.broadcast %168 : vector<1x1x64xf32> to vector<2x8x64xf32>
    %170 = arith.addf %167, %169 : vector<2x8x64xf32>
    %cst_75 = arith.constant 0.000000e+00 : f32
    %171 = vector.broadcast %cst_75 : f32 to vector<2x8x64xf32>
    %172 = arith.maximumf %170, %171 : vector<2x8x64xf32>
    %173 = arith.truncf %172 : vector<2x8x64xf32> to vector<2x8x64xbf16>
    %c0_76 = arith.constant 0 : index
    %c0_77 = arith.constant 0 : index
    %174 = vector.load %arg17[%c0_76, %c0_77] : memref<64x32xbf16, #tpu.memory_space<vmem>>, vector<64x32xbf16>
    %175 = vector.shape_cast %174 : vector<64x32xbf16> to vector<1x64x32xbf16>
    %176 = vector.shape_cast %175 : vector<1x64x32xbf16> to vector<1x64x32xbf16>
    %177 = vector.broadcast %176 : vector<1x64x32xbf16> to vector<2x64x32xbf16>
    "tpu.trace_start"() <{level = 10 : i32, message = "btf,bfd->btd"}> : () -> ()
    %cst_78 = arith.constant dense<0.000000e+00> : vector<2x8x32xf32>
    %178 = tpu.matmul %173, %177, %cst_78 {dimension_numbers = #tpu.dot_dimension_numbers<[2], [1], [1], [2], [0, 0, 0, 1, 1, 2], [0], [0]>} : vector<2x8x64xbf16>, vector<2x64x32xbf16>, vector<2x8x32xf32> -> vector<2x8x32xf32>
    "tpu.trace_stop"() : () -> ()
    %c0_79 = arith.constant 0 : index
    %c0_80 = arith.constant 0 : index
    %c0_81 = arith.constant 0 : index
    %179 = vector.load %arg18[%c0_79, %c0_80, %c0_81] : memref<1x1x32xf32, #tpu.memory_space<vmem>>, vector<1x1x32xf32>
    %180 = vector.broadcast %179 : vector<1x1x32xf32> to vector<2x8x32xf32>
    %181 = arith.addf %178, %180 : vector<2x8x32xf32>
    %182 = arith.addf %161, %181 : vector<2x8x32xf32>
    %c0_82 = arith.constant 0 : index
    %c0_83 = arith.constant 0 : index
    %c0_84 = arith.constant 0 : index
    %183 = vector.load %arg21[%c0_82, %c0_83, %c0_84] : memref<1x1x32xf32, #tpu.memory_space<vmem>>, vector<1x1x32xf32>
    %c0_85 = arith.constant 0 : index
    %c0_86 = arith.constant 0 : index
    %c0_87 = arith.constant 0 : index
    %184 = vector.load %arg22[%c0_85, %c0_86, %c0_87] : memref<1x1x32xf32, #tpu.memory_space<vmem>>, vector<1x1x32xf32>
    %cst_88 = arith.constant dense<0.000000e+00> : vector<2x8xf32>
    %185 = vector.multi_reduction <add>, %182, %cst_88 [2] : vector<2x8x32xf32> to vector<2x8xf32>
    %186 = vector.shape_cast %185 : vector<2x8xf32> to vector<2x8x1xf32>
    %cst_89 = arith.constant 3.200000e+01 : f32
    %187 = vector.broadcast %cst_89 : f32 to vector<2x8x1xf32>
    %188 = arith.divf %186, %187 : vector<2x8x1xf32>
    %189 = vector.broadcast %188 : vector<2x8x1xf32> to vector<2x8x32xf32>
    %190 = arith.subf %182, %189 : vector<2x8x32xf32>
    %191 = arith.mulf %190, %190 : vector<2x8x32xf32>
    %cst_90 = arith.constant dense<0.000000e+00> : vector<2x8xf32>
    %192 = vector.multi_reduction <add>, %191, %cst_90 [2] : vector<2x8x32xf32> to vector<2x8xf32>
    %193 = vector.shape_cast %192 : vector<2x8xf32> to vector<2x8x1xf32>
    %cst_91 = arith.constant 3.200000e+01 : f32
    %194 = vector.broadcast %cst_91 : f32 to vector<2x8x1xf32>
    %195 = arith.divf %193, %194 : vector<2x8x1xf32>
    %196 = vector.broadcast %188 : vector<2x8x1xf32> to vector<2x8x32xf32>
    %197 = arith.subf %182, %196 : vector<2x8x32xf32>
    %cst_92 = arith.constant 9.99999974E-6 : f32
    %198 = vector.broadcast %cst_92 : f32 to vector<2x8x1xf32>
    %199 = arith.addf %195, %198 : vector<2x8x1xf32>
    %200 = math.rsqrt %199 : vector<2x8x1xf32>
    %201 = vector.broadcast %200 : vector<2x8x1xf32> to vector<2x8x32xf32>
    %202 = arith.mulf %197, %201 : vector<2x8x32xf32>
    %203 = vector.broadcast %183 : vector<1x1x32xf32> to vector<2x8x32xf32>
    %204 = arith.mulf %202, %203 : vector<2x8x32xf32>
    %205 = vector.broadcast %184 : vector<1x1x32xf32> to vector<2x8x32xf32>
    %206 = arith.addf %204, %205 : vector<2x8x32xf32>
    %c0_93 = arith.constant 0 : index
    %c0_94 = arith.constant 0 : index
    %c0_95 = arith.constant 0 : index
    %207 = vector.load %arg23[%c0_93, %c0_94, %c0_95] : memref<2x8x32xf32, #tpu.memory_space<vmem>>, vector<2x8x32xf32>
    tpu.vector_store %arg23[%c0_93, %c0_94, %c0_95], %206 {strides = array<i32>} : memref<2x8x32xf32, #tpu.memory_space<vmem>>, vector<2x8x32xf32>,
    return
  }
  func.func @transform_0(%arg0: i32) -> (i32, i32, i32) {
    %c0_i32 = arith.constant 0 : i32
    %c0_i32_0 = arith.constant 0 : i32
    %c0_i32_1 = arith.constant 0 : i32
    %c0_i32_2 = arith.constant 0 : i32
    return %c0_i32, %c0_i32_0, %c0_i32_1 : i32, i32, i32
  }
  func.func @transform_1(%arg0: i32) -> (i32, i32, i32) {
    %c0_i32 = arith.constant 0 : i32
    %c0_i32_0 = arith.constant 0 : i32
    %c0_i32_1 = arith.constant 0 : i32
    %c0_i32_2 = arith.constant 0 : i32
    return %c0_i32, %c0_i32_0, %c0_i32_1 : i32, i32, i32
  }
  func.func @transform_2(%arg0: i32) -> (i32, i32, i32) {
    %c0_i32 = arith.constant 0 : i32
    %c0_i32_0 = arith.constant 0 : i32
    %c0_i32_1 = arith.constant 0 : i32
    %c0_i32_2 = arith.constant 0 : i32
    return %c0_i32, %c0_i32_0, %c0_i32_1 : i32, i32, i32
  }
  func.func @transform_3(%arg0: i32) -> (i32, i32, i32) {
    %c0_i32 = arith.constant 0 : i32
    %c0_i32_0 = arith.constant 0 : i32
    %c0_i32_1 = arith.constant 0 : i32
    %c0_i32_2 = arith.constant 0 : i32
    return %c0_i32, %c0_i32_0, %c0_i32_1 : i32, i32, i32
  }
  func.func @transform_4(%arg0: i32) -> (i32, i32, i32) {
    %c0_i32 = arith.constant 0 : i32
    %c0_i32_0 = arith.constant 0 : i32
    %c0_i32_1 = arith.constant 0 : i32
    %c0_i32_2 = arith.constant 0 : i32
    return %c0_i32, %c0_i32_0, %c0_i32_1 : i32, i32, i32
  }
  func.func @transform_5(%arg0: i32) -> (i32, i32, i32) {
    %c0_i32 = arith.constant 0 : i32
    %c0_i32_0 = arith.constant 0 : i32
    %c0_i32_1 = arith.constant 0 : i32
    %c0_i32_2 = arith.constant 0 : i32
    return %c0_i32, %c0_i32_0, %c0_i32_1 : i32, i32, i32
  }
  func.func @transform_6(%arg0: i32) -> (i32, i32, i32) {
    %c0_i32 = arith.constant 0 : i32
    %c0_i32_0 = arith.constant 0 : i32
    %c0_i32_1 = arith.constant 0 : i32
    %c0_i32_2 = arith.constant 0 : i32
    return %c0_i32, %c0_i32_0, %c0_i32_1 : i32, i32, i32
  }
  func.func @transform_7(%arg0: i32) -> (i32, i32, i32) {
    %c0_i32 = arith.constant 0 : i32
    %c0_i32_0 = arith.constant 0 : i32
    %c0_i32_1 = arith.constant 0 : i32
    %c0_i32_2 = arith.constant 0 : i32
    return %c0_i32, %c0_i32_0, %c0_i32_1 : i32, i32, i32
  }
  func.func @transform_8(%arg0: i32) -> (i32, i32, i32) {
    %c0_i32 = arith.constant 0 : i32
    %c0_i32_0 = arith.constant 0 : i32
    %c0_i32_1 = arith.constant 0 : i32
    %c0_i32_2 = arith.constant 0 : i32
    return %c0_i32, %c0_i32_0, %c0_i32_1 : i32, i32, i32
  }
  func.func @transform_9(%arg0: i32) -> (i32, i32, i32) {
    %c0_i32 = arith.constant 0 : i32
    %c0_i32_0 = arith.constant 0 : i32
    %c0_i32_1 = arith.constant 0 : i32
    %c0_i32_2 = arith.constant 0 : i32
    return %c0_i32, %c0_i32_0, %c0_i32_1 : i32, i32, i32
  }
  func.func @transform_10(%arg0: i32) -> (i32, i32, i32) {
    %c0_i32 = arith.constant 0 : i32
    %c0_i32_0 = arith.constant 0 : i32
    %c0_i32_1 = arith.constant 0 : i32
    %c0_i32_2 = arith.constant 0 : i32
    return %c0_i32, %c0_i32_0, %c0_i32_1 : i32, i32, i32
  }
  func.func @transform_11(%arg0: i32) -> (i32, i32, i32) {
    %c0_i32 = arith.constant 0 : i32
    %c0_i32_0 = arith.constant 0 : i32
    %c0_i32_1 = arith.constant 0 : i32
    %c0_i32_2 = arith.constant 0 : i32
    return %c0_i32, %c0_i32_0, %c0_i32_1 : i32, i32, i32
  }
  func.func @transform_12(%arg0: i32) -> (i32, i32, i32) {
    %c0_i32 = arith.constant 0 : i32
    %c0_i32_0 = arith.constant 0 : i32
    %c0_i32_1 = arith.constant 0 : i32
    %c0_i32_2 = arith.constant 0 : i32
    return %c0_i32, %c0_i32_0, %c0_i32_1 : i32, i32, i32
  }
  func.func @transform_13(%arg0: i32) -> (i32, i32, i32) {
    %c0_i32 = arith.constant 0 : i32
    %c0_i32_0 = arith.constant 0 : i32
    %c0_i32_1 = arith.constant 0 : i32
    %c0_i32_2 = arith.constant 0 : i32
    return %c0_i32, %c0_i32_0, %c0_i32_1 : i32, i32, i32
  }
  func.func @transform_14(%arg0: i32) -> (i32, i32) {
    %c0_i32 = arith.constant 0 : i32
    %c0_i32_0 = arith.constant 0 : i32
    %c0_i32_1 = arith.constant 0 : i32
    return %c0_i32, %c0_i32_0 : i32, i32
  }
  func.func @transform_15(%arg0: i32) -> (i32, i32, i32) {
    %c0_i32 = arith.constant 0 : i32
    %c0_i32_0 = arith.constant 0 : i32
    %c0_i32_1 = arith.constant 0 : i32
    %c0_i32_2 = arith.constant 0 : i32
    return %c0_i32, %c0_i32_0, %c0_i32_1 : i32, i32, i32
  }
  func.func @transform_16(%arg0: i32) -> (i32, i32) {
    %c0_i32 = arith.constant 0 : i32
    %c0_i32_0 = arith.constant 0 : i32
    %c0_i32_1 = arith.constant 0 : i32
    return %c0_i32, %c0_i32_0 : i32, i32
  }
  func.func @transform_17(%arg0: i32) -> (i32, i32, i32) {
    %c0_i32 = arith.constant 0 : i32
    %c0_i32_0 = arith.constant 0 : i32
    %c0_i32_1 = arith.constant 0 : i32
    %c0_i32_2 = arith.constant 0 : i32
    return %c0_i32, %c0_i32_0, %c0_i32_1 : i32, i32, i32
  }
  func.func @transform_18(%arg0: i32) -> (i32, i32, i32) {
    %c0_i32 = arith.constant 0 : i32
    %c0_i32_0 = arith.constant 0 : i32
    %c0_i32_1 = arith.constant 0 : i32
    %c0_i32_2 = arith.constant 0 : i32
    return %c0_i32, %c0_i32_0, %c0_i32_1 : i32, i32, i32
  }
  func.func @transform_19(%arg0: i32) -> (i32, i32, i32) {
    %c0_i32 = arith.constant 0 : i32
    %c0_i32_0 = arith.constant 0 : i32
    %c0_i32_1 = arith.constant 0 : i32
    %c0_i32_2 = arith.constant 0 : i32
    return %c0_i32, %c0_i32_0, %c0_i32_1 : i32, i32, i32
  }
  func.func @transform_20(%arg0: i32) -> (i32, i32, i32) {
    %c0_i32 = arith.constant 0 : i32
    %c0_i32_0 = arith.constant 0 : i32
    %c0_i32_1 = arith.constant 0 : i32
    %c0_i32_2 = arith.constant 0 : i32
    return %c0_i32, %c0_i32_0, %c0_i32_1 : i32, i32, i32
  }
  func.func @transform_21(%arg0: i32) -> (i32, i32, i32) {
    %c0_i32 = arith.constant 0 : i32
    %c0_i32_0 = arith.constant 0 : i32
    %c0_i32_1 = arith.constant 0 : i32
    %c0_i32_2 = arith.constant 0 : i32
    return %c0_i32, %c0_i32_0, %c0_i32_1 : i32, i32, i32
  }
  func.func @transform_22(%arg0: i32) -> (i32, i32, i32) {
    %c0_i32 = arith.constant 0 : i32
    %c0_i32_0 = arith.constant 0 : i32
    %c0_i32_1 = arith.constant 0 : i32
    %c0_i32_2 = arith.constant 0 : i32
    return %c0_i32, %c0_i32_0, %c0_i32_1 : i32, i32, i32
  }
}

</mosaic_0001>

<llo_original>
// kernel: tpu_custom_call.1
$region0: #{tpu_custom_call.1}
  #allocation0 [shape = 'u32[]', space=smem, size = 0x4, offset = 0x4, fixed_abs, tag = 'smem constant byte address 0x4 - core index']
  #allocation1 [shape = 'u32[144,128]{1,0:T(1,128)}', space=vmem, size = 0x12000, scoped, tag = 'internal scratch']
  %s0 = inlined_call_operand.vmem [shape: f32[2,8,32], index: 0, kind: input, shape index: {}]
  %s1 = inlined_call_operand.vmem [shape: f32[2,8,32], index: 1, kind: input, shape index: {}]
  %s2 = inlined_call_operand.vmem [shape: bf16[4,32,8], index: 2, kind: input, shape index: {}]
  %s3 = inlined_call_operand.vmem [shape: f32[4,1,8], index: 3, kind: input, shape index: {}]
  %s4 = inlined_call_operand.vmem [shape: bf16[4,32,16], index: 4, kind: input, shape index: {}]
  %s5 = inlined_call_operand.vmem [shape: f32[4,1,16], index: 5, kind: input, shape index: {}]
  %s6 = inlined_call_operand.vmem [shape: bf16[4,8,32], index: 6, kind: input, shape index: {}]
  %s7 = inlined_call_operand.vmem [shape: f32[1,1,32], index: 7, kind: input, shape index: {}]
  %s8 = inlined_call_operand.vmem [shape: bf16[4,32,8], index: 8, kind: input, shape index: {}]
  %s9 = inlined_call_operand.vmem [shape: f32[4,1,8], index: 9, kind: input, shape index: {}]
  %s10 = inlined_call_operand.vmem [shape: bf16[4,32,16], index: 10, kind: input, shape index: {}]
  %s11 = inlined_call_operand.vmem [shape: f32[4,1,16], index: 11, kind: input, shape index: {}]
  %s12 = inlined_call_operand.vmem [shape: bf16[4,8,32], index: 12, kind: input, shape index: {}]
  %s13 = inlined_call_operand.vmem [shape: f32[1,1,32], index: 13, kind: input, shape index: {}]
  %s14 = inlined_call_operand.vmem [shape: bf16[32,64], index: 14, kind: input, shape index: {}]
  %s15 = inlined_call_operand.vmem [shape: f32[1,1,64], index: 15, kind: input, shape index: {}]
  %s16 = inlined_call_operand.vmem [shape: bf16[64,32], index: 16, kind: input, shape index: {}]
  %s17 = inlined_call_operand.vmem [shape: f32[1,1,32], index: 17, kind: input, shape index: {}]
  %s18 = inlined_call_operand.vmem [shape: f32[1,1,32], index: 18, kind: input, shape index: {}]
  %s19 = inlined_call_operand.vmem [shape: f32[1,1,32], index: 19, kind: input, shape index: {}]
  %s20 = inlined_call_operand.vmem [shape: f32[1,1,32], index: 20, kind: input, shape index: {}]
  %s21 = inlined_call_operand.vmem [shape: f32[1,1,32], index: 21, kind: input, shape index: {}]
  %s22 = inlined_call_operand.hbm [shape: f32[2,8,32], index: 22, kind: output, shape index: {}]
  %s23 = sld [smem:[#allocation0]]
  $region98: #{tpu_custom_call.1} parent=0
    _
  %s25 = ssub.s32 1, %s23
  %s26 = scalar_select 0, %s25, %s23
  $region1: #{tpu_custom_call.1} parent=0
    #allocation2 [shape = 'u8[8192]{0}', space=vmem, size = 0x2000, scoped, tag = 'output window, operand 0, single buffered']
    #allocation3 [shape = 's32[1]{0}', space=sflag, size = 0x4, scoped, tag = 'scoped memory for tpu_custom_call.1']
    %27 = vsyncpa [#allocation3], 0
    // Predicated region
    $region2: #{tpu_custom_call.1} parent=1 // pred_check
      _
    $region3: #{tpu_custom_call.1} parent=1 // pred_check_branch
      %29 = sbr.rel (0) target = $region5
    $region4: #{tpu_custom_call.1} parent=1 // pred_region
      _
    $region5: #{tpu_custom_call.1} parent=1 // pred_fallthru
      _
    // Predicated region
    $region6: #{tpu_custom_call.1} parent=1 // pred_check
      _
    $region7: #{tpu_custom_call.1} parent=1 // pred_check_branch
      %31 = sbr.rel (0) target = $region9
    $region8: #{tpu_custom_call.1} parent=1 // pred_region
      _
    $region9: #{tpu_custom_call.1} parent=1 // pred_fallthru
      _
    // Predicated region
    $region10: #{tpu_custom_call.1} parent=1 // pred_check
      _
    $region11: #{tpu_custom_call.1} parent=1 // pred_check_branch
      %33 = sbr.rel (0) target = $region13
    $region12: #{tpu_custom_call.1} parent=1 // pred_region
      _
    $region13: #{tpu_custom_call.1} parent=1 // pred_fallthru
      _
    // Predicated region
    $region14: #{tpu_custom_call.1} parent=1 // pred_check
      _
    $region15: #{tpu_custom_call.1} parent=1 // pred_check_branch
      %35 = sbr.rel (0) target = $region17
    $region16: #{tpu_custom_call.1} parent=1 // pred_region
      _
    $region17: #{tpu_custom_call.1} parent=1 // pred_fallthru
      _
    // Predicated region
    $region18: #{tpu_custom_call.1} parent=1 // pred_check
      _
    $region19: #{tpu_custom_call.1} parent=1 // pred_check_branch
      %37 = sbr.rel (0) target = $region21
    $region20: #{tpu_custom_call.1} parent=1 // pred_region
      _
    $region21: #{tpu_custom_call.1} parent=1 // pred_fallthru
      _
    // Predicated region
    $region22: #{tpu_custom_call.1} parent=1 // pred_check
      _
    $region23: #{tpu_custom_call.1} parent=1 // pred_check_branch
      %39 = sbr.rel (0) target = $region25
    $region24: #{tpu_custom_call.1} parent=1 // pred_region
      _
    $region25: #{tpu_custom_call.1} parent=1 // pred_fallthru
      _
    // Predicated region
    $region26: #{tpu_custom_call.1} parent=1 // pred_check
      _
    $region27: #{tpu_custom_call.1} parent=1 // pred_check_branch
      %41 = sbr.rel (0) target = $region29
    $region28: #{tpu_custom_call.1} parent=1 // pred_region
      _
    $region29: #{tpu_custom_call.1} parent=1 // pred_fallthru
      _
    // Predicated region
    $region30: #{tpu_custom_call.1} parent=1 // pred_check
      _
    $region31: #{tpu_custom_call.1} parent=1 // pred_check_branch
      %43 = sbr.rel (0) target = $region33
    $region32: #{tpu_custom_call.1} parent=1 // pred_region
      _
    $region33: #{tpu_custom_call.1} parent=1 // pred_fallthru
      _
    // Predicated region
    $region34: #{tpu_custom_call.1} parent=1 // pred_check
      _
    $region35: #{tpu_custom_call.1} parent=1 // pred_check_branch
      %45 = sbr.rel (0) target = $region37
    $region36: #{tpu_custom_call.1} parent=1 // pred_region
      _
    $region37: #{tpu_custom_call.1} parent=1 // pred_fallthru
      _
    // Predicated region
    $region38: #{tpu_custom_call.1} parent=1 // pred_check
      _
    $region39: #{tpu_custom_call.1} parent=1 // pred_check_branch
      %47 = sbr.rel (0) target = $region41
    $region40: #{tpu_custom_call.1} parent=1 // pred_region
      _
    $region41: #{tpu_custom_call.1} parent=1 // pred_fallthru
      _
    // Predicated region
    $region42: #{tpu_custom_call.1} parent=1 // pred_check
      _
    $region43: #{tpu_custom_call.1} parent=1 // pred_check_branch
      %49 = sbr.rel (0) target = $region45
    $region44: #{tpu_custom_call.1} parent=1 // pred_region
      _
    $region45: #{tpu_custom_call.1} parent=1 // pred_fallthru
      _
    // Predicated region
    $region46: #{tpu_custom_call.1} parent=1 // pred_check
      _
    $region47: #{tpu_custom_call.1} parent=1 // pred_check_branch
      %51 = sbr.rel (0) target = $region49
    $region48: #{tpu_custom_call.1} parent=1 // pred_region
      _
    $region49: #{tpu_custom_call.1} parent=1 // pred_fallthru
      _
    // Predicated region
    $region50: #{tpu_custom_call.1} parent=1 // pred_check
      _
    $region51: #{tpu_custom_call.1} parent=1 // pred_check_branch
      %53 = sbr.rel (0) target = $region53
    $region52: #{tpu_custom_call.1} parent=1 // pred_region
      _
    $region53: #{tpu_custom_call.1} parent=1 // pred_fallthru
      _
    // Predicated region
    $region54: #{tpu_custom_call.1} parent=1 // pred_check
      _
    $region55: #{tpu_custom_call.1} parent=1 // pred_check_branch
      %55 = sbr.rel (0) target = $region57
    $region56: #{tpu_custom_call.1} parent=1 // pred_region
      _
    $region57: #{tpu_custom_call.1} parent=1 // pred_fallthru
      _
    // Predicated region
    $region58: #{tpu_custom_call.1} parent=1 // pred_check
      _
    $region59: #{tpu_custom_call.1} parent=1 // pred_check_branch
      %57 = sbr.rel (0) target = $region61
    $region60: #{tpu_custom_call.1} parent=1 // pred_region
      _
    $region61: #{tpu_custom_call.1} parent=1 // pred_fallthru
      _
    // Predicated region
    $region62: #{tpu_custom_call.1} parent=1 // pred_check
      _
    $region63: #{tpu_custom_call.1} parent=1 // pred_check_branch
      %59 = sbr.rel (0) target = $region65
    $region64: #{tpu_custom_call.1} parent=1 // pred_region
      _
    $region65: #{tpu_custom_call.1} parent=1 // pred_fallthru
      _
    // Predicated region
    $region66: #{tpu_custom_call.1} parent=1 // pred_check
      _
    $region67: #{tpu_custom_call.1} parent=1 // pred_check_branch
      %61 = sbr.rel (0) target = $region69
    $region68: #{tpu_custom_call.1} parent=1 // pred_region
      _
    $region69: #{tpu_custom_call.1} parent=1 // pred_fallthru
      _
    // Predicated region
    $region70: #{tpu_custom_call.1} parent=1 // pred_check
      _
    $region71: #{tpu_custom_call.1} parent=1 // pred_check_branch
      %63 = sbr.rel (0) target = $region73
    $region72: #{tpu_custom_call.1} parent=1 // pred_region
      _
    $region73: #{tpu_custom_call.1} parent=1 // pred_fallthru
      _
    // Predicated region
    $region74: #{tpu_custom_call.1} parent=1 // pred_check
      _
    $region75: #{tpu_custom_call.1} parent=1 // pred_check_branch
      %65 = sbr.rel (0) target = $region77
    $region76: #{tpu_custom_call.1} parent=1 // pred_region
      _
    $region77: #{tpu_custom_call.1} parent=1 // pred_fallthru
      _
    // Predicated region
    $region78: #{tpu_custom_call.1} parent=1 // pred_check
      _
    $region79: #{tpu_custom_call.1} parent=1 // pred_check_branch
      %67 = sbr.rel (0) target = $region81
    $region80: #{tpu_custom_call.1} parent=1 // pred_region
      _
    $region81: #{tpu_custom_call.1} parent=1 // pred_fallthru
      _
    // Predicated region
    $region82: #{tpu_custom_call.1} parent=1 // pred_check
      _
    $region83: #{tpu_custom_call.1} parent=1 // pred_check_branch
      %69 = sbr.rel (0) target = $region85
    $region84: #{tpu_custom_call.1} parent=1 // pred_region
      _
    $region85: #{tpu_custom_call.1} parent=1 // pred_fallthru
      _
    // Predicated region
    $region86: #{tpu_custom_call.1} parent=1 // pred_check
      _
    $region87: #{tpu_custom_call.1} parent=1 // pred_check_branch
      %71 = sbr.rel (0) target = $region89
    $region88: #{tpu_custom_call.1} parent=1 // pred_region
      _
    $region89: #{tpu_custom_call.1} parent=1 // pred_fallthru
      _
    %v73 = vld [vmem:[%s0] sm:$0xff]
    %v74 = vld [vmem:[%s0 + $0x8] sm:$0xff]
    %v75 = vpack.c.bf16 %v73, %v73
    %v76 = vpack.c.bf16 %v74, %v74
    %v77 = vld [vmem:[%s1] sm:$0xff]
    %v78 = vld [vmem:[%s1 + $0x8] sm:$0xff]
    %v79 = vpack.c.bf16 %v77, %v77
    %v80 = vpack.c.bf16 %v78, %v78
    %v81 = vld [vmem:[%s2] sm:$0xf]
    %v82 = vld [vmem:[%s2 + $0x4] sm:$0xf]
    %v83 = vld [vmem:[%s2 + $0x8] sm:$0xf]
    %v84 = vld [vmem:[%s2 + $0xc] sm:$0xf]
    %v85 = vld [vmem:[%s2 + $0x10] sm:$0xf]
    %v86 = vld [vmem:[%s2 + $0x14] sm:$0xf]
    %v87 = vld [vmem:[%s2 + $0x18] sm:$0xf]
    %v88 = vld [vmem:[%s2 + $0x1c] sm:$0xf]
    %v89 = vld [vmem:[%s2 + $0x20] sm:$0xf]
    %v90 = vld [vmem:[%s2 + $0x24] sm:$0xf]
    %v91 = vld [vmem:[%s2 + $0x28] sm:$0xf]
    %v92 = vld [vmem:[%s2 + $0x2c] sm:$0xf]
    %v93 = vld [vmem:[%s2 + $0x30] sm:$0xf]
    %v94 = vld [vmem:[%s2 + $0x34] sm:$0xf]
    %v95 = vld [vmem:[%s2 + $0x38] sm:$0xf]
    %v96 = vld [vmem:[%s2 + $0x3c] sm:$0xf]
    %v97 = vld [vmem:[%s4] sm:$0xf]
    %v98 = vld [vmem:[%s4 + $0x4] sm:$0xf]
    %v99 = vld [vmem:[%s4 + $0x8] sm:$0xf]
    %v100 = vld [vmem:[%s4 + $0xc] sm:$0xf]
    %v101 = vld [vmem:[%s4 + $0x10] sm:$0xf]
    %v102 = vld [vmem:[%s4 + $0x14] sm:$0xf]
    %v103 = vld [vmem:[%s4 + $0x18] sm:$0xf]
    %v104 = vld [vmem:[%s4 + $0x1c] sm:$0xf]
    %v105 = vld [vmem:[%s4 + $0x20] sm:$0xf]
    %v106 = vld [vmem:[%s4 + $0x24] sm:$0xf]
    %v107 = vld [vmem:[%s4 + $0x28] sm:$0xf]
    %v108 = vld [vmem:[%s4 + $0x2c] sm:$0xf]
    %v109 = vld [vmem:[%s4 + $0x30] sm:$0xf]
    %v110 = vld [vmem:[%s4 + $0x34] sm:$0xf]
    %v111 = vld [vmem:[%s4 + $0x38] sm:$0xf]
    %v112 = vld [vmem:[%s4 + $0x3c] sm:$0xf]
    %v113 = vld [vmem:[%s3] sm:$0x1]
    %v114 = vld [vmem:[%s3 + $0x1] sm:$0x1]
    %v115 = vld [vmem:[%s3 + $0x2] sm:$0x1]
    %v116 = vld [vmem:[%s3 + $0x3] sm:$0x1]
    %v117 = vld [vmem:[%s5] sm:$0x1]
    %v118 = vld [vmem:[%s5 + $0x1] sm:$0x1]
    %v119 = vld [vmem:[%s5 + $0x2] sm:$0x1]
    %v120 = vld [vmem:[%s5 + $0x3] sm:$0x1]
    %v121 = vld [vmem:[%s6] sm:$0xf]
    %v122 = vld [vmem:[%s6 + $0x4] sm:$0xf]
    %v123 = vld [vmem:[%s6 + $0x8] sm:$0xf]
    %v124 = vld [vmem:[%s6 + $0xc] sm:$0xf]
    %v129 = vlaneseq
    %v130 = vshrl.u32 %v129, 7
    %v131 = vsub.s32 0, %v130
    %v132 = vrot.slane %v113, %v131
    %v133 = vlaneseq
    %v134 = vshrl.u32 %v133, 7
    %v135 = vsub.s32 0, %v134
    %v136 = vrot.slane %v114, %v135
    %v137 = vlaneseq
    %v138 = vshrl.u32 %v137, 7
    %v139 = vsub.s32 0, %v138
    %v140 = vrot.slane %v115, %v139
    %v141 = vlaneseq
    %v142 = vshrl.u32 %v141, 7
    %v143 = vsub.s32 0, %v142
    %v144 = vrot.slane %v116, %v143
    %v153 = vunpack.c.l.b16 %v81
    %v154 = vunpack.c.l.b16 %v82
    %v155 = vunpack.c.l.b16 %v83
    %v156 = vunpack.c.l.b16 %v84
    %v157 = vpack.c.b16 %v154, %v153
    %v158 = vpack.c.b16 %v156, %v155
    %vm161 = vcmask 261120
    %v163 = vsel %vm161, %v75, 0
    %165 = vmatprep.subr.bf16.mxu0 0
    %166 = vmatpush1.bf16.msra.mxu0 %v157
    %167 = vmatprep.subr.bf16.mxu0 0
    %168 = vmatpush1.bf16.msra.mxu0 %v158
    %169 = vmatprep.subr.bf16.mxu0 0
    %170 = vmatpush1.bf16.msra.mxu0 0
    %171 = vmatprep.subr.bf16.mxu0 0
    %172 = vmatpush1.bf16.msra.mxu0 0
    %173 = vmatprep.subr.bf16.mxu0 0
    %174 = vmatpush1.bf16.msra.mxu0 0
    %175 = vmatprep.subr.bf16.mxu0 0
    %176 = vmatpush1.bf16.msra.mxu0 0
    %177 = vmatprep.subr.bf16.mxu0 0
    %178 = vmatpush1.bf16.msra.mxu0 0
    %179 = vmatprep.subr.bf16.mxu0 0
    %180 = vmatpush1.bf16.msra.mxu0 0
    %181 = vmatprep.subr.bf16.mxu0 0
    %182 = vmatpush1.bf16.msra.mxu0 0
    %183 = vmatprep.subr.bf16.mxu0 0
    %184 = vmatpush1.bf16.msra.mxu0 0
    %185 = vmatprep.subr.bf16.mxu0 0
    %186 = vmatpush1.bf16.msra.mxu0 0
    %187 = vmatprep.subr.bf16.mxu0 0
    %188 = vmatpush1.bf16.msra.mxu0 0
    %189 = vmatprep.subr.bf16.mxu0 0
    %190 = vmatpush1.bf16.msra.mxu0 0
    %191 = vmatprep.subr.bf16.mxu0 0
    %192 = vmatpush1.bf16.msra.mxu0 0
    %193 = vmatprep.subr.bf16.mxu0 0
    %194 = vmatpush1.bf16.msra.mxu0 0
    %195 = vmatprep.subr.bf16.mxu0 0
    %196 = vmatpush1.bf16.msra.mxu0 0
    %197 = vmatprep.mubr.bf16.mxu0 0
    %198 = vmatmul.mubr.bf16.gmra.mrb[0].mxu0 %v163
    %v199 = vpop.f32.mrb[0].mxu0
    %v200 = vadd.f32 %v132, %v199
    %v201 = vpop.f32.mrb[0].mxu0
    %v202 = vpop.f32.mrb[0].mxu0
    %v203 = vpop.f32.mrb[0].mxu0
    %204 = vdwg.mxu0
    %v209 = vunpack.c.l.b16 %v85
    %v210 = vunpack.c.l.b16 %v86
    %v211 = vunpack.c.l.b16 %v87
    %v212 = vunpack.c.l.b16 %v88
    %v213 = vpack.c.b16 %v210, %v209
    %v214 = vpack.c.b16 %v212, %v211
    %217 = vmatprep.subr.bf16.mxu0 0
    %218 = vmatpush1.bf16.msra.mxu0 %v213
    %219 = vmatprep.subr.bf16.mxu0 0
    %220 = vmatpush1.bf16.msra.mxu0 %v214
    %221 = vmatprep.subr.bf16.mxu0 0
    %222 = vmatpush1.bf16.msra.mxu0 0
    %223 = vmatprep.subr.bf16.mxu0 0
    %224 = vmatpush1.bf16.msra.mxu0 0
    %225 = vmatprep.subr.bf16.mxu0 0
    %226 = vmatpush1.bf16.msra.mxu0 0
    %227 = vmatprep.subr.bf16.mxu0 0
    %228 = vmatpush1.bf16.msra.mxu0 0
    %229 = vmatprep.subr.bf16.mxu0 0
    %230 = vmatpush1.bf16.msra.mxu0 0
    %231 = vmatprep.subr.bf16.mxu0 0
    %232 = vmatpush1.bf16.msra.mxu0 0
    %233 = vmatprep.subr.bf16.mxu0 0
    %234 = vmatpush1.bf16.msra.mxu0 0
    %235 = vmatprep.subr.bf16.mxu0 0
    %236 = vmatpush1.bf16.msra.mxu0 0
    %237 = vmatprep.subr.bf16.mxu0 0
    %238 = vmatpush1.bf16.msra.mxu0 0
    %239 = vmatprep.subr.bf16.mxu0 0
    %240 = vmatpush1.bf16.msra.mxu0 0
    %241 = vmatprep.subr.bf16.mxu0 0
    %242 = vmatpush1.bf16.msra.mxu0 0
    %243 = vmatprep.subr.bf16.mxu0 0
    %244 = vmatpush1.bf16.msra.mxu0 0
    %245 = vmatprep.subr.bf16.mxu0 0
    %246 = vmatpush1.bf16.msra.mxu0 0
    %247 = vmatprep.subr.bf16.mxu0 0
    %248 = vmatpush1.bf16.msra.mxu0 0
    %249 = vmatprep.mubr.bf16.mxu0 0
    %250 = vmatmul.mubr.bf16.gmra.mrb[0].mxu0 %v163
    %v251 = vpop.f32.mrb[0].mxu0
    %v252 = vadd.f32 %v136, %v251
    %v253 = vpop.f32.mrb[0].mxu0
    %v254 = vpop.f32.mrb[0].mxu0
    %v255 = vpop.f32.mrb[0].mxu0
    %256 = vdwg.mxu0
    %v261 = vunpack.c.l.b16 %v89
    %v262 = vunpack.c.l.b16 %v90
    %v263 = vunpack.c.l.b16 %v91
    %v264 = vunpack.c.l.b16 %v92
    %v265 = vpack.c.b16 %v262, %v261
    %v266 = vpack.c.b16 %v264, %v263
    %269 = vmatprep.subr.bf16.mxu0 0
    %270 = vmatpush1.bf16.msra.mxu0 %v265
    %271 = vmatprep.subr.bf16.mxu0 0
    %272 = vmatpush1.bf16.msra.mxu0 %v266
    %273 = vmatprep.subr.bf16.mxu0 0
    %274 = vmatpush1.bf16.msra.mxu0 0
    %275 = vmatprep.subr.bf16.mxu0 0
    %276 = vmatpush1.bf16.msra.mxu0 0
    %277 = vmatprep.subr.bf16.mxu0 0
    %278 = vmatpush1.bf16.msra.mxu0 0
    %279 = vmatprep.subr.bf16.mxu0 0
    %280 = vmatpush1.bf16.msra.mxu0 0
    %281 = vmatprep.subr.bf16.mxu0 0
    %282 = vmatpush1.bf16.msra.mxu0 0
    %283 = vmatprep.subr.bf16.mxu0 0
    %284 = vmatpush1.bf16.msra.mxu0 0
    %285 = vmatprep.subr.bf16.mxu0 0
    %286 = vmatpush1.bf16.msra.mxu0 0
    %287 = vmatprep.subr.bf16.mxu0 0
    %288 = vmatpush1.bf16.msra.mxu0 0
    %289 = vmatprep.subr.bf16.mxu0 0
    %290 = vmatpush1.bf16.msra.mxu0 0
    %291 = vmatprep.subr.bf16.mxu0 0
    %292 = vmatpush1.bf16.msra.mxu0 0
    %293 = vmatprep.subr.bf16.mxu0 0
    %294 = vmatpush1.bf16.msra.mxu0 0
    %295 = vmatprep.subr.bf16.mxu0 0
    %296 = vmatpush1.bf16.msra.mxu0 0
    %297 = vmatprep.subr.bf16.mxu0 0
    %298 = vmatpush1.bf16.msra.mxu0 0
    %299 = vmatprep.subr.bf16.mxu0 0
    %300 = vmatpush1.bf16.msra.mxu0 0
    %301 = vmatprep.mubr.bf16.mxu0 0
    %302 = vmatmul.mubr.bf16.gmra.mrb[0].mxu0 %v163
    %v303 = vpop.f32.mrb[0].mxu0
    %v304 = vadd.f32 %v140, %v303
    %v305 = vpop.f32.mrb[0].mxu0
    %v306 = vpop.f32.mrb[0].mxu0
    %v307 = vpop.f32.mrb[0].mxu0
    %308 = vdwg.mxu0
    %v313 = vunpack.c.l.b16 %v93
    %v314 = vunpack.c.l.b16 %v94
    %v315 = vunpack.c.l.b16 %v95
    %v316 = vunpack.c.l.b16 %v96
    %v317 = vpack.c.b16 %v314, %v313
    %v318 = vpack.c.b16 %v316, %v315
    %321 = vmatprep.subr.bf16.mxu0 0
    %322 = vmatpush1.bf16.msra.mxu0 %v317
    %323 = vmatprep.subr.bf16.mxu0 0
    %324 = vmatpush1.bf16.msra.mxu0 %v318
    %325 = vmatprep.subr.bf16.mxu0 0
    %326 = vmatpush1.bf16.msra.mxu0 0
    %327 = vmatprep.subr.bf16.mxu0 0
    %328 = vmatpush1.bf16.msra.mxu0 0
    %329 = vmatprep.subr.bf16.mxu0 0
    %330 = vmatpush1.bf16.msra.mxu0 0
    %331 = vmatprep.subr.bf16.mxu0 0
    %332 = vmatpush1.bf16.msra.mxu0 0
    %333 = vmatprep.subr.bf16.mxu0 0
    %334 = vmatpush1.bf16.msra.mxu0 0
    %335 = vmatprep.subr.bf16.mxu0 0
    %336 = vmatpush1.bf16.msra.mxu0 0
    %337 = vmatprep.subr.bf16.mxu0 0
    %338 = vmatpush1.bf16.msra.mxu0 0
    %339 = vmatprep.subr.bf16.mxu0 0
    %340 = vmatpush1.bf16.msra.mxu0 0
    %341 = vmatprep.subr.bf16.mxu0 0
    %342 = vmatpush1.bf16.msra.mxu0 0
    %343 = vmatprep.subr.bf16.mxu0 0
    %344 = vmatpush1.bf16.msra.mxu0 0
    %345 = vmatprep.subr.bf16.mxu0 0
    %346 = vmatpush1.bf16.msra.mxu0 0
    %347 = vmatprep.subr.bf16.mxu0 0
    %348 = vmatpush1.bf16.msra.mxu0 0
    %349 = vmatprep.subr.bf16.mxu0 0
    %350 = vmatpush1.bf16.msra.mxu0 0
    %351 = vmatprep.subr.bf16.mxu0 0
    %352 = vmatpush1.bf16.msra.mxu0 0
    %353 = vmatprep.mubr.bf16.mxu0 0
    %354 = vmatmul.mubr.bf16.gmra.mrb[0].mxu0 %v163
    %v355 = vpop.f32.mrb[0].mxu0
    %v356 = vadd.f32 %v144, %v355
    %v357 = vpop.f32.mrb[0].mxu0
    %v358 = vpop.f32.mrb[0].mxu0
    %v359 = vpop.f32.mrb[0].mxu0
    %360 = vdwg.mxu0
    %v362 = vsel %vm161, %v76, 0
    %364 = vmatprep.subr.bf16.mxu0 0
    %365 = vmatpush1.bf16.msra.mxu0 %v157
    %366 = vmatprep.subr.bf16.mxu0 0
    %367 = vmatpush1.bf16.msra.mxu0 %v158
    %368 = vmatprep.subr.bf16.mxu0 0
    %369 = vmatpush1.bf16.msra.mxu0 0
    %370 = vmatprep.subr.bf16.mxu0 0
    %371 = vmatpush1.bf16.msra.mxu0 0
    %372 = vmatprep.subr.bf16.mxu0 0
    %373 = vmatpush1.bf16.msra.mxu0 0
    %374 = vmatprep.subr.bf16.mxu0 0
    %375 = vmatpush1.bf16.msra.mxu0 0
    %376 = vmatprep.subr.bf16.mxu0 0
    %377 = vmatpush1.bf16.msra.mxu0 0
    %378 = vmatprep.subr.bf16.mxu0 0
    %379 = vmatpush1.bf16.msra.mxu0 0
    %380 = vmatprep.subr.bf16.mxu0 0
    %381 = vmatpush1.bf16.msra.mxu0 0
    %382 = vmatprep.subr.bf16.mxu0 0
    %383 = vmatpush1.bf16.msra.mxu0 0
    %384 = vmatprep.subr.bf16.mxu0 0
    %385 = vmatpush1.bf16.msra.mxu0 0
    %386 = vmatprep.subr.bf16.mxu0 0
    %387 = vmatpush1.bf16.msra.mxu0 0
    %388 = vmatprep.subr.bf16.mxu0 0
    %389 = vmatpush1.bf16.msra.mxu0 0
    %390 = vmatprep.subr.bf16.mxu0 0
    %391 = vmatpush1.bf16.msra.mxu0 0
    %392 = vmatprep.subr.bf16.mxu0 0
    %393 = vmatpush1.bf16.msra.mxu0 0
    %394 = vmatprep.subr.bf16.mxu0 0
    %395 = vmatpush1.bf16.msra.mxu0 0
    %396 = vmatprep.mubr.bf16.mxu0 0
    %397 = vmatmul.mubr.bf16.gmra.mrb[0].mxu0 %v362
    %v398 = vpop.f32.mrb[0].mxu0
    %v399 = vadd.f32 %v132, %v398
    %v400 = vpop.f32.mrb[0].mxu0
    %v401 = vpop.f32.mrb[0].mxu0
    %v402 = vpop.f32.mrb[0].mxu0
    %403 = vdwg.mxu0
    %404 = vmatprep.subr.bf16.mxu0 0
    %405 = vmatpush1.bf16.msra.mxu0 %v213
    %406 = vmatprep.subr.bf16.mxu0 0
    %407 = vmatpush1.bf16.msra.mxu0 %v214
    %408 = vmatprep.subr.bf16.mxu0 0
    %409 = vmatpush1.bf16.msra.mxu0 0
    %410 = vmatprep.subr.bf16.mxu0 0
    %411 = vmatpush1.bf16.msra.mxu0 0
    %412 = vmatprep.subr.bf16.mxu0 0
    %413 = vmatpush1.bf16.msra.mxu0 0
    %414 = vmatprep.subr.bf16.mxu0 0
    %415 = vmatpush1.bf16.msra.mxu0 0
    %416 = vmatprep.subr.bf16.mxu0 0
    %417 = vmatpush1.bf16.msra.mxu0 0
    %418 = vmatprep.subr.bf16.mxu0 0
    %419 = vmatpush1.bf16.msra.mxu0 0
    %420 = vmatprep.subr.bf16.mxu0 0
    %421 = vmatpush1.bf16.msra.mxu0 0
    %422 = vmatprep.subr.bf16.mxu0 0
    %423 = vmatpush1.bf16.msra.mxu0 0
    %424 = vmatprep.subr.bf16.mxu0 0
    %425 = vmatpush1.bf16.msra.mxu0 0
    %426 = vmatprep.subr.bf16.mxu0 0
    %427 = vmatpush1.bf16.msra.mxu0 0
    %428 = vmatprep.subr.bf16.mxu0 0
    %429 = vmatpush1.bf16.msra.mxu0 0
    %430 = vmatprep.subr.bf16.mxu0 0
    %431 = vmatpush1.bf16.msra.mxu0 0
    %432 = vmatprep.subr.bf16.mxu0 0
    %433 = vmatpush1.bf16.msra.mxu0 0
    %434 = vmatprep.subr.bf16.mxu0 0
    %435 = vmatpush1.bf16.msra.mxu0 0
    %436 = vmatprep.mubr.bf16.mxu0 0
    %437 = vmatmul.mubr.bf16.gmra.mrb[0].mxu0 %v362
    %v438 = vpop.f32.mrb[0].mxu0
    %v439 = vadd.f32 %v136, %v438
    %v440 = vpop.f32.mrb[0].mxu0
    %v441 = vpop.f32.mrb[0].mxu0
    %v442 = vpop.f32.mrb[0].mxu0
    %443 = vdwg.mxu0
    %444 = vmatprep.subr.bf16.mxu0 0
    %445 = vmatpush1.bf16.msra.mxu0 %v265
    %446 = vmatprep.subr.bf16.mxu0 0
    %447 = vmatpush1.bf16.msra.mxu0 %v266
    %448 = vmatprep.subr.bf16.mxu0 0
    %449 = vmatpush1.bf16.msra.mxu0 0
    %450 = vmatprep.subr.bf16.mxu0 0
    %451 = vmatpush1.bf16.msra.mxu0 0
    %452 = vmatprep.subr.bf16.mxu0 0
    %453 = vmatpush1.bf16.msra.mxu0 0
    %454 = vmatprep.subr.bf16.mxu0 0
    %455 = vmatpush1.bf16.msra.mxu0 0
    %456 = vmatprep.subr.bf16.mxu0 0
    %457 = vmatpush1.bf16.msra.mxu0 0
    %458 = vmatprep.subr.bf16.mxu0 0
    %459 = vmatpush1.bf16.msra.mxu0 0
    %460 = vmatprep.subr.bf16.mxu0 0
    %461 = vmatpush1.bf16.msra.mxu0 0
    %462 = vmatprep.subr.bf16.mxu0 0
    %463 = vmatpush1.bf16.msra.mxu0 0
    %464 = vmatprep.subr.bf16.mxu0 0
    %465 = vmatpush1.bf16.msra.mxu0 0
    %466 = vmatprep.subr.bf16.mxu0 0
    %467 = vmatpush1.bf16.msra.mxu0 0
    %468 = vmatprep.subr.bf16.mxu0 0
    %469 = vmatpush1.bf16.msra.mxu0 0
    %470 = vmatprep.subr.bf16.mxu0 0
    %471 = vmatpush1.bf16.msra.mxu0 0
    %472 = vmatprep.subr.bf16.mxu0 0
    %473 = vmatpush1.bf16.msra.mxu0 0
    %474 = vmatprep.subr.bf16.mxu0 0
    %475 = vmatpush1.bf16.msra.mxu0 0
    %476 = vmatprep.mubr.bf16.mxu0 0
    %477 = vmatmul.mubr.bf16.gmra.mrb[0].mxu0 %v362
    %v478 = vpop.f32.mrb[0].mxu0
    %v479 = vadd.f32 %v140, %v478
    %v480 = vpop.f32.mrb[0].mxu0
    %v481 = vpop.f32.mrb[0].mxu0
    %v482 = vpop.f32.mrb[0].mxu0
    %483 = vdwg.mxu0
    %484 = vmatprep.subr.bf16.mxu0 0
    %485 = vmatpush1.bf16.msra.mxu0 %v317
    %486 = vmatprep.subr.bf16.mxu0 0
    %487 = vmatpush1.bf16.msra.mxu0 %v318
    %488 = vmatprep.subr.bf16.mxu0 0
    %489 = vmatpush1.bf16.msra.mxu0 0
    %490 = vmatprep.subr.bf16.mxu0 0
    %491 = vmatpush1.bf16.msra.mxu0 0
    %492 = vmatprep.subr.bf16.mxu0 0
    %493 = vmatpush1.bf16.msra.mxu0 0
    %494 = vmatprep.subr.bf16.mxu0 0
    %495 = vmatpush1.bf16.msra.mxu0 0
    %496 = vmatprep.subr.bf16.mxu0 0
    %497 = vmatpush1.bf16.msra.mxu0 0
    %498 = vmatprep.subr.bf16.mxu0 0
    %499 = vmatpush1.bf16.msra.mxu0 0
    %500 = vmatprep.subr.bf16.mxu0 0
    %501 = vmatpush1.bf16.msra.mxu0 0
    %502 = vmatprep.subr.bf16.mxu0 0
    %503 = vmatpush1.bf16.msra.mxu0 0
    %504 = vmatprep.subr.bf16.mxu0 0
    %505 = vmatpush1.bf16.msra.mxu0 0
    %506 = vmatprep.subr.bf16.mxu0 0
    %507 = vmatpush1.bf16.msra.mxu0 0
    %508 = vmatprep.subr.bf16.mxu0 0
    %509 = vmatpush1.bf16.msra.mxu0 0
    %510 = vmatprep.subr.bf16.mxu0 0
    %511 = vmatpush1.bf16.msra.mxu0 0
    %512 = vmatprep.subr.bf16.mxu0 0
    %513 = vmatpush1.bf16.msra.mxu0 0
    %514 = vmatprep.subr.bf16.mxu0 0
    %515 = vmatpush1.bf16.msra.mxu0 0
    %516 = vmatprep.mubr.bf16.mxu0 0
    %517 = vmatmul.mubr.bf16.gmra.mrb[0].mxu0 %v362
    %v518 = vpop.f32.mrb[0].mxu0
    %v519 = vadd.f32 %v144, %v518
    %v520 = vpop.f32.mrb[0].mxu0
    %v521 = vpop.f32.mrb[0].mxu0
    %v522 = vpop.f32.mrb[0].mxu0
    %523 = vdwg.mxu0
    %v528 = vlaneseq
    %v529 = vshrl.u32 %v528, 7
    %v530 = vsub.s32 0, %v529
    %v531 = vrot.slane %v117, %v530
    %v532 = vlaneseq
    %v533 = vshrl.u32 %v532, 7
    %v534 = vsub.s32 0, %v533
    %v535 = vrot.slane %v118, %v534
    %v536 = vlaneseq
    %v537 = vshrl.u32 %v536, 7
    %v538 = vsub.s32 0, %v537
    %v539 = vrot.slane %v119, %v538
    %v540 = vlaneseq
    %v541 = vshrl.u32 %v540, 7
    %v542 = vsub.s32 0, %v541
    %v543 = vrot.slane %v120, %v542
    %v552 = vunpack.c.l.b16 %v97
    %v553 = vunpack.c.l.b16 %v98
    %v554 = vunpack.c.l.b16 %v99
    %v555 = vunpack.c.l.b16 %v100
    %v556 = vpack.c.b16 %v553, %v552
    %v557 = vpack.c.b16 %v555, %v554
    %v561 = vsel %vm161, %v79, 0
    %563 = vmatprep.subr.bf16.mxu0 0
    %564 = vmatpush1.bf16.msra.mxu0 %v556
    %565 = vmatprep.subr.bf16.mxu0 0
    %566 = vmatpush1.bf16.msra.mxu0 %v557
    %567 = vmatprep.subr.bf16.mxu0 0
    %568 = vmatpush1.bf16.msra.mxu0 0
    %569 = vmatprep.subr.bf16.mxu0 0
    %570 = vmatpush1.bf16.msra.mxu0 0
    %571 = vmatprep.subr.bf16.mxu0 0
    %572 = vmatpush1.bf16.msra.mxu0 0
    %573 = vmatprep.subr.bf16.mxu0 0
    %574 = vmatpush1.bf16.msra.mxu0 0
    %575 = vmatprep.subr.bf16.mxu0 0
    %576 = vmatpush1.bf16.msra.mxu0 0
    %577 = vmatprep.subr.bf16.mxu0 0
    %578 = vmatpush1.bf16.msra.mxu0 0
    %579 = vmatprep.subr.bf16.mxu0 0
    %580 = vmatpush1.bf16.msra.mxu0 0
    %581 = vmatprep.subr.bf16.mxu0 0
    %582 = vmatpush1.bf16.msra.mxu0 0
    %583 = vmatprep.subr.bf16.mxu0 0
    %584 = vmatpush1.bf16.msra.mxu0 0
    %585 = vmatprep.subr.bf16.mxu0 0
    %586 = vmatpush1.bf16.msra.mxu0 0
    %587 = vmatprep.subr.bf16.mxu0 0
    %588 = vmatpush1.bf16.msra.mxu0 0
    %589 = vmatprep.subr.bf16.mxu0 0
    %590 = vmatpush1.bf16.msra.mxu0 0
    %591 = vmatprep.subr.bf16.mxu0 0
    %592 = vmatpush1.bf16.msra.mxu0 0
    %593 = vmatprep.subr.bf16.mxu0 0
    %594 = vmatpush1.bf16.msra.mxu0 0
    %595 = vmatprep.mubr.bf16.mxu0 0
    %596 = vmatmul.mubr.bf16.gmra.mrb[0].mxu0 %v561
    %v597 = vpop.f32.mrb[0].mxu0
    %v598 = vadd.f32 %v531, %v597
    %v599 = vpop.f32.mrb[0].mxu0
    %v600 = vpop.f32.mrb[0].mxu0
    %v601 = vpop.f32.mrb[0].mxu0
    %602 = vdwg.mxu0
    %v607 = vunpack.c.l.b16 %v101
    %v608 = vunpack.c.l.b16 %v102
    %v609 = vunpack.c.l.b16 %v103
    %v610 = vunpack.c.l.b16 %v104
    %v611 = vpack.c.b16 %v608, %v607
    %v612 = vpack.c.b16 %v610, %v609
    %615 = vmatprep.subr.bf16.mxu0 0
    %616 = vmatpush1.bf16.msra.mxu0 %v611
    %617 = vmatprep.subr.bf16.mxu0 0
    %618 = vmatpush1.bf16.msra.mxu0 %v612
    %619 = vmatprep.subr.bf16.mxu0 0
    %620 = vmatpush1.bf16.msra.mxu0 0
    %621 = vmatprep.subr.bf16.mxu0 0
    %622 = vmatpush1.bf16.msra.mxu0 0
    %623 = vmatprep.subr.bf16.mxu0 0
    %624 = vmatpush1.bf16.msra.mxu0 0
    %625 = vmatprep.subr.bf16.mxu0 0
    %626 = vmatpush1.bf16.msra.mxu0 0
    %627 = vmatprep.subr.bf16.mxu0 0
    %628 = vmatpush1.bf16.msra.mxu0 0
    %629 = vmatprep.subr.bf16.mxu0 0
    %630 = vmatpush1.bf16.msra.mxu0 0
    %631 = vmatprep.subr.bf16.mxu0 0
    %632 = vmatpush1.bf16.msra.mxu0 0
    %633 = vmatprep.subr.bf16.mxu0 0
    %634 = vmatpush1.bf16.msra.mxu0 0
    %635 = vmatprep.subr.bf16.mxu0 0
    %636 = vmatpush1.bf16.msra.mxu0 0
    %637 = vmatprep.subr.bf16.mxu0 0
    %638 = vmatpush1.bf16.msra.mxu0 0
    %639 = vmatprep.subr.bf16.mxu0 0
    %640 = vmatpush1.bf16.msra.mxu0 0
    %641 = vmatprep.subr.bf16.mxu0 0
    %642 = vmatpush1.bf16.msra.mxu0 0
    %643 = vmatprep.subr.bf16.mxu0 0
    %644 = vmatpush1.bf16.msra.mxu0 0
    %645 = vmatprep.subr.bf16.mxu0 0
    %646 = vmatpush1.bf16.msra.mxu0 0
    %647 = vmatprep.mubr.bf16.mxu0 0
    %648 = vmatmul.mubr.bf16.gmra.mrb[0].mxu0 %v561
    %v649 = vpop.f32.mrb[0].mxu0
    %v650 = vadd.f32 %v535, %v649
    %v651 = vpop.f32.mrb[0].mxu0
    %v652 = vpop.f32.mrb[0].mxu0
    %v653 = vpop.f32.mrb[0].mxu0
    %654 = vdwg.mxu0
    %v659 = vunpack.c.l.b16 %v105
    %v660 = vunpack.c.l.b16 %v106
    %v661 = vunpack.c.l.b16 %v107
    %v662 = vunpack.c.l.b16 %v108
    %v663 = vpack.c.b16 %v660, %v659
    %v664 = vpack.c.b16 %v662, %v661
    %667 = vmatprep.subr.bf16.mxu0 0
    %668 = vmatpush1.bf16.msra.mxu0 %v663
    %669 = vmatprep.subr.bf16.mxu0 0
    %670 = vmatpush1.bf16.msra.mxu0 %v664
    %671 = vmatprep.subr.bf16.mxu0 0
    %672 = vmatpush1.bf16.msra.mxu0 0
    %673 = vmatprep.subr.bf16.mxu0 0
    %674 = vmatpush1.bf16.msra.mxu0 0
    %675 = vmatprep.subr.bf16.mxu0 0
    %676 = vmatpush1.bf16.msra.mxu0 0
    %677 = vmatprep.subr.bf16.mxu0 0
    %678 = vmatpush1.bf16.msra.mxu0 0
    %679 = vmatprep.subr.bf16.mxu0 0
    %680 = vmatpush1.bf16.msra.mxu0 0
    %681 = vmatprep.subr.bf16.mxu0 0
    %682 = vmatpush1.bf16.msra.mxu0 0
    %683 = vmatprep.subr.bf16.mxu0 0
    %684 = vmatpush1.bf16.msra.mxu0 0
    %685 = vmatprep.subr.bf16.mxu0 0
    %686 = vmatpush1.bf16.msra.mxu0 0
    %687 = vmatprep.subr.bf16.mxu0 0
    %688 = vmatpush1.bf16.msra.mxu0 0
    %689 = vmatprep.subr.bf16.mxu0 0
    %690 = vmatpush1.bf16.msra.mxu0 0
    %691 = vmatprep.subr.bf16.mxu0 0
    %692 = vmatpush1.bf16.msra.mxu0 0
    %693 = vmatprep.subr.bf16.mxu0 0
    %694 = vmatpush1.bf16.msra.mxu0 0
    %695 = vmatprep.subr.bf16.mxu0 0
    %696 = vmatpush1.bf16.msra.mxu0 0
    %697 = vmatprep.subr.bf16.mxu0 0
    %698 = vmatpush1.bf16.msra.mxu0 0
    %699 = vmatprep.mubr.bf16.mxu0 0
    %700 = vmatmul.mubr.bf16.gmra.mrb[0].mxu0 %v561
    %v701 = vpop.f32.mrb[0].mxu0
    %v702 = vadd.f32 %v539, %v701
    %v703 = vpop.f32.mrb[0].mxu0
    %v704 = vpop.f32.mrb[0].mxu0
    %v705 = vpop.f32.mrb[0].mxu0
    %706 = vdwg.mxu0
    %v711 = vunpack.c.l.b16 %v109
    %v712 = vunpack.c.l.b16 %v110
    %v713 = vunpack.c.l.b16 %v111
    %v714 = vunpack.c.l.b16 %v112
    %v715 = vpack.c.b16 %v712, %v711
    %v716 = vpack.c.b16 %v714, %v713
    %719 = vmatprep.subr.bf16.mxu0 0
    %720 = vmatpush1.bf16.msra.mxu0 %v715
    %721 = vmatprep.subr.bf16.mxu0 0
    %722 = vmatpush1.bf16.msra.mxu0 %v716
    %723 = vmatprep.subr.bf16.mxu0 0
    %724 = vmatpush1.bf16.msra.mxu0 0
    %725 = vmatprep.subr.bf16.mxu0 0
    %726 = vmatpush1.bf16.msra.mxu0 0
    %727 = vmatprep.subr.bf16.mxu0 0
    %728 = vmatpush1.bf16.msra.mxu0 0
    %729 = vmatprep.subr.bf16.mxu0 0
    %730 = vmatpush1.bf16.msra.mxu0 0
    %731 = vmatprep.subr.bf16.mxu0 0
    %732 = vmatpush1.bf16.msra.mxu0 0
    %733 = vmatprep.subr.bf16.mxu0 0
    %734 = vmatpush1.bf16.msra.mxu0 0
    %735 = vmatprep.subr.bf16.mxu0 0
    %736 = vmatpush1.bf16.msra.mxu0 0
    %737 = vmatprep.subr.bf16.mxu0 0
    %738 = vmatpush1.bf16.msra.mxu0 0
    %739 = vmatprep.subr.bf16.mxu0 0
    %740 = vmatpush1.bf16.msra.mxu0 0
    %741 = vmatprep.subr.bf16.mxu0 0
    %742 = vmatpush1.bf16.msra.mxu0 0
    %743 = vmatprep.subr.bf16.mxu0 0
    %744 = vmatpush1.bf16.msra.mxu0 0
    %745 = vmatprep.subr.bf16.mxu0 0
    %746 = vmatpush1.bf16.msra.mxu0 0
    %747 = vmatprep.subr.bf16.mxu0 0
    %748 = vmatpush1.bf16.msra.mxu0 0
    %749 = vmatprep.subr.bf16.mxu0 0
    %750 = vmatpush1.bf16.msra.mxu0 0
    %751 = vmatprep.mubr.bf16.mxu0 0
    %752 = vmatmul.mubr.bf16.gmra.mrb[0].mxu0 %v561
    %v753 = vpop.f32.mrb[0].mxu0
    %v754 = vadd.f32 %v543, %v753
    %v755 = vpop.f32.mrb[0].mxu0
    %v756 = vpop.f32.mrb[0].mxu0
    %v757 = vpop.f32.mrb[0].mxu0
    %758 = vdwg.mxu0
    %v760 = vsel %vm161, %v80, 0
    %762 = vmatprep.subr.bf16.mxu0 0
    %763 = vmatpush1.bf16.msra.mxu0 %v556
    %764 = vmatprep.subr.bf16.mxu0 0
    %765 = vmatpush1.bf16.msra.mxu0 %v557
    %766 = vmatprep.subr.bf16.mxu0 0
    %767 = vmatpush1.bf16.msra.mxu0 0
    %768 = vmatprep.subr.bf16.mxu0 0
    %769 = vmatpush1.bf16.msra.mxu0 0
    %770 = vmatprep.subr.bf16.mxu0 0
    %771 = vmatpush1.bf16.msra.mxu0 0
    %772 = vmatprep.subr.bf16.mxu0 0
    %773 = vmatpush1.bf16.msra.mxu0 0
    %774 = vmatprep.subr.bf16.mxu0 0
    %775 = vmatpush1.bf16.msra.mxu0 0
    %776 = vmatprep.subr.bf16.mxu0 0
    %777 = vmatpush1.bf16.msra.mxu0 0
    %778 = vmatprep.subr.bf16.mxu0 0
    %779 = vmatpush1.bf16.msra.mxu0 0
    %780 = vmatprep.subr.bf16.mxu0 0
    %781 = vmatpush1.bf16.msra.mxu0 0
    %782 = vmatprep.subr.bf16.mxu0 0
    %783 = vmatpush1.bf16.msra.mxu0 0
    %784 = vmatprep.subr.bf16.mxu0 0
    %785 = vmatpush1.bf16.msra.mxu0 0
    %786 = vmatprep.subr.bf16.mxu0 0
    %787 = vmatpush1.bf16.msra.mxu0 0
    %788 = vmatprep.subr.bf16.mxu0 0
    %789 = vmatpush1.bf16.msra.mxu0 0
    %790 = vmatprep.subr.bf16.mxu0 0
    %791 = vmatpush1.bf16.msra.mxu0 0
    %792 = vmatprep.subr.bf16.mxu0 0
    %793 = vmatpush1.bf16.msra.mxu0 0
    %794 = vmatprep.mubr.bf16.mxu0 0
    %795 = vmatmul.mubr.bf16.gmra.mrb[0].mxu0 %v760
    %v796 = vpop.f32.mrb[0].mxu0
    %v797 = vadd.f32 %v531, %v796
    %v798 = vpop.f32.mrb[0].mxu0
    %v799 = vpop.f32.mrb[0].mxu0
    %v800 = vpop.f32.mrb[0].mxu0
    %801 = vdwg.mxu0
    %802 = vmatprep.subr.bf16.mxu0 0
    %803 = vmatpush1.bf16.msra.mxu0 %v611
    %804 = vmatprep.subr.bf16.mxu0 0
    %805 = vmatpush1.bf16.msra.mxu0 %v612
    %806 = vmatprep.subr.bf16.mxu0 0
    %807 = vmatpush1.bf16.msra.mxu0 0
    %808 = vmatprep.subr.bf16.mxu0 0
    %809 = vmatpush1.bf16.msra.mxu0 0
    %810 = vmatprep.subr.bf16.mxu0 0
    %811 = vmatpush1.bf16.msra.mxu0 0
    %812 = vmatprep.subr.bf16.mxu0 0
    %813 = vmatpush1.bf16.msra.mxu0 0
    %814 = vmatprep.subr.bf16.mxu0 0
    %815 = vmatpush1.bf16.msra.mxu0 0
    %816 = vmatprep.subr.bf16.mxu0 0
    %817 = vmatpush1.bf16.msra.mxu0 0
    %818 = vmatprep.subr.bf16.mxu0 0
    %819 = vmatpush1.bf16.msra.mxu0 0
    %820 = vmatprep.subr.bf16.mxu0 0
    %821 = vmatpush1.bf16.msra.mxu0 0
    %822 = vmatprep.subr.bf16.mxu0 0
    %823 = vmatpush1.bf16.msra.mxu0 0
    %824 = vmatprep.subr.bf16.mxu0 0
    %825 = vmatpush1.bf16.msra.mxu0 0
    %826 = vmatprep.subr.bf16.mxu0 0
    %827 = vmatpush1.bf16.msra.mxu0 0
    %828 = vmatprep.subr.bf16.mxu0 0
    %829 = vmatpush1.bf16.msra.mxu0 0
    %830 = vmatprep.subr.bf16.mxu0 0
    %831 = vmatpush1.bf16.msra.mxu0 0
    %832 = vmatprep.subr.bf16.mxu0 0
    %833 = vmatpush1.bf16.msra.mxu0 0
    %834 = vmatprep.mubr.bf16.mxu0 0
    %835 = vmatmul.mubr.bf16.gmra.mrb[0].mxu0 %v760
    %v836 = vpop.f32.mrb[0].mxu0
    %v837 = vadd.f32 %v535, %v836
    %v838 = vpop.f32.mrb[0].mxu0
    %v839 = vpop.f32.mrb[0].mxu0
    %v840 = vpop.f32.mrb[0].mxu0
    %841 = vdwg.mxu0
    %842 = vmatprep.subr.bf16.mxu0 0
    %843 = vmatpush1.bf16.msra.mxu0 %v663
    %844 = vmatprep.subr.bf16.mxu0 0
    %845 = vmatpush1.bf16.msra.mxu0 %v664
    %846 = vmatprep.subr.bf16.mxu0 0
    %847 = vmatpush1.bf16.msra.mxu0 0
    %848 = vmatprep.subr.bf16.mxu0 0
    %849 = vmatpush1.bf16.msra.mxu0 0
    %850 = vmatprep.subr.bf16.mxu0 0
    %851 = vmatpush1.bf16.msra.mxu0 0
    %852 = vmatprep.subr.bf16.mxu0 0
    %853 = vmatpush1.bf16.msra.mxu0 0
    %854 = vmatprep.subr.bf16.mxu0 0
    %855 = vmatpush1.bf16.msra.mxu0 0
    %856 = vmatprep.subr.bf16.mxu0 0
    %857 = vmatpush1.bf16.msra.mxu0 0
    %858 = vmatprep.subr.bf16.mxu0 0
    %859 = vmatpush1.bf16.msra.mxu0 0
    %860 = vmatprep.subr.bf16.mxu0 0
    %861 = vmatpush1.bf16.msra.mxu0 0
    %862 = vmatprep.subr.bf16.mxu0 0
    %863 = vmatpush1.bf16.msra.mxu0 0
    %864 = vmatprep.subr.bf16.mxu0 0
    %865 = vmatpush1.bf16.msra.mxu0 0
    %866 = vmatprep.subr.bf16.mxu0 0
    %867 = vmatpush1.bf16.msra.mxu0 0
    %868 = vmatprep.subr.bf16.mxu0 0
    %869 = vmatpush1.bf16.msra.mxu0 0
    %870 = vmatprep.subr.bf16.mxu0 0
    %871 = vmatpush1.bf16.msra.mxu0 0
    %872 = vmatprep.subr.bf16.mxu0 0
    %873 = vmatpush1.bf16.msra.mxu0 0
    %874 = vmatprep.mubr.bf16.mxu0 0
    %875 = vmatmul.mubr.bf16.gmra.mrb[0].mxu0 %v760
    %v876 = vpop.f32.mrb[0].mxu0
    %v877 = vadd.f32 %v539, %v876
    %v878 = vpop.f32.mrb[0].mxu0
    %v879 = vpop.f32.mrb[0].mxu0
    %v880 = vpop.f32.mrb[0].mxu0
    %881 = vdwg.mxu0
    %882 = vmatprep.subr.bf16.mxu0 0
    %883 = vmatpush1.bf16.msra.mxu0 %v715
    %884 = vmatprep.subr.bf16.mxu0 0
    %885 = vmatpush1.bf16.msra.mxu0 %v716
    %886 = vmatprep.subr.bf16.mxu0 0
    %887 = vmatpush1.bf16.msra.mxu0 0
    %888 = vmatprep.subr.bf16.mxu0 0
    %889 = vmatpush1.bf16.msra.mxu0 0
    %890 = vmatprep.subr.bf16.mxu0 0
    %891 = vmatpush1.bf16.msra.mxu0 0
    %892 = vmatprep.subr.bf16.mxu0 0
    %893 = vmatpush1.bf16.msra.mxu0 0
    %894 = vmatprep.subr.bf16.mxu0 0
    %895 = vmatpush1.bf16.msra.mxu0 0
    %896 = vmatprep.subr.bf16.mxu0 0
    %897 = vmatpush1.bf16.msra.mxu0 0
    %898 = vmatprep.subr.bf16.mxu0 0
    %899 = vmatpush1.bf16.msra.mxu0 0
    %900 = vmatprep.subr.bf16.mxu0 0
    %901 = vmatpush1.bf16.msra.mxu0 0
    %902 = vmatprep.subr.bf16.mxu0 0
    %903 = vmatpush1.bf16.msra.mxu0 0
    %904 = vmatprep.subr.bf16.mxu0 0
    %905 = vmatpush1.bf16.msra.mxu0 0
    %906 = vmatprep.subr.bf16.mxu0 0
    %907 = vmatpush1.bf16.msra.mxu0 0
    %908 = vmatprep.subr.bf16.mxu0 0
    %909 = vmatpush1.bf16.msra.mxu0 0
    %910 = vmatprep.subr.bf16.mxu0 0
    %911 = vmatpush1.bf16.msra.mxu0 0
    %912 = vmatprep.subr.bf16.mxu0 0
    %913 = vmatpush1.bf16.msra.mxu0 0
    %914 = vmatprep.mubr.bf16.mxu0 0
    %915 = vmatmul.mubr.bf16.gmra.mrb[0].mxu0 %v760
    %v916 = vpop.f32.mrb[0].mxu0
    %v917 = vadd.f32 %v543, %v916
    %v918 = vpop.f32.mrb[0].mxu0
    %v919 = vpop.f32.mrb[0].mxu0
    %v920 = vpop.f32.mrb[0].mxu0
    %921 = vdwg.mxu0
    %v922 = vpack.c.bf16 %v200, %v200
    %v923 = vpack.c.bf16 %v252, %v252
    %v924 = vpack.c.bf16 %v304, %v304
    %v925 = vpack.c.bf16 %v356, %v356
    %v926 = vpack.c.bf16 %v399, %v399
    %v927 = vpack.c.bf16 %v439, %v439
    %v928 = vpack.c.bf16 %v479, %v479
    %v929 = vpack.c.bf16 %v519, %v519
    %v930 = vpack.c.bf16 %v598, %v598
    %v931 = vpack.c.bf16 %v650, %v650
    %v932 = vpack.c.bf16 %v702, %v702
    %v933 = vpack.c.bf16 %v754, %v754
    %v934 = vpack.c.bf16 %v797, %v797
    %v935 = vpack.c.bf16 %v837, %v837
    %v936 = vpack.c.bf16 %v877, %v877
    %v937 = vpack.c.bf16 %v917, %v917
    %vm938 = vcmask 64512
    %v940 = vsel %vm938, %v922, 0
    %v943 = vsel %vm938, %v930, 0
    %945 = vmatprep.subr.bf16.mxu0 0
    %946 = vmatpush1.bf16.xpose.msra.mxu0 %v943
    %947 = vmatprep.subr.bf16.mxu0 0
    %948 = vmatpush1.bf16.xpose.msra.mxu0 0
    %949 = vmatprep.subr.bf16.mxu0 0
    %950 = vmatpush1.bf16.xpose.msra.mxu0 0
    %951 = vmatprep.subr.bf16.mxu0 0
    %952 = vmatpush1.bf16.xpose.msra.mxu0 0
    %953 = vmatprep.subr.bf16.mxu0 0
    %954 = vmatpush1.bf16.xpose.msra.mxu0 0
    %955 = vmatprep.subr.bf16.mxu0 0
    %956 = vmatpush1.bf16.xpose.msra.mxu0 0
    %957 = vmatprep.subr.bf16.mxu0 0
    %958 = vmatpush1.bf16.xpose.msra.mxu0 0
    %959 = vmatprep.subr.bf16.mxu0 0
    %960 = vmatpush1.bf16.xpose.msra.mxu0 0
    %961 = vmatprep.subr.bf16.mxu0 0
    %962 = vmatpush1.bf16.xpose.msra.mxu0 0
    %963 = vmatprep.subr.bf16.mxu0 0
    %964 = vmatpush1.bf16.xpose.msra.mxu0 0
    %965 = vmatprep.subr.bf16.mxu0 0
    %966 = vmatpush1.bf16.xpose.msra.mxu0 0
    %967 = vmatprep.subr.bf16.mxu0 0
    %968 = vmatpush1.bf16.xpose.msra.mxu0 0
    %969 = vmatprep.subr.bf16.mxu0 0
    %970 = vmatpush1.bf16.xpose.msra.mxu0 0
    %971 = vmatprep.subr.bf16.mxu0 0
    %972 = vmatpush1.bf16.xpose.msra.mxu0 0
    %973 = vmatprep.subr.bf16.mxu0 0
    %974 = vmatpush1.bf16.xpose.msra.mxu0 0
    %975 = vmatprep.subr.bf16.mxu0 0
    %976 = vmatpush1.bf16.xpose.msra.mxu0 0
    %977 = vmatprep.mubr.bf16.mxu0 0
    %978 = vmatmul.mubr.bf16.gmra.mrb[0].mxu0 %v940
    %v979 = vpop.f32.mrb[0].mxu0
    %v980 = vadd.f32 0.0, %v979
    %v981 = vpop.f32.mrb[0].mxu0
    %v982 = vpop.f32.mrb[0].mxu0
    %v983 = vpop.f32.mrb[0].mxu0
    %984 = vdwg.mxu0
    %v986 = vsel %vm938, %v923, 0
    %v989 = vsel %vm938, %v931, 0
    %991 = vmatprep.subr.bf16.mxu0 0
    %992 = vmatpush1.bf16.xpose.msra.mxu0 %v989
    %993 = vmatprep.subr.bf16.mxu0 0
    %994 = vmatpush1.bf16.xpose.msra.mxu0 0
    %995 = vmatprep.subr.bf16.mxu0 0
    %996 = vmatpush1.bf16.xpose.msra.mxu0 0
    %997 = vmatprep.subr.bf16.mxu0 0
    %998 = vmatpush1.bf16.xpose.msra.mxu0 0
    %999 = vmatprep.subr.bf16.mxu0 0
    %1000 = vmatpush1.bf16.xpose.msra.mxu0 0
    %1001 = vmatprep.subr.bf16.mxu0 0
    %1002 = vmatpush1.bf16.xpose.msra.mxu0 0
    %1003 = vmatprep.subr.bf16.mxu0 0
    %1004 = vmatpush1.bf16.xpose.msra.mxu0 0
    %1005 = vmatprep.subr.bf16.mxu0 0
    %1006 = vmatpush1.bf16.xpose.msra.mxu0 0
    %1007 = vmatprep.subr.bf16.mxu0 0
    %1008 = vmatpush1.bf16.xpose.msra.mxu0 0
    %1009 = vmatprep.subr.bf16.mxu0 0
    %1010 = vmatpush1.bf16.xpose.msra.mxu0 0
    %1011 = vmatprep.subr.bf16.mxu0 0
    %1012 = vmatpush1.bf16.xpose.msra.mxu0 0
    %1013 = vmatprep.subr.bf16.mxu0 0
    %1014 = vmatpush1.bf16.xpose.msra.mxu0 0
    %1015 = vmatprep.subr.bf16.mxu0 0
    %1016 = vmatpush1.bf16.xpose.msra.mxu0 0
    %1017 = vmatprep.subr.bf16.mxu0 0
    %1018 = vmatpush1.bf16.xpose.msra.mxu0 0
    %1019 = vmatprep.subr.bf16.mxu0 0
    %1020 = vmatpush1.bf16.xpose.msra.mxu0 0
    %1021 = vmatprep.subr.bf16.mxu0 0
    %1022 = vmatpush1.bf16.xpose.msra.mxu0 0
    %1023 = vmatprep.mubr.bf16.mxu0 0
    %1024 = vmatmul.mubr.bf16.gmra.mrb[0].mxu0 %v986
    %v1025 = vpop.f32.mrb[0].mxu0
    %v1026 = vadd.f32 0.0, %v1025
    %v1027 = vpop.f32.mrb[0].mxu0
    %v1028 = vpop.f32.mrb[0].mxu0
    %v1029 = vpop.f32.mrb[0].mxu0
    %1030 = vdwg.mxu0
    %v1032 = vsel %vm938, %v924, 0
    %v1035 = vsel %vm938, %v932, 0
    %1037 = vmatprep.subr.bf16.mxu0 0
    %1038 = vmatpush1.bf16.xpose.msra.mxu0 %v1035
    %1039 = vmatprep.subr.bf16.mxu0 0
    %1040 = vmatpush1.bf16.xpose.msra.mxu0 0
    %1041 = vmatprep.subr.bf16.mxu0 0
    %1042 = vmatpush1.bf16.xpose.msra.mxu0 0
    %1043 = vmatprep.subr.bf16.mxu0 0
    %1044 = vmatpush1.bf16.xpose.msra.mxu0 0
    %1045 = vmatprep.subr.bf16.mxu0 0
    %1046 = vmatpush1.bf16.xpose.msra.mxu0 0
    %1047 = vmatprep.subr.bf16.mxu0 0
    %1048 = vmatpush1.bf16.xpose.msra.mxu0 0
    %1049 = vmatprep.subr.bf16.mxu0 0
    %1050 = vmatpush1.bf16.xpose.msra.mxu0 0
    %1051 = vmatprep.subr.bf16.mxu0 0
    %1052 = vmatpush1.bf16.xpose.msra.mxu0 0
    %1053 = vmatprep.subr.bf16.mxu0 0
    %1054 = vmatpush1.bf16.xpose.msra.mxu0 0
    %1055 = vmatprep.subr.bf16.mxu0 0
    %1056 = vmatpush1.bf16.xpose.msra.mxu0 0
    %1057 = vmatprep.subr.bf16.mxu0 0
    %1058 = vmatpush1.bf16.xpose.msra.mxu0 0
    %1059 = vmatprep.subr.bf16.mxu0 0
    %1060 = vmatpush1.bf16.xpose.msra.mxu0 0
    %1061 = vmatprep.subr.bf16.mxu0 0
    %1062 = vmatpush1.bf16.xpose.msra.mxu0 0
    %1063 = vmatprep.subr.bf16.mxu0 0
    %1064 = vmatpush1.bf16.xpose.msra.mxu0 0
    %1065 = vmatprep.subr.bf16.mxu0 0
    %1066 = vmatpush1.bf16.xpose.msra.mxu0 0
    %1067 = vmatprep.subr.bf16.mxu0 0
    %1068 = vmatpush1.bf16.xpose.msra.mxu0 0
    %1069 = vmatprep.mubr.bf16.mxu0 0
    %1070 = vmatmul.mubr.bf16.gmra.mrb[0].mxu0 %v1032
    %v1071 = vpop.f32.mrb[0].mxu0
    %v1072 = vadd.f32 0.0, %v1071
    %v1073 = vpop.f32.mrb[0].mxu0
    %v1074 = vpop.f32.mrb[0].mxu0
    %v1075 = vpop.f32.mrb[0].mxu0
    %1076 = vdwg.mxu0
    %v1078 = vsel %vm938, %v925, 0
    %v1081 = vsel %vm938, %v933, 0
    %1083 = vmatprep.subr.bf16.mxu0 0
    %1084 = vmatpush1.bf16.xpose.msra.mxu0 %v1081
    %1085 = vmatprep.subr.bf16.mxu0 0
    %1086 = vmatpush1.bf16.xpose.msra.mxu0 0
    %1087 = vmatprep.subr.bf16.mxu0 0
    %1088 = vmatpush1.bf16.xpose.msra.mxu0 0
    %1089 = vmatprep.subr.bf16.mxu0 0
    %1090 = vmatpush1.bf16.xpose.msra.mxu0 0
    %1091 = vmatprep.subr.bf16.mxu0 0
    %1092 = vmatpush1.bf16.xpose.msra.mxu0 0
    %1093 = vmatprep.subr.bf16.mxu0 0
    %1094 = vmatpush1.bf16.xpose.msra.mxu0 0
    %1095 = vmatprep.subr.bf16.mxu0 0
    %1096 = vmatpush1.bf16.xpose.msra.mxu0 0
    %1097 = vmatprep.subr.bf16.mxu0 0
    %1098 = vmatpush1.bf16.xpose.msra.mxu0 0
    %1099 = vmatprep.subr.bf16.mxu0 0
    %1100 = vmatpush1.bf16.xpose.msra.mxu0 0
    %1101 = vmatprep.subr.bf16.mxu0 0
    %1102 = vmatpush1.bf16.xpose.msra.mxu0 0
    %1103 = vmatprep.subr.bf16.mxu0 0
    %1104 = vmatpush1.bf16.xpose.msra.mxu0 0
    %1105 = vmatprep.subr.bf16.mxu0 0
    %1106 = vmatpush1.bf16.xpose.msra.mxu0 0
    %1107 = vmatprep.subr.bf16.mxu0 0
    %1108 = vmatpush1.bf16.xpose.msra.mxu0 0
    %1109 = vmatprep.subr.bf16.mxu0 0
    %1110 = vmatpush1.bf16.xpose.msra.mxu0 0
    %1111 = vmatprep.subr.bf16.mxu0 0
    %1112 = vmatpush1.bf16.xpose.msra.mxu0 0
    %1113 = vmatprep.subr.bf16.mxu0 0
    %1114 = vmatpush1.bf16.xpose.msra.mxu0 0
    %1115 = vmatprep.mubr.bf16.mxu0 0
    %1116 = vmatmul.mubr.bf16.gmra.mrb[0].mxu0 %v1078
    %v1117 = vpop.f32.mrb[0].mxu0
    %v1118 = vadd.f32 0.0, %v1117
    %v1119 = vpop.f32.mrb[0].mxu0
    %v1120 = vpop.f32.mrb[0].mxu0
    %v1121 = vpop.f32.mrb[0].mxu0
    %1122 = vdwg.mxu0
    %v1124 = vsel %vm938, %v926, 0
    %v1127 = vsel %vm938, %v934, 0
    %1129 = vmatprep.subr.bf16.mxu0 0
    %1130 = vmatpush1.bf16.xpose.msra.mxu0 %v1127
    %1131 = vmatprep.subr.bf16.mxu0 0
    %1132 = vmatpush1.bf16.xpose.msra.mxu0 0
    %1133 = vmatprep.subr.bf16.mxu0 0
    %1134 = vmatpush1.bf16.xpose.msra.mxu0 0
    %1135 = vmatprep.subr.bf16.mxu0 0
    %1136 = vmatpush1.bf16.xpose.msra.mxu0 0
    %1137 = vmatprep.subr.bf16.mxu0 0
    %1138 = vmatpush1.bf16.xpose.msra.mxu0 0
    %1139 = vmatprep.subr.bf16.mxu0 0
    %1140 = vmatpush1.bf16.xpose.msra.mxu0 0
    %1141 = vmatprep.subr.bf16.mxu0 0
    %1142 = vmatpush1.bf16.xpose.msra.mxu0 0
    %1143 = vmatprep.subr.bf16.mxu0 0
    %1144 = vmatpush1.bf16.xpose.msra.mxu0 0
    %1145 = vmatprep.subr.bf16.mxu0 0
    %1146 = vmatpush1.bf16.xpose.msra.mxu0 0
    %1147 = vmatprep.subr.bf16.mxu0 0
    %1148 = vmatpush1.bf16.xpose.msra.mxu0 0
    %1149 = vmatprep.subr.bf16.mxu0 0
    %1150 = vmatpush1.bf16.xpose.msra.mxu0 0
    %1151 = vmatprep.subr.bf16.mxu0 0
    %1152 = vmatpush1.bf16.xpose.msra.mxu0 0
    %1153 = vmatprep.subr.bf16.mxu0 0
    %1154 = vmatpush1.bf16.xpose.msra.mxu0 0
    %1155 = vmatprep.subr.bf16.mxu0 0
    %1156 = vmatpush1.bf16.xpose.msra.mxu0 0
    %1157 = vmatprep.subr.bf16.mxu0 0
    %1158 = vmatpush1.bf16.xpose.msra.mxu0 0
    %1159 = vmatprep.subr.bf16.mxu0 0
    %1160 = vmatpush1.bf16.xpose.msra.mxu0 0
    %1161 = vmatprep.mubr.bf16.mxu0 0
    %1162 = vmatmul.mubr.bf16.gmra.mrb[0].mxu0 %v1124
    %v1163 = vpop.f32.mrb[0].mxu0
    %v1164 = vadd.f32 0.0, %v1163
    %v1165 = vpop.f32.mrb[0].mxu0
    %v1166 = vpop.f32.mrb[0].mxu0
    %v1167 = vpop.f32.mrb[0].mxu0
    %1168 = vdwg.mxu0
    %v1170 = vsel %vm938, %v927, 0
    %v1173 = vsel %vm938, %v935, 0
    %1175 = vmatprep.subr.bf16.mxu0 0
    %1176 = vmatpush1.bf16.xpose.msra.mxu0 %v1173
    %1177 = vmatprep.subr.bf16.mxu0 0
    %1178 = vmatpush1.bf16.xpose.msra.mxu0 0
    %1179 = vmatprep.subr.bf16.mxu0 0
    %1180 = vmatpush1.bf16.xpose.msra.mxu0 0
    %1181 = vmatprep.subr.bf16.mxu0 0
    %1182 = vmatpush1.bf16.xpose.msra.mxu0 0
    %1183 = vmatprep.subr.bf16.mxu0 0
    %1184 = vmatpush1.bf16.xpose.msra.mxu0 0
    %1185 = vmatprep.subr.bf16.mxu0 0
    %1186 = vmatpush1.bf16.xpose.msra.mxu0 0
    %1187 = vmatprep.subr.bf16.mxu0 0
    %1188 = vmatpush1.bf16.xpose.msra.mxu0 0
    %1189 = vmatprep.subr.bf16.mxu0 0
    %1190 = vmatpush1.bf16.xpose.msra.mxu0 0
    %1191 = vmatprep.subr.bf16.mxu0 0
    %1192 = vmatpush1.bf16.xpose.msra.mxu0 0
    %1193 = vmatprep.subr.bf16.mxu0 0
    %1194 = vmatpush1.bf16.xpose.msra.mxu0 0
    %1195 = vmatprep.subr.bf16.mxu0 0
    %1196 = vmatpush1.bf16.xpose.msra.mxu0 0
    %1197 = vmatprep.subr.bf16.mxu0 0
    %1198 = vmatpush1.bf16.xpose.msra.mxu0 0
    %1199 = vmatprep.subr.bf16.mxu0 0
    %1200 = vmatpush1.bf16.xpose.msra.mxu0 0
    %1201 = vmatprep.subr.bf16.mxu0 0
    %1202 = vmatpush1.bf16.xpose.msra.mxu0 0
    %1203 = vmatprep.subr.bf16.mxu0 0
    %1204 = vmatpush1.bf16.xpose.msra.mxu0 0
    %1205 = vmatprep.subr.bf16.mxu0 0
    %1206 = vmatpush1.bf16.xpose.msra.mxu0 0
    %1207 = vmatprep.mubr.bf16.mxu0 0
    %1208 = vmatmul.mubr.bf16.gmra.mrb[0].mxu0 %v1170
    %v1209 = vpop.f32.mrb[0].mxu0
    %v1210 = vadd.f32 0.0, %v1209
    %v1211 = vpop.f32.mrb[0].mxu0
    %v1212 = vpop.f32.mrb[0].mxu0
    %v1213 = vpop.f32.mrb[0].mxu0
    %1214 = vdwg.mxu0
    %v1216 = vsel %vm938, %v928, 0
    %v1219 = vsel %vm938, %v936, 0
    %1221 = vmatprep.subr.bf16.mxu0 0
    %1222 = vmatpush1.bf16.xpose.msra.mxu0 %v1219
    %1223 = vmatprep.subr.bf16.mxu0 0
    %1224 = vmatpush1.bf16.xpose.msra.mxu0 0
    %1225 = vmatprep.subr.bf16.mxu0 0
    %1226 = vmatpush1.bf16.xpose.msra.mxu0 0
    %1227 = vmatprep.subr.bf16.mxu0 0
    %1228 = vmatpush1.bf16.xpose.msra.mxu0 0
    %1229 = vmatprep.subr.bf16.mxu0 0
    %1230 = vmatpush1.bf16.xpose.msra.mxu0 0
    %1231 = vmatprep.subr.bf16.mxu0 0
    %1232 = vmatpush1.bf16.xpose.msra.mxu0 0
    %1233 = vmatprep.subr.bf16.mxu0 0
    %1234 = vmatpush1.bf16.xpose.msra.mxu0 0
    %1235 = vmatprep.subr.bf16.mxu0 0
    %1236 = vmatpush1.bf16.xpose.msra.mxu0 0
    %1237 = vmatprep.subr.bf16.mxu0 0
    %1238 = vmatpush1.bf16.xpose.msra.mxu0 0
    %1239 = vmatprep.subr.bf16.mxu0 0
    %1240 = vmatpush1.bf16.xpose.msra.mxu0 0
    %1241 = vmatprep.subr.bf16.mxu0 0
    %1242 = vmatpush1.bf16.xpose.msra.mxu0 0
    %1243 = vmatprep.subr.bf16.mxu0 0
    %1244 = vmatpush1.bf16.xpose.msra.mxu0 0
    %1245 = vmatprep.subr.bf16.mxu0 0
    %1246 = vmatpush1.bf16.xpose.msra.mxu0 0
    %1247 = vmatprep.subr.bf16.mxu0 0
    %1248 = vmatpush1.bf16.xpose.msra.mxu0 0
    %1249 = vmatprep.subr.bf16.mxu0 0
    %1250 = vmatpush1.bf16.xpose.msra.mxu0 0
    %1251 = vmatprep.subr.bf16.mxu0 0
    %1252 = vmatpush1.bf16.xpose.msra.mxu0 0
    %1253 = vmatprep.mubr.bf16.mxu0 0
    %1254 = vmatmul.mubr.bf16.gmra.mrb[0].mxu0 %v1216
    %v1255 = vpop.f32.mrb[0].mxu0
    %v1256 = vadd.f32 0.0, %v1255
    %v1257 = vpop.f32.mrb[0].mxu0
    %v1258 = vpop.f32.mrb[0].mxu0
    %v1259 = vpop.f32.mrb[0].mxu0
    %1260 = vdwg.mxu0
    %v1262 = vsel %vm938, %v929, 0
    %v1265 = vsel %vm938, %v937, 0
    %1267 = vmatprep.subr.bf16.mxu0 0
    %1268 = vmatpush1.bf16.xpose.msra.mxu0 %v1265
    %1269 = vmatprep.subr.bf16.mxu0 0
    %1270 = vmatpush1.bf16.xpose.msra.mxu0 0
    %1271 = vmatprep.subr.bf16.mxu0 0
    %1272 = vmatpush1.bf16.xpose.msra.mxu0 0
    %1273 = vmatprep.subr.bf16.mxu0 0
    %1274 = vmatpush1.bf16.xpose.msra.mxu0 0
    %1275 = vmatprep.subr.bf16.mxu0 0
    %1276 = vmatpush1.bf16.xpose.msra.mxu0 0
    %1277 = vmatprep.subr.bf16.mxu0 0
    %1278 = vmatpush1.bf16.xpose.msra.mxu0 0
    %1279 = vmatprep.subr.bf16.mxu0 0
    %1280 = vmatpush1.bf16.xpose.msra.mxu0 0
    %1281 = vmatprep.subr.bf16.mxu0 0
    %1282 = vmatpush1.bf16.xpose.msra.mxu0 0
    %1283 = vmatprep.subr.bf16.mxu0 0
    %1284 = vmatpush1.bf16.xpose.msra.mxu0 0
    %1285 = vmatprep.subr.bf16.mxu0 0
    %1286 = vmatpush1.bf16.xpose.msra.mxu0 0
    %1287 = vmatprep.subr.bf16.mxu0 0
    %1288 = vmatpush1.bf16.xpose.msra.mxu0 0
    %1289 = vmatprep.subr.bf16.mxu0 0
    %1290 = vmatpush1.bf16.xpose.msra.mxu0 0
    %1291 = vmatprep.subr.bf16.mxu0 0
    %1292 = vmatpush1.bf16.xpose.msra.mxu0 0
    %1293 = vmatprep.subr.bf16.mxu0 0
    %1294 = vmatpush1.bf16.xpose.msra.mxu0 0
    %1295 = vmatprep.subr.bf16.mxu0 0
    %1296 = vmatpush1.bf16.xpose.msra.mxu0 0
    %1297 = vmatprep.subr.bf16.mxu0 0
    %1298 = vmatpush1.bf16.xpose.msra.mxu0 0
    %1299 = vmatprep.mubr.bf16.mxu0 0
    %1300 = vmatmul.mubr.bf16.gmra.mrb[0].mxu0 %v1262
    %v1301 = vpop.f32.mrb[0].mxu0
    %v1302 = vadd.f32 0.0, %v1301
    %v1303 = vpop.f32.mrb[0].mxu0
    %v1304 = vpop.f32.mrb[0].mxu0
    %v1305 = vpop.f32.mrb[0].mxu0
    %1306 = vdwg.mxu0
    %v1307 = vmul.f32 %v980, 0.35355338
    %v1308 = vmul.f32 %v1026, 0.35355338
    %v1309 = vmul.f32 %v1072, 0.35355338
    %v1310 = vmul.f32 %v1118, 0.35355338
    %v1311 = vmul.f32 %v1164, 0.35355338
    %v1312 = vmul.f32 %v1210, 0.35355338
    %v1313 = vmul.f32 %v1256, 0.35355338
    %v1314 = vmul.f32 %v1302, 0.35355338
    %v1315 = vsel %vm938, %v1307, -inf
    %1316 = vmax.xlane.f32.xlu0 %v1315
    %v1317 = vpop.xlane.xlu0 %1316
    %v1318 = vsel %vm938, %v1308, -inf
    %1319 = vmax.xlane.f32.xlu0 %v1318
    %v1320 = vpop.xlane.xlu0 %1319
    %v1321 = vsel %vm938, %v1309, -inf
    %1322 = vmax.xlane.f32.xlu0 %v1321
    %v1323 = vpop.xlane.xlu0 %1322
    %v1324 = vsel %vm938, %v1310, -inf
    %1325 = vmax.xlane.f32.xlu0 %v1324
    %v1326 = vpop.xlane.xlu0 %1325
    %v1327 = vsel %vm938, %v1311, -inf
    %1328 = vmax.xlane.f32.xlu0 %v1327
    %v1329 = vpop.xlane.xlu0 %1328
    %v1330 = vsel %vm938, %v1312, -inf
    %1331 = vmax.xlane.f32.xlu0 %v1330
    %v1332 = vpop.xlane.xlu0 %1331
    %v1333 = vsel %vm938, %v1313, -inf
    %1334 = vmax.xlane.f32.xlu0 %v1333
    %v1335 = vpop.xlane.xlu0 %1334
    %v1336 = vsel %vm938, %v1314, -inf
    %1337 = vmax.xlane.f32.xlu0 %v1336
    %v1338 = vpop.xlane.xlu0 %1337
    %v1339 = vsub.f32 %v1307, %v1317
    %v1340 = vsub.f32 %v1308, %v1320
    %v1341 = vsub.f32 %v1309, %v1323
    %v1342 = vsub.f32 %v1310, %v1326
    %v1343 = vsub.f32 %v1311, %v1329
    %v1344 = vsub.f32 %v1312, %v1332
    %v1345 = vsub.f32 %v1313, %v1335
    %v1346 = vsub.f32 %v1314, %v1338
    %v1347 = vmul.f32 %v1339, 1.442695
    %v1348 = vpow.pop %v1347
    %v1349 = vmul.f32 %v1340, 1.442695
    %v1350 = vpow.pop %v1349
    %v1351 = vmul.f32 %v1341, 1.442695
    %v1352 = vpow.pop %v1351
    %v1353 = vmul.f32 %v1342, 1.442695
    %v1354 = vpow.pop %v1353
    %v1355 = vmul.f32 %v1343, 1.442695
    %v1356 = vpow.pop %v1355
    %v1357 = vmul.f32 %v1344, 1.442695
    %v1358 = vpow.pop %v1357
    %v1359 = vmul.f32 %v1345, 1.442695
    %v1360 = vpow.pop %v1359
    %v1361 = vmul.f32 %v1346, 1.442695
    %v1362 = vpow.pop %v1361
    %v1363 = vsel %vm938, %v1348, 0.0
    %1364 = vadd.xlane.f32.xlu0 %v1363
    %v1365 = vpop.xlane.xlu0 %1364
    %v1366 = vsel %vm938, %v1350, 0.0
    %1367 = vadd.xlane.f32.xlu0 %v1366
    %v1368 = vpop.xlane.xlu0 %1367
    %v1369 = vsel %vm938, %v1352, 0.0
    %1370 = vadd.xlane.f32.xlu0 %v1369
    %v1371 = vpop.xlane.xlu0 %1370
    %v1372 = vsel %vm938, %v1354, 0.0
    %1373 = vadd.xlane.f32.xlu0 %v1372
    %v1374 = vpop.xlane.xlu0 %1373
    %v1375 = vsel %vm938, %v1356, 0.0
    %1376 = vadd.xlane.f32.xlu0 %v1375
    %v1377 = vpop.xlane.xlu0 %1376
    %v1378 = vsel %vm938, %v1358, 0.0
    %1379 = vadd.xlane.f32.xlu0 %v1378
    %v1380 = vpop.xlane.xlu0 %1379
    %v1381 = vsel %vm938, %v1360, 0.0
    %1382 = vadd.xlane.f32.xlu0 %v1381
    %v1383 = vpop.xlane.xlu0 %1382
    %v1384 = vsel %vm938, %v1362, 0.0
    %1385 = vadd.xlane.f32.xlu0 %v1384
    %v1386 = vpop.xlane.xlu0 %1385
    %v1387 = vrcp.pop %v1365
    %v1388 = vrcp.pop %v1368
    %v1389 = vrcp.pop %v1371
    %v1390 = vrcp.pop %v1374
    %v1391 = vrcp.pop %v1377
    %v1392 = vrcp.pop %v1380
    %v1393 = vrcp.pop %v1383
    %v1394 = vrcp.pop %v1386
    %v1395 = vmul.f32 %v1348, %v1387
    %v1396 = vmul.f32 %v1350, %v1388
    %v1397 = vmul.f32 %v1352, %v1389
    %v1398 = vmul.f32 %v1354, %v1390
    %v1399 = vmul.f32 %v1356, %v1391
    %v1400 = vmul.f32 %v1358, %v1392
    %v1401 = vmul.f32 %v1360, %v1393
    %v1402 = vmul.f32 %v1362, %v1394
    %v1403 = vpack.c.bf16 %v1395, %v1395
    %v1404 = vpack.c.bf16 %v1396, %v1396
    %v1405 = vpack.c.bf16 %v1397, %v1397
    %v1406 = vpack.c.bf16 %v1398, %v1398
    %v1407 = vpack.c.bf16 %v1399, %v1399
    %v1408 = vpack.c.bf16 %v1400, %v1400
    %v1409 = vpack.c.bf16 %v1401, %v1401
    %v1410 = vpack.c.bf16 %v1402, %v1402
    %1412 = vrot.lane.b32.xlu0 %v930, 120
    %v1413 = vpop.permute.xlu0 %1412
    %v1415 = vsel %vm938, %v1403, 0
    %vm1417 = vcmask 1043456
    %v1419 = vsel %vm1417, %v1413, 0
    %1421 = vmatprep.subr.bf16.mxu0 0
    %1422 = vmatpush1.bf16.msra.mxu0 %v1419
    %1423 = vmatprep.subr.bf16.mxu0 0
    %1424 = vmatpush1.bf16.msra.mxu0 0
    %1425 = vmatprep.subr.bf16.mxu0 0
    %1426 = vmatpush1.bf16.msra.mxu0 0
    %1427 = vmatprep.subr.bf16.mxu0 0
    %1428 = vmatpush1.bf16.msra.mxu0 0
    %1429 = vmatprep.subr.bf16.mxu0 0
    %1430 = vmatpush1.bf16.msra.mxu0 0
    %1431 = vmatprep.subr.bf16.mxu0 0
    %1432 = vmatpush1.bf16.msra.mxu0 0
    %1433 = vmatprep.subr.bf16.mxu0 0
    %1434 = vmatpush1.bf16.msra.mxu0 0
    %1435 = vmatprep.subr.bf16.mxu0 0
    %1436 = vmatpush1.bf16.msra.mxu0 0
    %1437 = vmatprep.subr.bf16.mxu0 0
    %1438 = vmatpush1.bf16.msra.mxu0 0
    %1439 = vmatprep.subr.bf16.mxu0 0
    %1440 = vmatpush1.bf16.msra.mxu0 0
    %1441 = vmatprep.subr.bf16.mxu0 0
    %1442 = vmatpush1.bf16.msra.mxu0 0
    %1443 = vmatprep.subr.bf16.mxu0 0
    %1444 = vmatpush1.bf16.msra.mxu0 0
    %1445 = vmatprep.subr.bf16.mxu0 0
    %1446 = vmatpush1.bf16.msra.mxu0 0
    %1447 = vmatprep.subr.bf16.mxu0 0
    %1448 = vmatpush1.bf16.msra.mxu0 0
    %1449 = vmatprep.subr.bf16.mxu0 0
    %1450 = vmatpush1.bf16.msra.mxu0 0
    %1451 = vmatprep.subr.bf16.mxu0 0
    %1452 = vmatpush1.bf16.msra.mxu0 0
    %1453 = vmatprep.mubr.bf16.mxu0 0
    %1454 = vmatmul.mubr.bf16.gmra.mrb[0].mxu0 %v1415
    %v1455 = vpop.f32.mrb[0].mxu0
    %v1456 = vadd.f32 0.0, %v1455
    %v1457 = vpop.f32.mrb[0].mxu0
    %v1458 = vpop.f32.mrb[0].mxu0
    %v1459 = vpop.f32.mrb[0].mxu0
    %1460 = vdwg.mxu0
    %1462 = vrot.lane.b32.xlu0 %v931, 120
    %v1463 = vpop.permute.xlu0 %1462
    %v1465 = vsel %vm938, %v1404, 0
    %v1468 = vsel %vm1417, %v1463, 0
    %1470 = vmatprep.subr.bf16.mxu0 0
    %1471 = vmatpush1.bf16.msra.mxu0 %v1468
    %1472 = vmatprep.subr.bf16.mxu0 0
    %1473 = vmatpush1.bf16.msra.mxu0 0
    %1474 = vmatprep.subr.bf16.mxu0 0
    %1475 = vmatpush1.bf16.msra.mxu0 0
    %1476 = vmatprep.subr.bf16.mxu0 0
    %1477 = vmatpush1.bf16.msra.mxu0 0
    %1478 = vmatprep.subr.bf16.mxu0 0
    %1479 = vmatpush1.bf16.msra.mxu0 0
    %1480 = vmatprep.subr.bf16.mxu0 0
    %1481 = vmatpush1.bf16.msra.mxu0 0
    %1482 = vmatprep.subr.bf16.mxu0 0
    %1483 = vmatpush1.bf16.msra.mxu0 0
    %1484 = vmatprep.subr.bf16.mxu0 0
    %1485 = vmatpush1.bf16.msra.mxu0 0
    %1486 = vmatprep.subr.bf16.mxu0 0
    %1487 = vmatpush1.bf16.msra.mxu0 0
    %1488 = vmatprep.subr.bf16.mxu0 0
    %1489 = vmatpush1.bf16.msra.mxu0 0
    %1490 = vmatprep.subr.bf16.mxu0 0
    %1491 = vmatpush1.bf16.msra.mxu0 0
    %1492 = vmatprep.subr.bf16.mxu0 0
    %1493 = vmatpush1.bf16.msra.mxu0 0
    %1494 = vmatprep.subr.bf16.mxu0 0
    %1495 = vmatpush1.bf16.msra.mxu0 0
    %1496 = vmatprep.subr.bf16.mxu0 0
    %1497 = vmatpush1.bf16.msra.mxu0 0
    %1498 = vmatprep.subr.bf16.mxu0 0
    %1499 = vmatpush1.bf16.msra.mxu0 0
    %1500 = vmatprep.subr.bf16.mxu0 0
    %1501 = vmatpush1.bf16.msra.mxu0 0
    %1502 = vmatprep.mubr.bf16.mxu0 0
    %1503 = vmatmul.mubr.bf16.gmra.mrb[0].mxu0 %v1465
    %v1504 = vpop.f32.mrb[0].mxu0
    %v1505 = vadd.f32 0.0, %v1504
    %v1506 = vpop.f32.mrb[0].mxu0
    %v1507 = vpop.f32.mrb[0].mxu0
    %v1508 = vpop.f32.mrb[0].mxu0
    %1509 = vdwg.mxu0
    %1511 = vrot.lane.b32.xlu0 %v932, 120
    %v1512 = vpop.permute.xlu0 %1511
    %v1514 = vsel %vm938, %v1405, 0
    %v1517 = vsel %vm1417, %v1512, 0
    %1519 = vmatprep.subr.bf16.mxu0 0
    %1520 = vmatpush1.bf16.msra.mxu0 %v1517
    %1521 = vmatprep.subr.bf16.mxu0 0
    %1522 = vmatpush1.bf16.msra.mxu0 0
    %1523 = vmatprep.subr.bf16.mxu0 0
    %1524 = vmatpush1.bf16.msra.mxu0 0
    %1525 = vmatprep.subr.bf16.mxu0 0
    %1526 = vmatpush1.bf16.msra.mxu0 0
    %1527 = vmatprep.subr.bf16.mxu0 0
    %1528 = vmatpush1.bf16.msra.mxu0 0
    %1529 = vmatprep.subr.bf16.mxu0 0
    %1530 = vmatpush1.bf16.msra.mxu0 0
    %1531 = vmatprep.subr.bf16.mxu0 0
    %1532 = vmatpush1.bf16.msra.mxu0 0
    %1533 = vmatprep.subr.bf16.mxu0 0
    %1534 = vmatpush1.bf16.msra.mxu0 0
    %1535 = vmatprep.subr.bf16.mxu0 0
    %1536 = vmatpush1.bf16.msra.mxu0 0
    %1537 = vmatprep.subr.bf16.mxu0 0
    %1538 = vmatpush1.bf16.msra.mxu0 0
    %1539 = vmatprep.subr.bf16.mxu0 0
    %1540 = vmatpush1.bf16.msra.mxu0 0
    %1541 = vmatprep.subr.bf16.mxu0 0
    %1542 = vmatpush1.bf16.msra.mxu0 0
    %1543 = vmatprep.subr.bf16.mxu0 0
    %1544 = vmatpush1.bf16.msra.mxu0 0
    %1545 = vmatprep.subr.bf16.mxu0 0
    %1546 = vmatpush1.bf16.msra.mxu0 0
    %1547 = vmatprep.subr.bf16.mxu0 0
    %1548 = vmatpush1.bf16.msra.mxu0 0
    %1549 = vmatprep.subr.bf16.mxu0 0
    %1550 = vmatpush1.bf16.msra.mxu0 0
    %1551 = vmatprep.mubr.bf16.mxu0 0
    %1552 = vmatmul.mubr.bf16.gmra.mrb[0].mxu0 %v1514
    %v1553 = vpop.f32.mrb[0].mxu0
    %v1554 = vadd.f32 0.0, %v1553
    %v1555 = vpop.f32.mrb[0].mxu0
    %v1556 = vpop.f32.mrb[0].mxu0
    %v1557 = vpop.f32.mrb[0].mxu0
    %1558 = vdwg.mxu0
    %1560 = vrot.lane.b32.xlu0 %v933, 120
    %v1561 = vpop.permute.xlu0 %1560
    %v1563 = vsel %vm938, %v1406, 0
    %v1566 = vsel %vm1417, %v1561, 0
    %1568 = vmatprep.subr.bf16.mxu0 0
    %1569 = vmatpush1.bf16.msra.mxu0 %v1566
    %1570 = vmatprep.subr.bf16.mxu0 0
    %1571 = vmatpush1.bf16.msra.mxu0 0
    %1572 = vmatprep.subr.bf16.mxu0 0
    %1573 = vmatpush1.bf16.msra.mxu0 0
    %1574 = vmatprep.subr.bf16.mxu0 0
    %1575 = vmatpush1.bf16.msra.mxu0 0
    %1576 = vmatprep.subr.bf16.mxu0 0
    %1577 = vmatpush1.bf16.msra.mxu0 0
    %1578 = vmatprep.subr.bf16.mxu0 0
    %1579 = vmatpush1.bf16.msra.mxu0 0
    %1580 = vmatprep.subr.bf16.mxu0 0
    %1581 = vmatpush1.bf16.msra.mxu0 0
    %1582 = vmatprep.subr.bf16.mxu0 0
    %1583 = vmatpush1.bf16.msra.mxu0 0
    %1584 = vmatprep.subr.bf16.mxu0 0
    %1585 = vmatpush1.bf16.msra.mxu0 0
    %1586 = vmatprep.subr.bf16.mxu0 0
    %1587 = vmatpush1.bf16.msra.mxu0 0
    %1588 = vmatprep.subr.bf16.mxu0 0
    %1589 = vmatpush1.bf16.msra.mxu0 0
    %1590 = vmatprep.subr.bf16.mxu0 0
    %1591 = vmatpush1.bf16.msra.mxu0 0
    %1592 = vmatprep.subr.bf16.mxu0 0
    %1593 = vmatpush1.bf16.msra.mxu0 0
    %1594 = vmatprep.subr.bf16.mxu0 0
    %1595 = vmatpush1.bf16.msra.mxu0 0
    %1596 = vmatprep.subr.bf16.mxu0 0
    %1597 = vmatpush1.bf16.msra.mxu0 0
    %1598 = vmatprep.subr.bf16.mxu0 0
    %1599 = vmatpush1.bf16.msra.mxu0 0
    %1600 = vmatprep.mubr.bf16.mxu0 0
    %1601 = vmatmul.mubr.bf16.gmra.mrb[0].mxu0 %v1563
    %v1602 = vpop.f32.mrb[0].mxu0
    %v1603 = vadd.f32 0.0, %v1602
    %v1604 = vpop.f32.mrb[0].mxu0
    %v1605 = vpop.f32.mrb[0].mxu0
    %v1606 = vpop.f32.mrb[0].mxu0
    %1607 = vdwg.mxu0
    %1609 = vrot.lane.b32.xlu0 %v934, 120
    %v1610 = vpop.permute.xlu0 %1609
    %v1612 = vsel %vm938, %v1407, 0
    %v1615 = vsel %vm1417, %v1610, 0
    %1617 = vmatprep.subr.bf16.mxu0 0
    %1618 = vmatpush1.bf16.msra.mxu0 %v1615
    %1619 = vmatprep.subr.bf16.mxu0 0
    %1620 = vmatpush1.bf16.msra.mxu0 0
    %1621 = vmatprep.subr.bf16.mxu0 0
    %1622 = vmatpush1.bf16.msra.mxu0 0
    %1623 = vmatprep.subr.bf16.mxu0 0
    %1624 = vmatpush1.bf16.msra.mxu0 0
    %1625 = vmatprep.subr.bf16.mxu0 0
    %1626 = vmatpush1.bf16.msra.mxu0 0
    %1627 = vmatprep.subr.bf16.mxu0 0
    %1628 = vmatpush1.bf16.msra.mxu0 0
    %1629 = vmatprep.subr.bf16.mxu0 0
    %1630 = vmatpush1.bf16.msra.mxu0 0
    %1631 = vmatprep.subr.bf16.mxu0 0
    %1632 = vmatpush1.bf16.msra.mxu0 0
    %1633 = vmatprep.subr.bf16.mxu0 0
    %1634 = vmatpush1.bf16.msra.mxu0 0
    %1635 = vmatprep.subr.bf16.mxu0 0
    %1636 = vmatpush1.bf16.msra.mxu0 0
    %1637 = vmatprep.subr.bf16.mxu0 0
    %1638 = vmatpush1.bf16.msra.mxu0 0
    %1639 = vmatprep.subr.bf16.mxu0 0
    %1640 = vmatpush1.bf16.msra.mxu0 0
    %1641 = vmatprep.subr.bf16.mxu0 0
    %1642 = vmatpush1.bf16.msra.mxu0 0
    %1643 = vmatprep.subr.bf16.mxu0 0
    %1644 = vmatpush1.bf16.msra.mxu0 0
    %1645 = vmatprep.subr.bf16.mxu0 0
    %1646 = vmatpush1.bf16.msra.mxu0 0
    %1647 = vmatprep.subr.bf16.mxu0 0
    %1648 = vmatpush1.bf16.msra.mxu0 0
    %1649 = vmatprep.mubr.bf16.mxu0 0
    %1650 = vmatmul.mubr.bf16.gmra.mrb[0].mxu0 %v1612
    %v1651 = vpop.f32.mrb[0].mxu0
    %v1652 = vadd.f32 0.0, %v1651
    %v1653 = vpop.f32.mrb[0].mxu0
    %v1654 = vpop.f32.mrb[0].mxu0
    %v1655 = vpop.f32.mrb[0].mxu0
    %1656 = vdwg.mxu0
    %1658 = vrot.lane.b32.xlu0 %v935, 120
    %v1659 = vpop.permute.xlu0 %1658
    %v1661 = vsel %vm938, %v1408, 0
    %v1664 = vsel %vm1417, %v1659, 0
    %1666 = vmatprep.subr.bf16.mxu0 0
    %1667 = vmatpush1.bf16.msra.mxu0 %v1664
    %1668 = vmatprep.subr.bf16.mxu0 0
    %1669 = vmatpush1.bf16.msra.mxu0 0
    %1670 = vmatprep.subr.bf16.mxu0 0
    %1671 = vmatpush1.bf16.msra.mxu0 0
    %1672 = vmatprep.subr.bf16.mxu0 0
    %1673 = vmatpush1.bf16.msra.mxu0 0
    %1674 = vmatprep.subr.bf16.mxu0 0
    %1675 = vmatpush1.bf16.msra.mxu0 0
    %1676 = vmatprep.subr.bf16.mxu0 0
    %1677 = vmatpush1.bf16.msra.mxu0 0
    %1678 = vmatprep.subr.bf16.mxu0 0
    %1679 = vmatpush1.bf16.msra.mxu0 0
    %1680 = vmatprep.subr.bf16.mxu0 0
    %1681 = vmatpush1.bf16.msra.mxu0 0
    %1682 = vmatprep.subr.bf16.mxu0 0
    %1683 = vmatpush1.bf16.msra.mxu0 0
    %1684 = vmatprep.subr.bf16.mxu0 0
    %1685 = vmatpush1.bf16.msra.mxu0 0
    %1686 = vmatprep.subr.bf16.mxu0 0
    %1687 = vmatpush1.bf16.msra.mxu0 0
    %1688 = vmatprep.subr.bf16.mxu0 0
    %1689 = vmatpush1.bf16.msra.mxu0 0
    %1690 = vmatprep.subr.bf16.mxu0 0
    %1691 = vmatpush1.bf16.msra.mxu0 0
    %1692 = vmatprep.subr.bf16.mxu0 0
    %1693 = vmatpush1.bf16.msra.mxu0 0
    %1694 = vmatprep.subr.bf16.mxu0 0
    %1695 = vmatpush1.bf16.msra.mxu0 0
    %1696 = vmatprep.subr.bf16.mxu0 0
    %1697 = vmatpush1.bf16.msra.mxu0 0
    %1698 = vmatprep.mubr.bf16.mxu0 0
    %1699 = vmatmul.mubr.bf16.gmra.mrb[0].mxu0 %v1661
    %v1700 = vpop.f32.mrb[0].mxu0
    %v1701 = vadd.f32 0.0, %v1700
    %v1702 = vpop.f32.mrb[0].mxu0
    %v1703 = vpop.f32.mrb[0].mxu0
    %v1704 = vpop.f32.mrb[0].mxu0
    %1705 = vdwg.mxu0
    %1707 = vrot.lane.b32.xlu0 %v936, 120
    %v1708 = vpop.permute.xlu0 %1707
    %v1710 = vsel %vm938, %v1409, 0
    %v1713 = vsel %vm1417, %v1708, 0
    %1715 = vmatprep.subr.bf16.mxu0 0
    %1716 = vmatpush1.bf16.msra.mxu0 %v1713
    %1717 = vmatprep.subr.bf16.mxu0 0
    %1718 = vmatpush1.bf16.msra.mxu0 0
    %1719 = vmatprep.subr.bf16.mxu0 0
    %1720 = vmatpush1.bf16.msra.mxu0 0
    %1721 = vmatprep.subr.bf16.mxu0 0
    %1722 = vmatpush1.bf16.msra.mxu0 0
    %1723 = vmatprep.subr.bf16.mxu0 0
    %1724 = vmatpush1.bf16.msra.mxu0 0
    %1725 = vmatprep.subr.bf16.mxu0 0
    %1726 = vmatpush1.bf16.msra.mxu0 0
    %1727 = vmatprep.subr.bf16.mxu0 0
    %1728 = vmatpush1.bf16.msra.mxu0 0
    %1729 = vmatprep.subr.bf16.mxu0 0
    %1730 = vmatpush1.bf16.msra.mxu0 0
    %1731 = vmatprep.subr.bf16.mxu0 0
    %1732 = vmatpush1.bf16.msra.mxu0 0
    %1733 = vmatprep.subr.bf16.mxu0 0
    %1734 = vmatpush1.bf16.msra.mxu0 0
    %1735 = vmatprep.subr.bf16.mxu0 0
    %1736 = vmatpush1.bf16.msra.mxu0 0
    %1737 = vmatprep.subr.bf16.mxu0 0
    %1738 = vmatpush1.bf16.msra.mxu0 0
    %1739 = vmatprep.subr.bf16.mxu0 0
    %1740 = vmatpush1.bf16.msra.mxu0 0
    %1741 = vmatprep.subr.bf16.mxu0 0
    %1742 = vmatpush1.bf16.msra.mxu0 0
    %1743 = vmatprep.subr.bf16.mxu0 0
    %1744 = vmatpush1.bf16.msra.mxu0 0
    %1745 = vmatprep.subr.bf16.mxu0 0
    %1746 = vmatpush1.bf16.msra.mxu0 0
    %1747 = vmatprep.mubr.bf16.mxu0 0
    %1748 = vmatmul.mubr.bf16.gmra.mrb[0].mxu0 %v1710
    %v1749 = vpop.f32.mrb[0].mxu0
    %v1750 = vadd.f32 0.0, %v1749
    %v1751 = vpop.f32.mrb[0].mxu0
    %v1752 = vpop.f32.mrb[0].mxu0
    %v1753 = vpop.f32.mrb[0].mxu0
    %1754 = vdwg.mxu0
    %1756 = vrot.lane.b32.xlu0 %v937, 120
    %v1757 = vpop.permute.xlu0 %1756
    %v1759 = vsel %vm938, %v1410, 0
    %v1762 = vsel %vm1417, %v1757, 0
    %1764 = vmatprep.subr.bf16.mxu0 0
    %1765 = vmatpush1.bf16.msra.mxu0 %v1762
    %1766 = vmatprep.subr.bf16.mxu0 0
    %1767 = vmatpush1.bf16.msra.mxu0 0
    %1768 = vmatprep.subr.bf16.mxu0 0
    %1769 = vmatpush1.bf16.msra.mxu0 0
    %1770 = vmatprep.subr.bf16.mxu0 0
    %1771 = vmatpush1.bf16.msra.mxu0 0
    %1772 = vmatprep.subr.bf16.mxu0 0
    %1773 = vmatpush1.bf16.msra.mxu0 0
    %1774 = vmatprep.subr.bf16.mxu0 0
    %1775 = vmatpush1.bf16.msra.mxu0 0
    %1776 = vmatprep.subr.bf16.mxu0 0
    %1777 = vmatpush1.bf16.msra.mxu0 0
    %1778 = vmatprep.subr.bf16.mxu0 0
    %1779 = vmatpush1.bf16.msra.mxu0 0
    %1780 = vmatprep.subr.bf16.mxu0 0
    %1781 = vmatpush1.bf16.msra.mxu0 0
    %1782 = vmatprep.subr.bf16.mxu0 0
    %1783 = vmatpush1.bf16.msra.mxu0 0
    %1784 = vmatprep.subr.bf16.mxu0 0
    %1785 = vmatpush1.bf16.msra.mxu0 0
    %1786 = vmatprep.subr.bf16.mxu0 0
    %1787 = vmatpush1.bf16.msra.mxu0 0
    %1788 = vmatprep.subr.bf16.mxu0 0
    %1789 = vmatpush1.bf16.msra.mxu0 0
    %1790 = vmatprep.subr.bf16.mxu0 0
    %1791 = vmatpush1.bf16.msra.mxu0 0
    %1792 = vmatprep.subr.bf16.mxu0 0
    %1793 = vmatpush1.bf16.msra.mxu0 0
    %1794 = vmatprep.subr.bf16.mxu0 0
    %1795 = vmatpush1.bf16.msra.mxu0 0
    %1796 = vmatprep.mubr.bf16.mxu0 0
    %1797 = vmatmul.mubr.bf16.gmra.mrb[0].mxu0 %v1759
    %v1798 = vpop.f32.mrb[0].mxu0
    %v1799 = vadd.f32 0.0, %v1798
    %v1800 = vpop.f32.mrb[0].mxu0
    %v1801 = vpop.f32.mrb[0].mxu0
    %v1802 = vpop.f32.mrb[0].mxu0
    %1803 = vdwg.mxu0
    %v1804 = vpack.c.bf16 %v1456, %v1456
    %v1805 = vpack.c.bf16 %v1505, %v1505
    %v1806 = vpack.c.bf16 %v1554, %v1554
    %v1807 = vpack.c.bf16 %v1603, %v1603
    %v1808 = vpack.c.bf16 %v1652, %v1652
    %v1809 = vpack.c.bf16 %v1701, %v1701
    %v1810 = vpack.c.bf16 %v1750, %v1750
    %v1811 = vpack.c.bf16 %v1799, %v1799
    %v1813 = vsel %vm938, %v1804, 0
    %v1816 = vsel %vm1417, %v121, 0
    %1818 = vmatprep.subr.bf16.mxu0 0
    %1819 = vmatpush1.bf16.msra.mxu0 %v1816
    %1820 = vmatprep.subr.bf16.mxu0 0
    %1821 = vmatpush1.bf16.msra.mxu0 0
    %1822 = vmatprep.subr.bf16.mxu0 0
    %1823 = vmatpush1.bf16.msra.mxu0 0
    %1824 = vmatprep.subr.bf16.mxu0 0
    %1825 = vmatpush1.bf16.msra.mxu0 0
    %1826 = vmatprep.subr.bf16.mxu0 0
    %1827 = vmatpush1.bf16.msra.mxu0 0
    %1828 = vmatprep.subr.bf16.mxu0 0
    %1829 = vmatpush1.bf16.msra.mxu0 0
    %1830 = vmatprep.subr.bf16.mxu0 0
    %1831 = vmatpush1.bf16.msra.mxu0 0
    %1832 = vmatprep.subr.bf16.mxu0 0
    %1833 = vmatpush1.bf16.msra.mxu0 0
    %1834 = vmatprep.subr.bf16.mxu0 0
    %1835 = vmatpush1.bf16.msra.mxu0 0
    %1836 = vmatprep.subr.bf16.mxu0 0
    %1837 = vmatpush1.bf16.msra.mxu0 0
    %1838 = vmatprep.subr.bf16.mxu0 0
    %1839 = vmatpush1.bf16.msra.mxu0 0
    %1840 = vmatprep.subr.bf16.mxu0 0
    %1841 = vmatpush1.bf16.msra.mxu0 0
    %1842 = vmatprep.subr.bf16.mxu0 0
    %1843 = vmatpush1.bf16.msra.mxu0 0
    %1844 = vmatprep.subr.bf16.mxu0 0
    %1845 = vmatpush1.bf16.msra.mxu0 0
    %1846 = vmatprep.subr.bf16.mxu0 0
    %1847 = vmatpush1.bf16.msra.mxu0 0
    %1848 = vmatprep.subr.bf16.mxu0 0
    %1849 = vmatpush1.bf16.msra.mxu0 0
    %1850 = vmatprep.mubr.bf16.mxu0 0
    %1851 = vmatmul.mubr.bf16.gmra.mrb[0].mxu0 %v1813
    %v1852 = vpop.f32.mrb[0].mxu0
    %v1853 = vadd.f32 0.0, %v1852
    %v1854 = vpop.f32.mrb[0].mxu0
    %v1855 = vpop.f32.mrb[0].mxu0
    %v1856 = vpop.f32.mrb[0].mxu0
    %1857 = vdwg.mxu0
    %v1859 = vsel %vm938, %v1805, 0
    %v1862 = vsel %vm1417, %v122, 0
    %1864 = vmatprep.subr.bf16.mxu0 0
    %1865 = vmatpush1.bf16.msra.mxu0 %v1862
    %1866 = vmatprep.subr.bf16.mxu0 0
    %1867 = vmatpush1.bf16.msra.mxu0 0
    %1868 = vmatprep.subr.bf16.mxu0 0
    %1869 = vmatpush1.bf16.msra.mxu0 0
    %1870 = vmatprep.subr.bf16.mxu0 0
    %1871 = vmatpush1.bf16.msra.mxu0 0
    %1872 = vmatprep.subr.bf16.mxu0 0
    %1873 = vmatpush1.bf16.msra.mxu0 0
    %1874 = vmatprep.subr.bf16.mxu0 0
    %1875 = vmatpush1.bf16.msra.mxu0 0
    %1876 = vmatprep.subr.bf16.mxu0 0
    %1877 = vmatpush1.bf16.msra.mxu0 0
    %1878 = vmatprep.subr.bf16.mxu0 0
    %1879 = vmatpush1.bf16.msra.mxu0 0
    %1880 = vmatprep.subr.bf16.mxu0 0
    %1881 = vmatpush1.bf16.msra.mxu0 0
    %1882 = vmatprep.subr.bf16.mxu0 0
    %1883 = vmatpush1.bf16.msra.mxu0 0
    %1884 = vmatprep.subr.bf16.mxu0 0
    %1885 = vmatpush1.bf16.msra.mxu0 0
    %1886 = vmatprep.subr.bf16.mxu0 0
    %1887 = vmatpush1.bf16.msra.mxu0 0
    %1888 = vmatprep.subr.bf16.mxu0 0
    %1889 = vmatpush1.bf16.msra.mxu0 0
    %1890 = vmatprep.subr.bf16.mxu0 0
    %1891 = vmatpush1.bf16.msra.mxu0 0
    %1892 = vmatprep.subr.bf16.mxu0 0
    %1893 = vmatpush1.bf16.msra.mxu0 0
    %1894 = vmatprep.subr.bf16.mxu0 0
    %1895 = vmatpush1.bf16.msra.mxu0 0
    %1896 = vmatprep.mubr.bf16.mxu0 0
    %1897 = vmatmul.mubr.bf16.gmra.mrb[0].mxu0 %v1859
    %v1898 = vpop.f32.mrb[0].mxu0
    %v1899 = vadd.f32 0.0, %v1898
    %v1900 = vpop.f32.mrb[0].mxu0
    %v1901 = vpop.f32.mrb[0].mxu0
    %v1902 = vpop.f32.mrb[0].mxu0
    %1903 = vdwg.mxu0
    %v1905 = vsel %vm938, %v1806, 0
    %v1908 = vsel %vm1417, %v123, 0
    %1910 = vmatprep.subr.bf16.mxu0 0
    %1911 = vmatpush1.bf16.msra.mxu0 %v1908
    %1912 = vmatprep.subr.bf16.mxu0 0
    %1913 = vmatpush1.bf16.msra.mxu0 0
    %1914 = vmatprep.subr.bf16.mxu0 0
    %1915 = vmatpush1.bf16.msra.mxu0 0
    %1916 = vmatprep.subr.bf16.mxu0 0
    %1917 = vmatpush1.bf16.msra.mxu0 0
    %1918 = vmatprep.subr.bf16.mxu0 0
    %1919 = vmatpush1.bf16.msra.mxu0 0
    %1920 = vmatprep.subr.bf16.mxu0 0
    %1921 = vmatpush1.bf16.msra.mxu0 0
    %1922 = vmatprep.subr.bf16.mxu0 0
    %1923 = vmatpush1.bf16.msra.mxu0 0
    %1924 = vmatprep.subr.bf16.mxu0 0
    %1925 = vmatpush1.bf16.msra.mxu0 0
    %1926 = vmatprep.subr.bf16.mxu0 0
    %1927 = vmatpush1.bf16.msra.mxu0 0
    %1928 = vmatprep.subr.bf16.mxu0 0
    %1929 = vmatpush1.bf16.msra.mxu0 0
    %1930 = vmatprep.subr.bf16.mxu0 0
    %1931 = vmatpush1.bf16.msra.mxu0 0
    %1932 = vmatprep.subr.bf16.mxu0 0
    %1933 = vmatpush1.bf16.msra.mxu0 0
    %1934 = vmatprep.subr.bf16.mxu0 0
    %1935 = vmatpush1.bf16.msra.mxu0 0
    %1936 = vmatprep.subr.bf16.mxu0 0
    %1937 = vmatpush1.bf16.msra.mxu0 0
    %1938 = vmatprep.subr.bf16.mxu0 0
    %1939 = vmatpush1.bf16.msra.mxu0 0
    %1940 = vmatprep.subr.bf16.mxu0 0
    %1941 = vmatpush1.bf16.msra.mxu0 0
    %1942 = vmatprep.mubr.bf16.mxu0 0
    %1943 = vmatmul.mubr.bf16.gmra.mrb[0].mxu0 %v1905
    %v1944 = vpop.f32.mrb[0].mxu0
    %v1945 = vadd.f32 0.0, %v1944
    %v1946 = vpop.f32.mrb[0].mxu0
    %v1947 = vpop.f32.mrb[0].mxu0
    %v1948 = vpop.f32.mrb[0].mxu0
    %1949 = vdwg.mxu0
    %v1951 = vsel %vm938, %v1807, 0
    %v1954 = vsel %vm1417, %v124, 0
    %1956 = vmatprep.subr.bf16.mxu0 0
    %1957 = vmatpush1.bf16.msra.mxu0 %v1954
    %1958 = vmatprep.subr.bf16.mxu0 0
    %1959 = vmatpush1.bf16.msra.mxu0 0
    %1960 = vmatprep.subr.bf16.mxu0 0
    %1961 = vmatpush1.bf16.msra.mxu0 0
    %1962 = vmatprep.subr.bf16.mxu0 0
    %1963 = vmatpush1.bf16.msra.mxu0 0
    %1964 = vmatprep.subr.bf16.mxu0 0
    %1965 = vmatpush1.bf16.msra.mxu0 0
    %1966 = vmatprep.subr.bf16.mxu0 0
    %1967 = vmatpush1.bf16.msra.mxu0 0
    %1968 = vmatprep.subr.bf16.mxu0 0
    %1969 = vmatpush1.bf16.msra.mxu0 0
    %1970 = vmatprep.subr.bf16.mxu0 0
    %1971 = vmatpush1.bf16.msra.mxu0 0
    %1972 = vmatprep.subr.bf16.mxu0 0
    %1973 = vmatpush1.bf16.msra.mxu0 0
    %1974 = vmatprep.subr.bf16.mxu0 0
    %1975 = vmatpush1.bf16.msra.mxu0 0
    %1976 = vmatprep.subr.bf16.mxu0 0
    %1977 = vmatpush1.bf16.msra.mxu0 0
    %1978 = vmatprep.subr.bf16.mxu0 0
    %1979 = vmatpush1.bf16.msra.mxu0 0
    %1980 = vmatprep.subr.bf16.mxu0 0
    %1981 = vmatpush1.bf16.msra.mxu0 0
    %1982 = vmatprep.subr.bf16.mxu0 0
    %1983 = vmatpush1.bf16.msra.mxu0 0
    %1984 = vmatprep.subr.bf16.mxu0 0
    %1985 = vmatpush1.bf16.msra.mxu0 0
    %1986 = vmatprep.subr.bf16.mxu0 0
    %1987 = vmatpush1.bf16.msra.mxu0 0
    %1988 = vmatprep.mubr.bf16.mxu0 0
    %1989 = vmatmul.mubr.bf16.gmra.mrb[0].mxu0 %v1951
    %v1990 = vpop.f32.mrb[0].mxu0
    %v1991 = vadd.f32 0.0, %v1990
    %v1992 = vpop.f32.mrb[0].mxu0
    %v1993 = vpop.f32.mrb[0].mxu0
    %v1994 = vpop.f32.mrb[0].mxu0
    %1995 = vdwg.mxu0
    %v1997 = vsel %vm938, %v1808, 0
    %1999 = vmatprep.subr.bf16.mxu0 0
    %2000 = vmatpush1.bf16.msra.mxu0 %v1816
    %2001 = vmatprep.subr.bf16.mxu0 0
    %2002 = vmatpush1.bf16.msra.mxu0 0
    %2003 = vmatprep.subr.bf16.mxu0 0
    %2004 = vmatpush1.bf16.msra.mxu0 0
    %2005 = vmatprep.subr.bf16.mxu0 0
    %2006 = vmatpush1.bf16.msra.mxu0 0
    %2007 = vmatprep.subr.bf16.mxu0 0
    %2008 = vmatpush1.bf16.msra.mxu0 0
    %2009 = vmatprep.subr.bf16.mxu0 0
    %2010 = vmatpush1.bf16.msra.mxu0 0
    %2011 = vmatprep.subr.bf16.mxu0 0
    %2012 = vmatpush1.bf16.msra.mxu0 0
    %2013 = vmatprep.subr.bf16.mxu0 0
    %2014 = vmatpush1.bf16.msra.mxu0 0
    %2015 = vmatprep.subr.bf16.mxu0 0
    %2016 = vmatpush1.bf16.msra.mxu0 0
    %2017 = vmatprep.subr.bf16.mxu0 0
    %2018 = vmatpush1.bf16.msra.mxu0 0
    %2019 = vmatprep.subr.bf16.mxu0 0
    %2020 = vmatpush1.bf16.msra.mxu0 0
    %2021 = vmatprep.subr.bf16.mxu0 0
    %2022 = vmatpush1.bf16.msra.mxu0 0
    %2023 = vmatprep.subr.bf16.mxu0 0
    %2024 = vmatpush1.bf16.msra.mxu0 0
    %2025 = vmatprep.subr.bf16.mxu0 0
    %2026 = vmatpush1.bf16.msra.mxu0 0
    %2027 = vmatprep.subr.bf16.mxu0 0
    %2028 = vmatpush1.bf16.msra.mxu0 0
    %2029 = vmatprep.subr.bf16.mxu0 0
    %2030 = vmatpush1.bf16.msra.mxu0 0
    %2031 = vmatprep.mubr.bf16.mxu0 0
    %2032 = vmatmul.mubr.bf16.gmra.mrb[0].mxu0 %v1997
    %v2033 = vpop.f32.mrb[0].mxu0
    %v2034 = vadd.f32 0.0, %v2033
    %v2035 = vpop.f32.mrb[0].mxu0
    %v2036 = vpop.f32.mrb[0].mxu0
    %v2037 = vpop.f32.mrb[0].mxu0
    %2038 = vdwg.mxu0
    %v2040 = vsel %vm938, %v1809, 0
    %2042 = vmatprep.subr.bf16.mxu0 0
    %2043 = vmatpush1.bf16.msra.mxu0 %v1862
    %2044 = vmatprep.subr.bf16.mxu0 0
    %2045 = vmatpush1.bf16.msra.mxu0 0
    %2046 = vmatprep.subr.bf16.mxu0 0
    %2047 = vmatpush1.bf16.msra.mxu0 0
    %2048 = vmatprep.subr.bf16.mxu0 0
    %2049 = vmatpush1.bf16.msra.mxu0 0
    %2050 = vmatprep.subr.bf16.mxu0 0
    %2051 = vmatpush1.bf16.msra.mxu0 0
    %2052 = vmatprep.subr.bf16.mxu0 0
    %2053 = vmatpush1.bf16.msra.mxu0 0
    %2054 = vmatprep.subr.bf16.mxu0 0
    %2055 = vmatpush1.bf16.msra.mxu0 0
    %2056 = vmatprep.subr.bf16.mxu0 0
    %2057 = vmatpush1.bf16.msra.mxu0 0
    %2058 = vmatprep.subr.bf16.mxu0 0
    %2059 = vmatpush1.bf16.msra.mxu0 0
    %2060 = vmatprep.subr.bf16.mxu0 0
    %2061 = vmatpush1.bf16.msra.mxu0 0
    %2062 = vmatprep.subr.bf16.mxu0 0
    %2063 = vmatpush1.bf16.msra.mxu0 0
    %2064 = vmatprep.subr.bf16.mxu0 0
    %2065 = vmatpush1.bf16.msra.mxu0 0
    %2066 = vmatprep.subr.bf16.mxu0 0
    %2067 = vmatpush1.bf16.msra.mxu0 0
    %2068 = vmatprep.subr.bf16.mxu0 0
    %2069 = vmatpush1.bf16.msra.mxu0 0
    %2070 = vmatprep.subr.bf16.mxu0 0
    %2071 = vmatpush1.bf16.msra.mxu0 0
    %2072 = vmatprep.subr.bf16.mxu0 0
    %2073 = vmatpush1.bf16.msra.mxu0 0
    %2074 = vmatprep.mubr.bf16.mxu0 0
    %2075 = vmatmul.mubr.bf16.gmra.mrb[0].mxu0 %v2040
    %v2076 = vpop.f32.mrb[0].mxu0
    %v2077 = vadd.f32 0.0, %v2076
    %v2078 = vpop.f32.mrb[0].mxu0
    %v2079 = vpop.f32.mrb[0].mxu0
    %v2080 = vpop.f32.mrb[0].mxu0
    %2081 = vdwg.mxu0
    %v2083 = vsel %vm938, %v1810, 0
    %2085 = vmatprep.subr.bf16.mxu0 0
    %2086 = vmatpush1.bf16.msra.mxu0 %v1908
    %2087 = vmatprep.subr.bf16.mxu0 0
    %2088 = vmatpush1.bf16.msra.mxu0 0
    %2089 = vmatprep.subr.bf16.mxu0 0
    %2090 = vmatpush1.bf16.msra.mxu0 0
    %2091 = vmatprep.subr.bf16.mxu0 0
    %2092 = vmatpush1.bf16.msra.mxu0 0
    %2093 = vmatprep.subr.bf16.mxu0 0
    %2094 = vmatpush1.bf16.msra.mxu0 0
    %2095 = vmatprep.subr.bf16.mxu0 0
    %2096 = vmatpush1.bf16.msra.mxu0 0
    %2097 = vmatprep.subr.bf16.mxu0 0
    %2098 = vmatpush1.bf16.msra.mxu0 0
    %2099 = vmatprep.subr.bf16.mxu0 0
    %2100 = vmatpush1.bf16.msra.mxu0 0
    %2101 = vmatprep.subr.bf16.mxu0 0
    %2102 = vmatpush1.bf16.msra.mxu0 0
    %2103 = vmatprep.subr.bf16.mxu0 0
    %2104 = vmatpush1.bf16.msra.mxu0 0
    %2105 = vmatprep.subr.bf16.mxu0 0
    %2106 = vmatpush1.bf16.msra.mxu0 0
    %2107 = vmatprep.subr.bf16.mxu0 0
    %2108 = vmatpush1.bf16.msra.mxu0 0
    %2109 = vmatprep.subr.bf16.mxu0 0
    %2110 = vmatpush1.bf16.msra.mxu0 0
    %2111 = vmatprep.subr.bf16.mxu0 0
    %2112 = vmatpush1.bf16.msra.mxu0 0
    %2113 = vmatprep.subr.bf16.mxu0 0
    %2114 = vmatpush1.bf16.msra.mxu0 0
    %2115 = vmatprep.subr.bf16.mxu0 0
    %2116 = vmatpush1.bf16.msra.mxu0 0
    %2117 = vmatprep.mubr.bf16.mxu0 0
    %2118 = vmatmul.mubr.bf16.gmra.mrb[0].mxu0 %v2083
    %v2119 = vpop.f32.mrb[0].mxu0
    %v2120 = vadd.f32 0.0, %v2119
    %v2121 = vpop.f32.mrb[0].mxu0
    %v2122 = vpop.f32.mrb[0].mxu0
    %v2123 = vpop.f32.mrb[0].mxu0
    %2124 = vdwg.mxu0
    %v2126 = vsel %vm938, %v1811, 0
    %2128 = vmatprep.subr.bf16.mxu0 0
    %2129 = vmatpush1.bf16.msra.mxu0 %v1954
    %2130 = vmatprep.subr.bf16.mxu0 0
    %2131 = vmatpush1.bf16.msra.mxu0 0
    %2132 = vmatprep.subr.bf16.mxu0 0
    %2133 = vmatpush1.bf16.msra.mxu0 0
    %2134 = vmatprep.subr.bf16.mxu0 0
    %2135 = vmatpush1.bf16.msra.mxu0 0
    %2136 = vmatprep.subr.bf16.mxu0 0
    %2137 = vmatpush1.bf16.msra.mxu0 0
    %2138 = vmatprep.subr.bf16.mxu0 0
    %2139 = vmatpush1.bf16.msra.mxu0 0
    %2140 = vmatprep.subr.bf16.mxu0 0
    %2141 = vmatpush1.bf16.msra.mxu0 0
    %2142 = vmatprep.subr.bf16.mxu0 0
    %2143 = vmatpush1.bf16.msra.mxu0 0
    %2144 = vmatprep.subr.bf16.mxu0 0
    %2145 = vmatpush1.bf16.msra.mxu0 0
    %2146 = vmatprep.subr.bf16.mxu0 0
    %2147 = vmatpush1.bf16.msra.mxu0 0
    %2148 = vmatprep.subr.bf16.mxu0 0
    %2149 = vmatpush1.bf16.msra.mxu0 0
    %2150 = vmatprep.subr.bf16.mxu0 0
    %2151 = vmatpush1.bf16.msra.mxu0 0
    %2152 = vmatprep.subr.bf16.mxu0 0
    %2153 = vmatpush1.bf16.msra.mxu0 0
    %2154 = vmatprep.subr.bf16.mxu0 0
    %2155 = vmatpush1.bf16.msra.mxu0 0
    %2156 = vmatprep.subr.bf16.mxu0 0
    %2157 = vmatpush1.bf16.msra.mxu0 0
    %2158 = vmatprep.subr.bf16.mxu0 0
    %2159 = vmatpush1.bf16.msra.mxu0 0
    %2160 = vmatprep.mubr.bf16.mxu0 0
    %2161 = vmatmul.mubr.bf16.gmra.mrb[0].mxu0 %v2126
    %v2162 = vpop.f32.mrb[0].mxu0
    %v2163 = vadd.f32 0.0, %v2162
    %v2164 = vpop.f32.mrb[0].mxu0
    %v2165 = vpop.f32.mrb[0].mxu0
    %v2166 = vpop.f32.mrb[0].mxu0
    %2167 = vdwg.mxu0
    %v2168 = vsel %vm161, %v1853, 0.0
    %v2169 = vsel %vm161, %v1899, 0.0
    %v2170 = vadd.f32 %v2168, %v2169
    %v2171 = vsel %vm161, %v1945, 0.0
    %v2172 = vadd.f32 %v2170, %v2171
    %v2173 = vsel %vm161, %v1991, 0.0
    %v2174 = vadd.f32 %v2172, %v2173
    %v2175 = vsel %vm161, %v2034, 0.0
    %v2176 = vsel %vm161, %v2077, 0.0
    %v2177 = vadd.f32 %v2175, %v2176
    %v2178 = vsel %vm161, %v2120, 0.0
    %v2179 = vadd.f32 %v2177, %v2178
    %v2180 = vsel %vm161, %v2163, 0.0
    %v2181 = vadd.f32 %v2179, %v2180
    %v2182 = vld [vmem:[%s7] sm:$0x1]
    %v2184 = vlaneseq
    %v2185 = vshrl.u32 %v2184, 7
    %v2186 = vsub.s32 0, %v2185
    %v2187 = vrot.slane %v2182, %v2186
    %v2189 = vadd.f32 %v2174, %v2187
    %v2190 = vadd.f32 %v2181, %v2187
    %v2191 = vld [vmem:[%s8] sm:$0xf]
    %v2192 = vld [vmem:[%s8 + $0x4] sm:$0xf]
    %v2193 = vld [vmem:[%s8 + $0x8] sm:$0xf]
    %v2194 = vld [vmem:[%s8 + $0xc] sm:$0xf]
    %v2195 = vld [vmem:[%s8 + $0x10] sm:$0xf]
    %v2196 = vld [vmem:[%s8 + $0x14] sm:$0xf]
    %v2197 = vld [vmem:[%s8 + $0x18] sm:$0xf]
    %v2198 = vld [vmem:[%s8 + $0x1c] sm:$0xf]
    %v2199 = vld [vmem:[%s8 + $0x20] sm:$0xf]
    %v2200 = vld [vmem:[%s8 + $0x24] sm:$0xf]
    %v2201 = vld [vmem:[%s8 + $0x28] sm:$0xf]
    %v2202 = vld [vmem:[%s8 + $0x2c] sm:$0xf]
    %v2203 = vld [vmem:[%s8 + $0x30] sm:$0xf]
    %v2204 = vld [vmem:[%s8 + $0x34] sm:$0xf]
    %v2205 = vld [vmem:[%s8 + $0x38] sm:$0xf]
    %v2206 = vld [vmem:[%s8 + $0x3c] sm:$0xf]
    %v2207 = vld [vmem:[%s10] sm:$0xf]
    %v2208 = vld [vmem:[%s10 + $0x4] sm:$0xf]
    %v2209 = vld [vmem:[%s10 + $0x8] sm:$0xf]
    %v2210 = vld [vmem:[%s10 + $0xc] sm:$0xf]
    %v2211 = vld [vmem:[%s10 + $0x10] sm:$0xf]
    %v2212 = vld [vmem:[%s10 + $0x14] sm:$0xf]
    %v2213 = vld [vmem:[%s10 + $0x18] sm:$0xf]
    %v2214 = vld [vmem:[%s10 + $0x1c] sm:$0xf]
    %v2215 = vld [vmem:[%s10 + $0x20] sm:$0xf]
    %v2216 = vld [vmem:[%s10 + $0x24] sm:$0xf]
    %v2217 = vld [vmem:[%s10 + $0x28] sm:$0xf]
    %v2218 = vld [vmem:[%s10 + $0x2c] sm:$0xf]
    %v2219 = vld [vmem:[%s10 + $0x30] sm:$0xf]
    %v2220 = vld [vmem:[%s10 + $0x34] sm:$0xf]
    %v2221 = vld [vmem:[%s10 + $0x38] sm:$0xf]
    %v2222 = vld [vmem:[%s10 + $0x3c] sm:$0xf]
    %v2223 = vld [vmem:[%s9] sm:$0x1]
    %v2224 = vld [vmem:[%s9 + $0x1] sm:$0x1]
    %v2225 = vld [vmem:[%s9 + $0x2] sm:$0x1]
    %v2226 = vld [vmem:[%s9 + $0x3] sm:$0x1]
    %v2227 = vld [vmem:[%s11] sm:$0x1]
    %v2228 = vld [vmem:[%s11 + $0x1] sm:$0x1]
    %v2229 = vld [vmem:[%s11 + $0x2] sm:$0x1]
    %v2230 = vld [vmem:[%s11 + $0x3] sm:$0x1]
    %v2231 = vld [vmem:[%s12] sm:$0xf]
    %v2232 = vld [vmem:[%s12 + $0x4] sm:$0xf]
    %v2233 = vld [vmem:[%s12 + $0x8] sm:$0xf]
    %v2234 = vld [vmem:[%s12 + $0xc] sm:$0xf]
    %v2239 = vlaneseq
    %v2240 = vshrl.u32 %v2239, 7
    %v2241 = vsub.s32 0, %v2240
    %v2242 = vrot.slane %v2223, %v2241
    %v2243 = vlaneseq
    %v2244 = vshrl.u32 %v2243, 7
    %v2245 = vsub.s32 0, %v2244
    %v2246 = vrot.slane %v2224, %v2245
    %v2247 = vlaneseq
    %v2248 = vshrl.u32 %v2247, 7
    %v2249 = vsub.s32 0, %v2248
    %v2250 = vrot.slane %v2225, %v2249
    %v2251 = vlaneseq
    %v2252 = vshrl.u32 %v2251, 7
    %v2253 = vsub.s32 0, %v2252
    %v2254 = vrot.slane %v2226, %v2253
    %v2263 = vunpack.c.l.b16 %v2191
    %v2264 = vunpack.c.l.b16 %v2192
    %v2265 = vunpack.c.l.b16 %v2193
    %v2266 = vunpack.c.l.b16 %v2194
    %v2267 = vpack.c.b16 %v2264, %v2263
    %v2268 = vpack.c.b16 %v2266, %v2265
    %2271 = vmatprep.subr.bf16.mxu0 0
    %2272 = vmatpush1.bf16.msra.mxu0 %v2267
    %2273 = vmatprep.subr.bf16.mxu0 0
    %2274 = vmatpush1.bf16.msra.mxu0 %v2268
    %2275 = vmatprep.subr.bf16.mxu0 0
    %2276 = vmatpush1.bf16.msra.mxu0 0
    %2277 = vmatprep.subr.bf16.mxu0 0
    %2278 = vmatpush1.bf16.msra.mxu0 0
    %2279 = vmatprep.subr.bf16.mxu0 0
    %2280 = vmatpush1.bf16.msra.mxu0 0
    %2281 = vmatprep.subr.bf16.mxu0 0
    %2282 = vmatpush1.bf16.msra.mxu0 0
    %2283 = vmatprep.subr.bf16.mxu0 0
    %2284 = vmatpush1.bf16.msra.mxu0 0
    %2285 = vmatprep.subr.bf16.mxu0 0
    %2286 = vmatpush1.bf16.msra.mxu0 0
    %2287 = vmatprep.subr.bf16.mxu0 0
    %2288 = vmatpush1.bf16.msra.mxu0 0
    %2289 = vmatprep.subr.bf16.mxu0 0
    %2290 = vmatpush1.bf16.msra.mxu0 0
    %2291 = vmatprep.subr.bf16.mxu0 0
    %2292 = vmatpush1.bf16.msra.mxu0 0
    %2293 = vmatprep.subr.bf16.mxu0 0
    %2294 = vmatpush1.bf16.msra.mxu0 0
    %2295 = vmatprep.subr.bf16.mxu0 0
    %2296 = vmatpush1.bf16.msra.mxu0 0
    %2297 = vmatprep.subr.bf16.mxu0 0
    %2298 = vmatpush1.bf16.msra.mxu0 0
    %2299 = vmatprep.subr.bf16.mxu0 0
    %2300 = vmatpush1.bf16.msra.mxu0 0
    %2301 = vmatprep.subr.bf16.mxu0 0
    %2302 = vmatpush1.bf16.msra.mxu0 0
    %2303 = vmatprep.mubr.bf16.mxu0 0
    %2304 = vmatmul.mubr.bf16.gmra.mrb[0].mxu0 %v163
    %v2305 = vpop.f32.mrb[0].mxu0
    %v2306 = vadd.f32 %v2242, %v2305
    %v2307 = vpop.f32.mrb[0].mxu0
    %v2308 = vpop.f32.mrb[0].mxu0
    %v2309 = vpop.f32.mrb[0].mxu0
    %2310 = vdwg.mxu0
    %v2315 = vunpack.c.l.b16 %v2195
    %v2316 = vunpack.c.l.b16 %v2196
    %v2317 = vunpack.c.l.b16 %v2197
    %v2318 = vunpack.c.l.b16 %v2198
    %v2319 = vpack.c.b16 %v2316, %v2315
    %v2320 = vpack.c.b16 %v2318, %v2317
    %2323 = vmatprep.subr.bf16.mxu0 0
    %2324 = vmatpush1.bf16.msra.mxu0 %v2319
    %2325 = vmatprep.subr.bf16.mxu0 0
    %2326 = vmatpush1.bf16.msra.mxu0 %v2320
    %2327 = vmatprep.subr.bf16.mxu0 0
    %2328 = vmatpush1.bf16.msra.mxu0 0
    %2329 = vmatprep.subr.bf16.mxu0 0
    %2330 = vmatpush1.bf16.msra.mxu0 0
    %2331 = vmatprep.subr.bf16.mxu0 0
    %2332 = vmatpush1.bf16.msra.mxu0 0
    %2333 = vmatprep.subr.bf16.mxu0 0
    %2334 = vmatpush1.bf16.msra.mxu0 0
    %2335 = vmatprep.subr.bf16.mxu0 0
    %2336 = vmatpush1.bf16.msra.mxu0 0
    %2337 = vmatprep.subr.bf16.mxu0 0
    %2338 = vmatpush1.bf16.msra.mxu0 0
    %2339 = vmatprep.subr.bf16.mxu0 0
    %2340 = vmatpush1.bf16.msra.mxu0 0
    %2341 = vmatprep.subr.bf16.mxu0 0
    %2342 = vmatpush1.bf16.msra.mxu0 0
    %2343 = vmatprep.subr.bf16.mxu0 0
    %2344 = vmatpush1.bf16.msra.mxu0 0
    %2345 = vmatprep.subr.bf16.mxu0 0
    %2346 = vmatpush1.bf16.msra.mxu0 0
    %2347 = vmatprep.subr.bf16.mxu0 0
    %2348 = vmatpush1.bf16.msra.mxu0 0
    %2349 = vmatprep.subr.bf16.mxu0 0
    %2350 = vmatpush1.bf16.msra.mxu0 0
    %2351 = vmatprep.subr.bf16.mxu0 0
    %2352 = vmatpush1.bf16.msra.mxu0 0
    %2353 = vmatprep.subr.bf16.mxu0 0
    %2354 = vmatpush1.bf16.msra.mxu0 0
    %2355 = vmatprep.mubr.bf16.mxu0 0
    %2356 = vmatmul.mubr.bf16.gmra.mrb[0].mxu0 %v163
    %v2357 = vpop.f32.mrb[0].mxu0
    %v2358 = vadd.f32 %v2246, %v2357
    %v2359 = vpop.f32.mrb[0].mxu0
    %v2360 = vpop.f32.mrb[0].mxu0
    %v2361 = vpop.f32.mrb[0].mxu0
    %2362 = vdwg.mxu0
    %v2367 = vunpack.c.l.b16 %v2199
    %v2368 = vunpack.c.l.b16 %v2200
    %v2369 = vunpack.c.l.b16 %v2201
    %v2370 = vunpack.c.l.b16 %v2202
    %v2371 = vpack.c.b16 %v2368, %v2367
    %v2372 = vpack.c.b16 %v2370, %v2369
    %2375 = vmatprep.subr.bf16.mxu0 0
    %2376 = vmatpush1.bf16.msra.mxu0 %v2371
    %2377 = vmatprep.subr.bf16.mxu0 0
    %2378 = vmatpush1.bf16.msra.mxu0 %v2372
    %2379 = vmatprep.subr.bf16.mxu0 0
    %2380 = vmatpush1.bf16.msra.mxu0 0
    %2381 = vmatprep.subr.bf16.mxu0 0
    %2382 = vmatpush1.bf16.msra.mxu0 0
    %2383 = vmatprep.subr.bf16.mxu0 0
    %2384 = vmatpush1.bf16.msra.mxu0 0
    %2385 = vmatprep.subr.bf16.mxu0 0
    %2386 = vmatpush1.bf16.msra.mxu0 0
    %2387 = vmatprep.subr.bf16.mxu0 0
    %2388 = vmatpush1.bf16.msra.mxu0 0
    %2389 = vmatprep.subr.bf16.mxu0 0
    %2390 = vmatpush1.bf16.msra.mxu0 0
    %2391 = vmatprep.subr.bf16.mxu0 0
    %2392 = vmatpush1.bf16.msra.mxu0 0
    %2393 = vmatprep.subr.bf16.mxu0 0
    %2394 = vmatpush1.bf16.msra.mxu0 0
    %2395 = vmatprep.subr.bf16.mxu0 0
    %2396 = vmatpush1.bf16.msra.mxu0 0
    %2397 = vmatprep.subr.bf16.mxu0 0
    %2398 = vmatpush1.bf16.msra.mxu0 0
    %2399 = vmatprep.subr.bf16.mxu0 0
    %2400 = vmatpush1.bf16.msra.mxu0 0
    %2401 = vmatprep.subr.bf16.mxu0 0
    %2402 = vmatpush1.bf16.msra.mxu0 0
    %2403 = vmatprep.subr.bf16.mxu0 0
    %2404 = vmatpush1.bf16.msra.mxu0 0
    %2405 = vmatprep.subr.bf16.mxu0 0
    %2406 = vmatpush1.bf16.msra.mxu0 0
    %2407 = vmatprep.mubr.bf16.mxu0 0
    %2408 = vmatmul.mubr.bf16.gmra.mrb[0].mxu0 %v163
    %v2409 = vpop.f32.mrb[0].mxu0
    %v2410 = vadd.f32 %v2250, %v2409
    %v2411 = vpop.f32.mrb[0].mxu0
    %v2412 = vpop.f32.mrb[0].mxu0
    %v2413 = vpop.f32.mrb[0].mxu0
    %2414 = vdwg.mxu0
    %v2419 = vunpack.c.l.b16 %v2203
    %v2420 = vunpack.c.l.b16 %v2204
    %v2421 = vunpack.c.l.b16 %v2205
    %v2422 = vunpack.c.l.b16 %v2206
    %v2423 = vpack.c.b16 %v2420, %v2419
    %v2424 = vpack.c.b16 %v2422, %v2421
    %2427 = vmatprep.subr.bf16.mxu0 0
    %2428 = vmatpush1.bf16.msra.mxu0 %v2423
    %2429 = vmatprep.subr.bf16.mxu0 0
    %2430 = vmatpush1.bf16.msra.mxu0 %v2424
    %2431 = vmatprep.subr.bf16.mxu0 0
    %2432 = vmatpush1.bf16.msra.mxu0 0
    %2433 = vmatprep.subr.bf16.mxu0 0
    %2434 = vmatpush1.bf16.msra.mxu0 0
    %2435 = vmatprep.subr.bf16.mxu0 0
    %2436 = vmatpush1.bf16.msra.mxu0 0
    %2437 = vmatprep.subr.bf16.mxu0 0
    %2438 = vmatpush1.bf16.msra.mxu0 0
    %2439 = vmatprep.subr.bf16.mxu0 0
    %2440 = vmatpush1.bf16.msra.mxu0 0
    %2441 = vmatprep.subr.bf16.mxu0 0
    %2442 = vmatpush1.bf16.msra.mxu0 0
    %2443 = vmatprep.subr.bf16.mxu0 0
    %2444 = vmatpush1.bf16.msra.mxu0 0
    %2445 = vmatprep.subr.bf16.mxu0 0
    %2446 = vmatpush1.bf16.msra.mxu0 0
    %2447 = vmatprep.subr.bf16.mxu0 0
    %2448 = vmatpush1.bf16.msra.mxu0 0
    %2449 = vmatprep.subr.bf16.mxu0 0
    %2450 = vmatpush1.bf16.msra.mxu0 0
    %2451 = vmatprep.subr.bf16.mxu0 0
    %2452 = vmatpush1.bf16.msra.mxu0 0
    %2453 = vmatprep.subr.bf16.mxu0 0
    %2454 = vmatpush1.bf16.msra.mxu0 0
    %2455 = vmatprep.subr.bf16.mxu0 0
    %2456 = vmatpush1.bf16.msra.mxu0 0
    %2457 = vmatprep.subr.bf16.mxu0 0
    %2458 = vmatpush1.bf16.msra.mxu0 0
    %2459 = vmatprep.mubr.bf16.mxu0 0
    %2460 = vmatmul.mubr.bf16.gmra.mrb[0].mxu0 %v163
    %v2461 = vpop.f32.mrb[0].mxu0
    %v2462 = vadd.f32 %v2254, %v2461
    %v2463 = vpop.f32.mrb[0].mxu0
    %v2464 = vpop.f32.mrb[0].mxu0
    %v2465 = vpop.f32.mrb[0].mxu0
    %2466 = vdwg.mxu0
    %2467 = vmatprep.subr.bf16.mxu0 0
    %2468 = vmatpush1.bf16.msra.mxu0 %v2267
    %2469 = vmatprep.subr.bf16.mxu0 0
    %2470 = vmatpush1.bf16.msra.mxu0 %v2268
    %2471 = vmatprep.subr.bf16.mxu0 0
    %2472 = vmatpush1.bf16.msra.mxu0 0
    %2473 = vmatprep.subr.bf16.mxu0 0
    %2474 = vmatpush1.bf16.msra.mxu0 0
    %2475 = vmatprep.subr.bf16.mxu0 0
    %2476 = vmatpush1.bf16.msra.mxu0 0
    %2477 = vmatprep.subr.bf16.mxu0 0
    %2478 = vmatpush1.bf16.msra.mxu0 0
    %2479 = vmatprep.subr.bf16.mxu0 0
    %2480 = vmatpush1.bf16.msra.mxu0 0
    %2481 = vmatprep.subr.bf16.mxu0 0
    %2482 = vmatpush1.bf16.msra.mxu0 0
    %2483 = vmatprep.subr.bf16.mxu0 0
    %2484 = vmatpush1.bf16.msra.mxu0 0
    %2485 = vmatprep.subr.bf16.mxu0 0
    %2486 = vmatpush1.bf16.msra.mxu0 0
    %2487 = vmatprep.subr.bf16.mxu0 0
    %2488 = vmatpush1.bf16.msra.mxu0 0
    %2489 = vmatprep.subr.bf16.mxu0 0
    %2490 = vmatpush1.bf16.msra.mxu0 0
    %2491 = vmatprep.subr.bf16.mxu0 0
    %2492 = vmatpush1.bf16.msra.mxu0 0
    %2493 = vmatprep.subr.bf16.mxu0 0
    %2494 = vmatpush1.bf16.msra.mxu0 0
    %2495 = vmatprep.subr.bf16.mxu0 0
    %2496 = vmatpush1.bf16.msra.mxu0 0
    %2497 = vmatprep.subr.bf16.mxu0 0
    %2498 = vmatpush1.bf16.msra.mxu0 0
    %2499 = vmatprep.mubr.bf16.mxu0 0
    %2500 = vmatmul.mubr.bf16.gmra.mrb[0].mxu0 %v362
    %v2501 = vpop.f32.mrb[0].mxu0
    %v2502 = vadd.f32 %v2242, %v2501
    %v2503 = vpop.f32.mrb[0].mxu0
    %v2504 = vpop.f32.mrb[0].mxu0
    %v2505 = vpop.f32.mrb[0].mxu0
    %2506 = vdwg.mxu0
    %2507 = vmatprep.subr.bf16.mxu0 0
    %2508 = vmatpush1.bf16.msra.mxu0 %v2319
    %2509 = vmatprep.subr.bf16.mxu0 0
    %2510 = vmatpush1.bf16.msra.mxu0 %v2320
    %2511 = vmatprep.subr.bf16.mxu0 0
    %2512 = vmatpush1.bf16.msra.mxu0 0
    %2513 = vmatprep.subr.bf16.mxu0 0
    %2514 = vmatpush1.bf16.msra.mxu0 0
    %2515 = vmatprep.subr.bf16.mxu0 0
    %2516 = vmatpush1.bf16.msra.mxu0 0
    %2517 = vmatprep.subr.bf16.mxu0 0
    %2518 = vmatpush1.bf16.msra.mxu0 0
    %2519 = vmatprep.subr.bf16.mxu0 0
    %2520 = vmatpush1.bf16.msra.mxu0 0
    %2521 = vmatprep.subr.bf16.mxu0 0
    %2522 = vmatpush1.bf16.msra.mxu0 0
    %2523 = vmatprep.subr.bf16.mxu0 0
    %2524 = vmatpush1.bf16.msra.mxu0 0
    %2525 = vmatprep.subr.bf16.mxu0 0
    %2526 = vmatpush1.bf16.msra.mxu0 0
    %2527 = vmatprep.subr.bf16.mxu0 0
    %2528 = vmatpush1.bf16.msra.mxu0 0
    %2529 = vmatprep.subr.bf16.mxu0 0
    %2530 = vmatpush1.bf16.msra.mxu0 0
    %2531 = vmatprep.subr.bf16.mxu0 0
    %2532 = vmatpush1.bf16.msra.mxu0 0
    %2533 = vmatprep.subr.bf16.mxu0 0
    %2534 = vmatpush1.bf16.msra.mxu0 0
    %2535 = vmatprep.subr.bf16.mxu0 0
    %2536 = vmatpush1.bf16.msra.mxu0 0
    %2537 = vmatprep.subr.bf16.mxu0 0
    %2538 = vmatpush1.bf16.msra.mxu0 0
    %2539 = vmatprep.mubr.bf16.mxu0 0
    %2540 = vmatmul.mubr.bf16.gmra.mrb[0].mxu0 %v362
    %v2541 = vpop.f32.mrb[0].mxu0
    %v2542 = vadd.f32 %v2246, %v2541
    %v2543 = vpop.f32.mrb[0].mxu0
    %v2544 = vpop.f32.mrb[0].mxu0
    %v2545 = vpop.f32.mrb[0].mxu0
    %2546 = vdwg.mxu0
    %2547 = vmatprep.subr.bf16.mxu0 0
    %2548 = vmatpush1.bf16.msra.mxu0 %v2371
    %2549 = vmatprep.subr.bf16.mxu0 0
    %2550 = vmatpush1.bf16.msra.mxu0 %v2372
    %2551 = vmatprep.subr.bf16.mxu0 0
    %2552 = vmatpush1.bf16.msra.mxu0 0
    %2553 = vmatprep.subr.bf16.mxu0 0
    %2554 = vmatpush1.bf16.msra.mxu0 0
    %2555 = vmatprep.subr.bf16.mxu0 0
    %2556 = vmatpush1.bf16.msra.mxu0 0
    %2557 = vmatprep.subr.bf16.mxu0 0
    %2558 = vmatpush1.bf16.msra.mxu0 0
    %2559 = vmatprep.subr.bf16.mxu0 0
    %2560 = vmatpush1.bf16.msra.mxu0 0
    %2561 = vmatprep.subr.bf16.mxu0 0
    %2562 = vmatpush1.bf16.msra.mxu0 0
    %2563 = vmatprep.subr.bf16.mxu0 0
    %2564 = vmatpush1.bf16.msra.mxu0 0
    %2565 = vmatprep.subr.bf16.mxu0 0
    %2566 = vmatpush1.bf16.msra.mxu0 0
    %2567 = vmatprep.subr.bf16.mxu0 0
    %2568 = vmatpush1.bf16.msra.mxu0 0
    %2569 = vmatprep.subr.bf16.mxu0 0
    %2570 = vmatpush1.bf16.msra.mxu0 0
    %2571 = vmatprep.subr.bf16.mxu0 0
    %2572 = vmatpush1.bf16.msra.mxu0 0
    %2573 = vmatprep.subr.bf16.mxu0 0
    %2574 = vmatpush1.bf16.msra.mxu0 0
    %2575 = vmatprep.subr.bf16.mxu0 0
    %2576 = vmatpush1.bf16.msra.mxu0 0
    %2577 = vmatprep.subr.bf16.mxu0 0
    %2578 = vmatpush1.bf16.msra.mxu0 0
    %2579 = vmatprep.mubr.bf16.mxu0 0
    %2580 = vmatmul.mubr.bf16.gmra.mrb[0].mxu0 %v362
    %v2581 = vpop.f32.mrb[0].mxu0
    %v2582 = vadd.f32 %v2250, %v2581
    %v2583 = vpop.f32.mrb[0].mxu0
    %v2584 = vpop.f32.mrb[0].mxu0
    %v2585 = vpop.f32.mrb[0].mxu0
    %2586 = vdwg.mxu0
    %2587 = vmatprep.subr.bf16.mxu0 0
    %2588 = vmatpush1.bf16.msra.mxu0 %v2423
    %2589 = vmatprep.subr.bf16.mxu0 0
    %2590 = vmatpush1.bf16.msra.mxu0 %v2424
    %2591 = vmatprep.subr.bf16.mxu0 0
    %2592 = vmatpush1.bf16.msra.mxu0 0
    %2593 = vmatprep.subr.bf16.mxu0 0
    %2594 = vmatpush1.bf16.msra.mxu0 0
    %2595 = vmatprep.subr.bf16.mxu0 0
    %2596 = vmatpush1.bf16.msra.mxu0 0
    %2597 = vmatprep.subr.bf16.mxu0 0
    %2598 = vmatpush1.bf16.msra.mxu0 0
    %2599 = vmatprep.subr.bf16.mxu0 0
    %2600 = vmatpush1.bf16.msra.mxu0 0
    %2601 = vmatprep.subr.bf16.mxu0 0
    %2602 = vmatpush1.bf16.msra.mxu0 0
    %2603 = vmatprep.subr.bf16.mxu0 0
    %2604 = vmatpush1.bf16.msra.mxu0 0
    %2605 = vmatprep.subr.bf16.mxu0 0
    %2606 = vmatpush1.bf16.msra.mxu0 0
    %2607 = vmatprep.subr.bf16.mxu0 0
    %2608 = vmatpush1.bf16.msra.mxu0 0
    %2609 = vmatprep.subr.bf16.mxu0 0
    %2610 = vmatpush1.bf16.msra.mxu0 0
    %2611 = vmatprep.subr.bf16.mxu0 0
    %2612 = vmatpush1.bf16.msra.mxu0 0
    %2613 = vmatprep.subr.bf16.mxu0 0
    %2614 = vmatpush1.bf16.msra.mxu0 0
    %2615 = vmatprep.subr.bf16.mxu0 0
    %2616 = vmatpush1.bf16.msra.mxu0 0
    %2617 = vmatprep.subr.bf16.mxu0 0
    %2618 = vmatpush1.bf16.msra.mxu0 0
    %2619 = vmatprep.mubr.bf16.mxu0 0
    %2620 = vmatmul.mubr.bf16.gmra.mrb[0].mxu0 %v362
    %v2621 = vpop.f32.mrb[0].mxu0
    %v2622 = vadd.f32 %v2254, %v2621
    %v2623 = vpop.f32.mrb[0].mxu0
    %v2624 = vpop.f32.mrb[0].mxu0
    %v2625 = vpop.f32.mrb[0].mxu0
    %2626 = vdwg.mxu0
    %v2631 = vlaneseq
    %v2632 = vshrl.u32 %v2631, 7
    %v2633 = vsub.s32 0, %v2632
    %v2634 = vrot.slane %v2227, %v2633
    %v2635 = vlaneseq
    %v2636 = vshrl.u32 %v2635, 7
    %v2637 = vsub.s32 0, %v2636
    %v2638 = vrot.slane %v2228, %v2637
    %v2639 = vlaneseq
    %v2640 = vshrl.u32 %v2639, 7
    %v2641 = vsub.s32 0, %v2640
    %v2642 = vrot.slane %v2229, %v2641
    %v2643 = vlaneseq
    %v2644 = vshrl.u32 %v2643, 7
    %v2645 = vsub.s32 0, %v2644
    %v2646 = vrot.slane %v2230, %v2645
    %v2655 = vunpack.c.l.b16 %v2207
    %v2656 = vunpack.c.l.b16 %v2208
    %v2657 = vunpack.c.l.b16 %v2209
    %v2658 = vunpack.c.l.b16 %v2210
    %v2659 = vpack.c.b16 %v2656, %v2655
    %v2660 = vpack.c.b16 %v2658, %v2657
    %2663 = vmatprep.subr.bf16.mxu0 0
    %2664 = vmatpush1.bf16.msra.mxu0 %v2659
    %2665 = vmatprep.subr.bf16.mxu0 0
    %2666 = vmatpush1.bf16.msra.mxu0 %v2660
    %2667 = vmatprep.subr.bf16.mxu0 0
    %2668 = vmatpush1.bf16.msra.mxu0 0
    %2669 = vmatprep.subr.bf16.mxu0 0
    %2670 = vmatpush1.bf16.msra.mxu0 0
    %2671 = vmatprep.subr.bf16.mxu0 0
    %2672 = vmatpush1.bf16.msra.mxu0 0
    %2673 = vmatprep.subr.bf16.mxu0 0
    %2674 = vmatpush1.bf16.msra.mxu0 0
    %2675 = vmatprep.subr.bf16.mxu0 0
    %2676 = vmatpush1.bf16.msra.mxu0 0
    %2677 = vmatprep.subr.bf16.mxu0 0
    %2678 = vmatpush1.bf16.msra.mxu0 0
    %2679 = vmatprep.subr.bf16.mxu0 0
    %2680 = vmatpush1.bf16.msra.mxu0 0
    %2681 = vmatprep.subr.bf16.mxu0 0
    %2682 = vmatpush1.bf16.msra.mxu0 0
    %2683 = vmatprep.subr.bf16.mxu0 0
    %2684 = vmatpush1.bf16.msra.mxu0 0
    %2685 = vmatprep.subr.bf16.mxu0 0
    %2686 = vmatpush1.bf16.msra.mxu0 0
    %2687 = vmatprep.subr.bf16.mxu0 0
    %2688 = vmatpush1.bf16.msra.mxu0 0
    %2689 = vmatprep.subr.bf16.mxu0 0
    %2690 = vmatpush1.bf16.msra.mxu0 0
    %2691 = vmatprep.subr.bf16.mxu0 0
    %2692 = vmatpush1.bf16.msra.mxu0 0
    %2693 = vmatprep.subr.bf16.mxu0 0
    %2694 = vmatpush1.bf16.msra.mxu0 0
    %2695 = vmatprep.mubr.bf16.mxu0 0
    %2696 = vmatmul.mubr.bf16.gmra.mrb[0].mxu0 %v163
    %v2697 = vpop.f32.mrb[0].mxu0
    %v2698 = vadd.f32 %v2634, %v2697
    %v2699 = vpop.f32.mrb[0].mxu0
    %v2700 = vpop.f32.mrb[0].mxu0
    %v2701 = vpop.f32.mrb[0].mxu0
    %2702 = vdwg.mxu0
    %v2707 = vunpack.c.l.b16 %v2211
    %v2708 = vunpack.c.l.b16 %v2212
    %v2709 = vunpack.c.l.b16 %v2213
    %v2710 = vunpack.c.l.b16 %v2214
    %v2711 = vpack.c.b16 %v2708, %v2707
    %v2712 = vpack.c.b16 %v2710, %v2709
    %2715 = vmatprep.subr.bf16.mxu0 0
    %2716 = vmatpush1.bf16.msra.mxu0 %v2711
    %2717 = vmatprep.subr.bf16.mxu0 0
    %2718 = vmatpush1.bf16.msra.mxu0 %v2712
    %2719 = vmatprep.subr.bf16.mxu0 0
    %2720 = vmatpush1.bf16.msra.mxu0 0
    %2721 = vmatprep.subr.bf16.mxu0 0
    %2722 = vmatpush1.bf16.msra.mxu0 0
    %2723 = vmatprep.subr.bf16.mxu0 0
    %2724 = vmatpush1.bf16.msra.mxu0 0
    %2725 = vmatprep.subr.bf16.mxu0 0
    %2726 = vmatpush1.bf16.msra.mxu0 0
    %2727 = vmatprep.subr.bf16.mxu0 0
    %2728 = vmatpush1.bf16.msra.mxu0 0
    %2729 = vmatprep.subr.bf16.mxu0 0
    %2730 = vmatpush1.bf16.msra.mxu0 0
    %2731 = vmatprep.subr.bf16.mxu0 0
    %2732 = vmatpush1.bf16.msra.mxu0 0
    %2733 = vmatprep.subr.bf16.mxu0 0
    %2734 = vmatpush1.bf16.msra.mxu0 0
    %2735 = vmatprep.subr.bf16.mxu0 0
    %2736 = vmatpush1.bf16.msra.mxu0 0
    %2737 = vmatprep.subr.bf16.mxu0 0
    %2738 = vmatpush1.bf16.msra.mxu0 0
    %2739 = vmatprep.subr.bf16.mxu0 0
    %2740 = vmatpush1.bf16.msra.mxu0 0
    %2741 = vmatprep.subr.bf16.mxu0 0
    %2742 = vmatpush1.bf16.msra.mxu0 0
    %2743 = vmatprep.subr.bf16.mxu0 0
    %2744 = vmatpush1.bf16.msra.mxu0 0
    %2745 = vmatprep.subr.bf16.mxu0 0
    %2746 = vmatpush1.bf16.msra.mxu0 0
    %2747 = vmatprep.mubr.bf16.mxu0 0
    %2748 = vmatmul.mubr.bf16.gmra.mrb[0].mxu0 %v163
    %v2749 = vpop.f32.mrb[0].mxu0
    %v2750 = vadd.f32 %v2638, %v2749
    %v2751 = vpop.f32.mrb[0].mxu0
    %v2752 = vpop.f32.mrb[0].mxu0
    %v2753 = vpop.f32.mrb[0].mxu0
    %2754 = vdwg.mxu0
    %v2759 = vunpack.c.l.b16 %v2215
    %v2760 = vunpack.c.l.b16 %v2216
    %v2761 = vunpack.c.l.b16 %v2217
    %v2762 = vunpack.c.l.b16 %v2218
    %v2763 = vpack.c.b16 %v2760, %v2759
    %v2764 = vpack.c.b16 %v2762, %v2761
    %2767 = vmatprep.subr.bf16.mxu0 0
    %2768 = vmatpush1.bf16.msra.mxu0 %v2763
    %2769 = vmatprep.subr.bf16.mxu0 0
    %2770 = vmatpush1.bf16.msra.mxu0 %v2764
    %2771 = vmatprep.subr.bf16.mxu0 0
    %2772 = vmatpush1.bf16.msra.mxu0 0
    %2773 = vmatprep.subr.bf16.mxu0 0
    %2774 = vmatpush1.bf16.msra.mxu0 0
    %2775 = vmatprep.subr.bf16.mxu0 0
    %2776 = vmatpush1.bf16.msra.mxu0 0
    %2777 = vmatprep.subr.bf16.mxu0 0
    %2778 = vmatpush1.bf16.msra.mxu0 0
    %2779 = vmatprep.subr.bf16.mxu0 0
    %2780 = vmatpush1.bf16.msra.mxu0 0
    %2781 = vmatprep.subr.bf16.mxu0 0
    %2782 = vmatpush1.bf16.msra.mxu0 0
    %2783 = vmatprep.subr.bf16.mxu0 0
    %2784 = vmatpush1.bf16.msra.mxu0 0
    %2785 = vmatprep.subr.bf16.mxu0 0
    %2786 = vmatpush1.bf16.msra.mxu0 0
    %2787 = vmatprep.subr.bf16.mxu0 0
    %2788 = vmatpush1.bf16.msra.mxu0 0
    %2789 = vmatprep.subr.bf16.mxu0 0
    %2790 = vmatpush1.bf16.msra.mxu0 0
    %2791 = vmatprep.subr.bf16.mxu0 0
    %2792 = vmatpush1.bf16.msra.mxu0 0
    %2793 = vmatprep.subr.bf16.mxu0 0
    %2794 = vmatpush1.bf16.msra.mxu0 0
    %2795 = vmatprep.subr.bf16.mxu0 0
    %2796 = vmatpush1.bf16.msra.mxu0 0
    %2797 = vmatprep.subr.bf16.mxu0 0
    %2798 = vmatpush1.bf16.msra.mxu0 0
    %2799 = vmatprep.mubr.bf16.mxu0 0
    %2800 = vmatmul.mubr.bf16.gmra.mrb[0].mxu0 %v163
    %v2801 = vpop.f32.mrb[0].mxu0
    %v2802 = vadd.f32 %v2642, %v2801
    %v2803 = vpop.f32.mrb[0].mxu0
    %v2804 = vpop.f32.mrb[0].mxu0
    %v2805 = vpop.f32.mrb[0].mxu0
    %2806 = vdwg.mxu0
    %v2811 = vunpack.c.l.b16 %v2219
    %v2812 = vunpack.c.l.b16 %v2220
    %v2813 = vunpack.c.l.b16 %v2221
    %v2814 = vunpack.c.l.b16 %v2222
    %v2815 = vpack.c.b16 %v2812, %v2811
    %v2816 = vpack.c.b16 %v2814, %v2813
    %2819 = vmatprep.subr.bf16.mxu0 0
    %2820 = vmatpush1.bf16.msra.mxu0 %v2815
    %2821 = vmatprep.subr.bf16.mxu0 0
    %2822 = vmatpush1.bf16.msra.mxu0 %v2816
    %2823 = vmatprep.subr.bf16.mxu0 0
    %2824 = vmatpush1.bf16.msra.mxu0 0
    %2825 = vmatprep.subr.bf16.mxu0 0
    %2826 = vmatpush1.bf16.msra.mxu0 0
    %2827 = vmatprep.subr.bf16.mxu0 0
    %2828 = vmatpush1.bf16.msra.mxu0 0
    %2829 = vmatprep.subr.bf16.mxu0 0
    %2830 = vmatpush1.bf16.msra.mxu0 0
    %2831 = vmatprep.subr.bf16.mxu0 0
    %2832 = vmatpush1.bf16.msra.mxu0 0
    %2833 = vmatprep.subr.bf16.mxu0 0
    %2834 = vmatpush1.bf16.msra.mxu0 0
    %2835 = vmatprep.subr.bf16.mxu0 0
    %2836 = vmatpush1.bf16.msra.mxu0 0
    %2837 = vmatprep.subr.bf16.mxu0 0
    %2838 = vmatpush1.bf16.msra.mxu0 0
    %2839 = vmatprep.subr.bf16.mxu0 0
    %2840 = vmatpush1.bf16.msra.mxu0 0
    %2841 = vmatprep.subr.bf16.mxu0 0
    %2842 = vmatpush1.bf16.msra.mxu0 0
    %2843 = vmatprep.subr.bf16.mxu0 0
    %2844 = vmatpush1.bf16.msra.mxu0 0
    %2845 = vmatprep.subr.bf16.mxu0 0
    %2846 = vmatpush1.bf16.msra.mxu0 0
    %2847 = vmatprep.subr.bf16.mxu0 0
    %2848 = vmatpush1.bf16.msra.mxu0 0
    %2849 = vmatprep.subr.bf16.mxu0 0
    %2850 = vmatpush1.bf16.msra.mxu0 0
    %2851 = vmatprep.mubr.bf16.mxu0 0
    %2852 = vmatmul.mubr.bf16.gmra.mrb[0].mxu0 %v163
    %v2853 = vpop.f32.mrb[0].mxu0
    %v2854 = vadd.f32 %v2646, %v2853
    %v2855 = vpop.f32.mrb[0].mxu0
    %v2856 = vpop.f32.mrb[0].mxu0
    %v2857 = vpop.f32.mrb[0].mxu0
    %2858 = vdwg.mxu0
    %2859 = vmatprep.subr.bf16.mxu0 0
    %2860 = vmatpush1.bf16.msra.mxu0 %v2659
    %2861 = vmatprep.subr.bf16.mxu0 0
    %2862 = vmatpush1.bf16.msra.mxu0 %v2660
    %2863 = vmatprep.subr.bf16.mxu0 0
    %2864 = vmatpush1.bf16.msra.mxu0 0
    %2865 = vmatprep.subr.bf16.mxu0 0
    %2866 = vmatpush1.bf16.msra.mxu0 0
    %2867 = vmatprep.subr.bf16.mxu0 0
    %2868 = vmatpush1.bf16.msra.mxu0 0
    %2869 = vmatprep.subr.bf16.mxu0 0
    %2870 = vmatpush1.bf16.msra.mxu0 0
    %2871 = vmatprep.subr.bf16.mxu0 0
    %2872 = vmatpush1.bf16.msra.mxu0 0
    %2873 = vmatprep.subr.bf16.mxu0 0
    %2874 = vmatpush1.bf16.msra.mxu0 0
    %2875 = vmatprep.subr.bf16.mxu0 0
    %2876 = vmatpush1.bf16.msra.mxu0 0
    %2877 = vmatprep.subr.bf16.mxu0 0
    %2878 = vmatpush1.bf16.msra.mxu0 0
    %2879 = vmatprep.subr.bf16.mxu0 0
    %2880 = vmatpush1.bf16.msra.mxu0 0
    %2881 = vmatprep.subr.bf16.mxu0 0
    %2882 = vmatpush1.bf16.msra.mxu0 0
    %2883 = vmatprep.subr.bf16.mxu0 0
    %2884 = vmatpush1.bf16.msra.mxu0 0
    %2885 = vmatprep.subr.bf16.mxu0 0
    %2886 = vmatpush1.bf16.msra.mxu0 0
    %2887 = vmatprep.subr.bf16.mxu0 0
    %2888 = vmatpush1.bf16.msra.mxu0 0
    %2889 = vmatprep.subr.bf16.mxu0 0
    %2890 = vmatpush1.bf16.msra.mxu0 0
    %2891 = vmatprep.mubr.bf16.mxu0 0
    %2892 = vmatmul.mubr.bf16.gmra.mrb[0].mxu0 %v362
    %v2893 = vpop.f32.mrb[0].mxu0
    %v2894 = vadd.f32 %v2634, %v2893
    %v2895 = vpop.f32.mrb[0].mxu0
    %v2896 = vpop.f32.mrb[0].mxu0
    %v2897 = vpop.f32.mrb[0].mxu0
    %2898 = vdwg.mxu0
    %2899 = vmatprep.subr.bf16.mxu0 0
    %2900 = vmatpush1.bf16.msra.mxu0 %v2711
    %2901 = vmatprep.subr.bf16.mxu0 0
    %2902 = vmatpush1.bf16.msra.mxu0 %v2712
    %2903 = vmatprep.subr.bf16.mxu0 0
    %2904 = vmatpush1.bf16.msra.mxu0 0
    %2905 = vmatprep.subr.bf16.mxu0 0
    %2906 = vmatpush1.bf16.msra.mxu0 0
    %2907 = vmatprep.subr.bf16.mxu0 0
    %2908 = vmatpush1.bf16.msra.mxu0 0
    %2909 = vmatprep.subr.bf16.mxu0 0
    %2910 = vmatpush1.bf16.msra.mxu0 0
    %2911 = vmatprep.subr.bf16.mxu0 0
    %2912 = vmatpush1.bf16.msra.mxu0 0
    %2913 = vmatprep.subr.bf16.mxu0 0
    %2914 = vmatpush1.bf16.msra.mxu0 0
    %2915 = vmatprep.subr.bf16.mxu0 0
    %2916 = vmatpush1.bf16.msra.mxu0 0
    %2917 = vmatprep.subr.bf16.mxu0 0
    %2918 = vmatpush1.bf16.msra.mxu0 0
    %2919 = vmatprep.subr.bf16.mxu0 0
    %2920 = vmatpush1.bf16.msra.mxu0 0
    %2921 = vmatprep.subr.bf16.mxu0 0
    %2922 = vmatpush1.bf16.msra.mxu0 0
    %2923 = vmatprep.subr.bf16.mxu0 0
    %2924 = vmatpush1.bf16.msra.mxu0 0
    %2925 = vmatprep.subr.bf16.mxu0 0
    %2926 = vmatpush1.bf16.msra.mxu0 0
    %2927 = vmatprep.subr.bf16.mxu0 0
    %2928 = vmatpush1.bf16.msra.mxu0 0
    %2929 = vmatprep.subr.bf16.mxu0 0
    %2930 = vmatpush1.bf16.msra.mxu0 0
    %2931 = vmatprep.mubr.bf16.mxu0 0
    %2932 = vmatmul.mubr.bf16.gmra.mrb[0].mxu0 %v362
    %v2933 = vpop.f32.mrb[0].mxu0
    %v2934 = vadd.f32 %v2638, %v2933
    %v2935 = vpop.f32.mrb[0].mxu0
    %v2936 = vpop.f32.mrb[0].mxu0
    %v2937 = vpop.f32.mrb[0].mxu0
    %2938 = vdwg.mxu0
    %2939 = vmatprep.subr.bf16.mxu0 0
    %2940 = vmatpush1.bf16.msra.mxu0 %v2763
    %2941 = vmatprep.subr.bf16.mxu0 0
    %2942 = vmatpush1.bf16.msra.mxu0 %v2764
    %2943 = vmatprep.subr.bf16.mxu0 0
    %2944 = vmatpush1.bf16.msra.mxu0 0
    %2945 = vmatprep.subr.bf16.mxu0 0
    %2946 = vmatpush1.bf16.msra.mxu0 0
    %2947 = vmatprep.subr.bf16.mxu0 0
    %2948 = vmatpush1.bf16.msra.mxu0 0
    %2949 = vmatprep.subr.bf16.mxu0 0
    %2950 = vmatpush1.bf16.msra.mxu0 0
    %2951 = vmatprep.subr.bf16.mxu0 0
    %2952 = vmatpush1.bf16.msra.mxu0 0
    %2953 = vmatprep.subr.bf16.mxu0 0
    %2954 = vmatpush1.bf16.msra.mxu0 0
    %2955 = vmatprep.subr.bf16.mxu0 0
    %2956 = vmatpush1.bf16.msra.mxu0 0
    %2957 = vmatprep.subr.bf16.mxu0 0
    %2958 = vmatpush1.bf16.msra.mxu0 0
    %2959 = vmatprep.subr.bf16.mxu0 0
    %2960 = vmatpush1.bf16.msra.mxu0 0
    %2961 = vmatprep.subr.bf16.mxu0 0
    %2962 = vmatpush1.bf16.msra.mxu0 0
    %2963 = vmatprep.subr.bf16.mxu0 0
    %2964 = vmatpush1.bf16.msra.mxu0 0
    %2965 = vmatprep.subr.bf16.mxu0 0
    %2966 = vmatpush1.bf16.msra.mxu0 0
    %2967 = vmatprep.subr.bf16.mxu0 0
    %2968 = vmatpush1.bf16.msra.mxu0 0
    %2969 = vmatprep.subr.bf16.mxu0 0
    %2970 = vmatpush1.bf16.msra.mxu0 0
    %2971 = vmatprep.mubr.bf16.mxu0 0
    %2972 = vmatmul.mubr.bf16.gmra.mrb[0].mxu0 %v362
    %v2973 = vpop.f32.mrb[0].mxu0
    %v2974 = vadd.f32 %v2642, %v2973
    %v2975 = vpop.f32.mrb[0].mxu0
    %v2976 = vpop.f32.mrb[0].mxu0
    %v2977 = vpop.f32.mrb[0].mxu0
    %2978 = vdwg.mxu0
    %2979 = vmatprep.subr.bf16.mxu0 0
    %2980 = vmatpush1.bf16.msra.mxu0 %v2815
    %2981 = vmatprep.subr.bf16.mxu0 0
    %2982 = vmatpush1.bf16.msra.mxu0 %v2816
    %2983 = vmatprep.subr.bf16.mxu0 0
    %2984 = vmatpush1.bf16.msra.mxu0 0
    %2985 = vmatprep.subr.bf16.mxu0 0
    %2986 = vmatpush1.bf16.msra.mxu0 0
    %2987 = vmatprep.subr.bf16.mxu0 0
    %2988 = vmatpush1.bf16.msra.mxu0 0
    %2989 = vmatprep.subr.bf16.mxu0 0
    %2990 = vmatpush1.bf16.msra.mxu0 0
    %2991 = vmatprep.subr.bf16.mxu0 0
    %2992 = vmatpush1.bf16.msra.mxu0 0
    %2993 = vmatprep.subr.bf16.mxu0 0
    %2994 = vmatpush1.bf16.msra.mxu0 0
    %2995 = vmatprep.subr.bf16.mxu0 0
    %2996 = vmatpush1.bf16.msra.mxu0 0
    %2997 = vmatprep.subr.bf16.mxu0 0
    %2998 = vmatpush1.bf16.msra.mxu0 0
    %2999 = vmatprep.subr.bf16.mxu0 0
    %3000 = vmatpush1.bf16.msra.mxu0 0
    %3001 = vmatprep.subr.bf16.mxu0 0
    %3002 = vmatpush1.bf16.msra.mxu0 0
    %3003 = vmatprep.subr.bf16.mxu0 0
    %3004 = vmatpush1.bf16.msra.mxu0 0
    %3005 = vmatprep.subr.bf16.mxu0 0
    %3006 = vmatpush1.bf16.msra.mxu0 0
    %3007 = vmatprep.subr.bf16.mxu0 0
    %3008 = vmatpush1.bf16.msra.mxu0 0
    %3009 = vmatprep.subr.bf16.mxu0 0
    %3010 = vmatpush1.bf16.msra.mxu0 0
    %3011 = vmatprep.mubr.bf16.mxu0 0
    %3012 = vmatmul.mubr.bf16.gmra.mrb[0].mxu0 %v362
    %v3013 = vpop.f32.mrb[0].mxu0
    %v3014 = vadd.f32 %v2646, %v3013
    %v3015 = vpop.f32.mrb[0].mxu0
    %v3016 = vpop.f32.mrb[0].mxu0
    %v3017 = vpop.f32.mrb[0].mxu0
    %3018 = vdwg.mxu0
    %v3019 = vpack.c.bf16 %v2306, %v2306
    %v3020 = vpack.c.bf16 %v2358, %v2358
    %v3021 = vpack.c.bf16 %v2410, %v2410
    %v3022 = vpack.c.bf16 %v2462, %v2462
    %v3023 = vpack.c.bf16 %v2502, %v2502
    %v3024 = vpack.c.bf16 %v2542, %v2542
    %v3025 = vpack.c.bf16 %v2582, %v2582
    %v3026 = vpack.c.bf16 %v2622, %v2622
    %v3027 = vpack.c.bf16 %v2698, %v2698
    %v3028 = vpack.c.bf16 %v2750, %v2750
    %v3029 = vpack.c.bf16 %v2802, %v2802
    %v3030 = vpack.c.bf16 %v2854, %v2854
    %v3031 = vpack.c.bf16 %v2894, %v2894
    %v3032 = vpack.c.bf16 %v2934, %v2934
    %v3033 = vpack.c.bf16 %v2974, %v2974
    %v3034 = vpack.c.bf16 %v3014, %v3014
    %v3036 = vsel %vm938, %v3019, 0
    %v3039 = vsel %vm938, %v3027, 0
    %3041 = vmatprep.subr.bf16.mxu0 0
    %3042 = vmatpush1.bf16.xpose.msra.mxu0 %v3039
    %3043 = vmatprep.subr.bf16.mxu0 0
    %3044 = vmatpush1.bf16.xpose.msra.mxu0 0
    %3045 = vmatprep.subr.bf16.mxu0 0
    %3046 = vmatpush1.bf16.xpose.msra.mxu0 0
    %3047 = vmatprep.subr.bf16.mxu0 0
    %3048 = vmatpush1.bf16.xpose.msra.mxu0 0
    %3049 = vmatprep.subr.bf16.mxu0 0
    %3050 = vmatpush1.bf16.xpose.msra.mxu0 0
    %3051 = vmatprep.subr.bf16.mxu0 0
    %3052 = vmatpush1.bf16.xpose.msra.mxu0 0
    %3053 = vmatprep.subr.bf16.mxu0 0
    %3054 = vmatpush1.bf16.xpose.msra.mxu0 0
    %3055 = vmatprep.subr.bf16.mxu0 0
    %3056 = vmatpush1.bf16.xpose.msra.mxu0 0
    %3057 = vmatprep.subr.bf16.mxu0 0
    %3058 = vmatpush1.bf16.xpose.msra.mxu0 0
    %3059 = vmatprep.subr.bf16.mxu0 0
    %3060 = vmatpush1.bf16.xpose.msra.mxu0 0
    %3061 = vmatprep.subr.bf16.mxu0 0
    %3062 = vmatpush1.bf16.xpose.msra.mxu0 0
    %3063 = vmatprep.subr.bf16.mxu0 0
    %3064 = vmatpush1.bf16.xpose.msra.mxu0 0
    %3065 = vmatprep.subr.bf16.mxu0 0
    %3066 = vmatpush1.bf16.xpose.msra.mxu0 0
    %3067 = vmatprep.subr.bf16.mxu0 0
    %3068 = vmatpush1.bf16.xpose.msra.mxu0 0
    %3069 = vmatprep.subr.bf16.mxu0 0
    %3070 = vmatpush1.bf16.xpose.msra.mxu0 0
    %3071 = vmatprep.subr.bf16.mxu0 0
    %3072 = vmatpush1.bf16.xpose.msra.mxu0 0
    %3073 = vmatprep.mubr.bf16.mxu0 0
    %3074 = vmatmul.mubr.bf16.gmra.mrb[0].mxu0 %v3036
    %v3075 = vpop.f32.mrb[0].mxu0
    %v3076 = vadd.f32 0.0, %v3075
    %v3077 = vpop.f32.mrb[0].mxu0
    %v3078 = vpop.f32.mrb[0].mxu0
    %v3079 = vpop.f32.mrb[0].mxu0
    %3080 = vdwg.mxu0
    %v3082 = vsel %vm938, %v3020, 0
    %v3085 = vsel %vm938, %v3028, 0
    %3087 = vmatprep.subr.bf16.mxu0 0
    %3088 = vmatpush1.bf16.xpose.msra.mxu0 %v3085
    %3089 = vmatprep.subr.bf16.mxu0 0
    %3090 = vmatpush1.bf16.xpose.msra.mxu0 0
    %3091 = vmatprep.subr.bf16.mxu0 0
    %3092 = vmatpush1.bf16.xpose.msra.mxu0 0
    %3093 = vmatprep.subr.bf16.mxu0 0
    %3094 = vmatpush1.bf16.xpose.msra.mxu0 0
    %3095 = vmatprep.subr.bf16.mxu0 0
    %3096 = vmatpush1.bf16.xpose.msra.mxu0 0
    %3097 = vmatprep.subr.bf16.mxu0 0
    %3098 = vmatpush1.bf16.xpose.msra.mxu0 0
    %3099 = vmatprep.subr.bf16.mxu0 0
    %3100 = vmatpush1.bf16.xpose.msra.mxu0 0
    %3101 = vmatprep.subr.bf16.mxu0 0
    %3102 = vmatpush1.bf16.xpose.msra.mxu0 0
    %3103 = vmatprep.subr.bf16.mxu0 0
    %3104 = vmatpush1.bf16.xpose.msra.mxu0 0
    %3105 = vmatprep.subr.bf16.mxu0 0
    %3106 = vmatpush1.bf16.xpose.msra.mxu0 0
    %3107 = vmatprep.subr.bf16.mxu0 0
    %3108 = vmatpush1.bf16.xpose.msra.mxu0 0
    %3109 = vmatprep.subr.bf16.mxu0 0
    %3110 = vmatpush1.bf16.xpose.msra.mxu0 0
    %3111 = vmatprep.subr.bf16.mxu0 0
    %3112 = vmatpush1.bf16.xpose.msra.mxu0 0
    %3113 = vmatprep.subr.bf16.mxu0 0
    %3114 = vmatpush1.bf16.xpose.msra.mxu0 0
    %3115 = vmatprep.subr.bf16.mxu0 0
    %3116 = vmatpush1.bf16.xpose.msra.mxu0 0
    %3117 = vmatprep.subr.bf16.mxu0 0
    %3118 = vmatpush1.bf16.xpose.msra.mxu0 0
    %3119 = vmatprep.mubr.bf16.mxu0 0
    %3120 = vmatmul.mubr.bf16.gmra.mrb[0].mxu0 %v3082
    %v3121 = vpop.f32.mrb[0].mxu0
    %v3122 = vadd.f32 0.0, %v3121
    %v3123 = vpop.f32.mrb[0].mxu0
    %v3124 = vpop.f32.mrb[0].mxu0
    %v3125 = vpop.f32.mrb[0].mxu0
    %3126 = vdwg.mxu0
    %v3128 = vsel %vm938, %v3021, 0
    %v3131 = vsel %vm938, %v3029, 0
    %3133 = vmatprep.subr.bf16.mxu0 0
    %3134 = vmatpush1.bf16.xpose.msra.mxu0 %v3131
    %3135 = vmatprep.subr.bf16.mxu0 0
    %3136 = vmatpush1.bf16.xpose.msra.mxu0 0
    %3137 = vmatprep.subr.bf16.mxu0 0
    %3138 = vmatpush1.bf16.xpose.msra.mxu0 0
    %3139 = vmatprep.subr.bf16.mxu0 0
    %3140 = vmatpush1.bf16.xpose.msra.mxu0 0
    %3141 = vmatprep.subr.bf16.mxu0 0
    %3142 = vmatpush1.bf16.xpose.msra.mxu0 0
    %3143 = vmatprep.subr.bf16.mxu0 0
    %3144 = vmatpush1.bf16.xpose.msra.mxu0 0
    %3145 = vmatprep.subr.bf16.mxu0 0
    %3146 = vmatpush1.bf16.xpose.msra.mxu0 0
    %3147 = vmatprep.subr.bf16.mxu0 0
    %3148 = vmatpush1.bf16.xpose.msra.mxu0 0
    %3149 = vmatprep.subr.bf16.mxu0 0
    %3150 = vmatpush1.bf16.xpose.msra.mxu0 0
    %3151 = vmatprep.subr.bf16.mxu0 0
    %3152 = vmatpush1.bf16.xpose.msra.mxu0 0
    %3153 = vmatprep.subr.bf16.mxu0 0
    %3154 = vmatpush1.bf16.xpose.msra.mxu0 0
    %3155 = vmatprep.subr.bf16.mxu0 0
    %3156 = vmatpush1.bf16.xpose.msra.mxu0 0
    %3157 = vmatprep.subr.bf16.mxu0 0
    %3158 = vmatpush1.bf16.xpose.msra.mxu0 0
    %3159 = vmatprep.subr.bf16.mxu0 0
    %3160 = vmatpush1.bf16.xpose.msra.mxu0 0
    %3161 = vmatprep.subr.bf16.mxu0 0
    %3162 = vmatpush1.bf16.xpose.msra.mxu0 0
    %3163 = vmatprep.subr.bf16.mxu0 0
    %3164 = vmatpush1.bf16.xpose.msra.mxu0 0
    %3165 = vmatprep.mubr.bf16.mxu0 0
    %3166 = vmatmul.mubr.bf16.gmra.mrb[0].mxu0 %v3128
    %v3167 = vpop.f32.mrb[0].mxu0
    %v3168 = vadd.f32 0.0, %v3167
    %v3169 = vpop.f32.mrb[0].mxu0
    %v3170 = vpop.f32.mrb[0].mxu0
    %v3171 = vpop.f32.mrb[0].mxu0
    %3172 = vdwg.mxu0
    %v3174 = vsel %vm938, %v3022, 0
    %v3177 = vsel %vm938, %v3030, 0
    %3179 = vmatprep.subr.bf16.mxu0 0
    %3180 = vmatpush1.bf16.xpose.msra.mxu0 %v3177
    %3181 = vmatprep.subr.bf16.mxu0 0
    %3182 = vmatpush1.bf16.xpose.msra.mxu0 0
    %3183 = vmatprep.subr.bf16.mxu0 0
    %3184 = vmatpush1.bf16.xpose.msra.mxu0 0
    %3185 = vmatprep.subr.bf16.mxu0 0
    %3186 = vmatpush1.bf16.xpose.msra.mxu0 0
    %3187 = vmatprep.subr.bf16.mxu0 0
    %3188 = vmatpush1.bf16.xpose.msra.mxu0 0
    %3189 = vmatprep.subr.bf16.mxu0 0
    %3190 = vmatpush1.bf16.xpose.msra.mxu0 0
    %3191 = vmatprep.subr.bf16.mxu0 0
    %3192 = vmatpush1.bf16.xpose.msra.mxu0 0
    %3193 = vmatprep.subr.bf16.mxu0 0
    %3194 = vmatpush1.bf16.xpose.msra.mxu0 0
    %3195 = vmatprep.subr.bf16.mxu0 0
    %3196 = vmatpush1.bf16.xpose.msra.mxu0 0
    %3197 = vmatprep.subr.bf16.mxu0 0
    %3198 = vmatpush1.bf16.xpose.msra.mxu0 0
    %3199 = vmatprep.subr.bf16.mxu0 0
    %3200 = vmatpush1.bf16.xpose.msra.mxu0 0
    %3201 = vmatprep.subr.bf16.mxu0 0
    %3202 = vmatpush1.bf16.xpose.msra.mxu0 0
    %3203 = vmatprep.subr.bf16.mxu0 0
    %3204 = vmatpush1.bf16.xpose.msra.mxu0 0
    %3205 = vmatprep.subr.bf16.mxu0 0
    %3206 = vmatpush1.bf16.xpose.msra.mxu0 0
    %3207 = vmatprep.subr.bf16.mxu0 0
    %3208 = vmatpush1.bf16.xpose.msra.mxu0 0
    %3209 = vmatprep.subr.bf16.mxu0 0
    %3210 = vmatpush1.bf16.xpose.msra.mxu0 0
    %3211 = vmatprep.mubr.bf16.mxu0 0
    %3212 = vmatmul.mubr.bf16.gmra.mrb[0].mxu0 %v3174
    %v3213 = vpop.f32.mrb[0].mxu0
    %v3214 = vadd.f32 0.0, %v3213
    %v3215 = vpop.f32.mrb[0].mxu0
    %v3216 = vpop.f32.mrb[0].mxu0
    %v3217 = vpop.f32.mrb[0].mxu0
    %3218 = vdwg.mxu0
    %v3220 = vsel %vm938, %v3023, 0
    %v3223 = vsel %vm938, %v3031, 0
    %3225 = vmatprep.subr.bf16.mxu0 0
    %3226 = vmatpush1.bf16.xpose.msra.mxu0 %v3223
    %3227 = vmatprep.subr.bf16.mxu0 0
    %3228 = vmatpush1.bf16.xpose.msra.mxu0 0
    %3229 = vmatprep.subr.bf16.mxu0 0
    %3230 = vmatpush1.bf16.xpose.msra.mxu0 0
    %3231 = vmatprep.subr.bf16.mxu0 0
    %3232 = vmatpush1.bf16.xpose.msra.mxu0 0
    %3233 = vmatprep.subr.bf16.mxu0 0
    %3234 = vmatpush1.bf16.xpose.msra.mxu0 0
    %3235 = vmatprep.subr.bf16.mxu0 0
    %3236 = vmatpush1.bf16.xpose.msra.mxu0 0
    %3237 = vmatprep.subr.bf16.mxu0 0
    %3238 = vmatpush1.bf16.xpose.msra.mxu0 0
    %3239 = vmatprep.subr.bf16.mxu0 0
    %3240 = vmatpush1.bf16.xpose.msra.mxu0 0
    %3241 = vmatprep.subr.bf16.mxu0 0
    %3242 = vmatpush1.bf16.xpose.msra.mxu0 0
    %3243 = vmatprep.subr.bf16.mxu0 0
    %3244 = vmatpush1.bf16.xpose.msra.mxu0 0
    %3245 = vmatprep.subr.bf16.mxu0 0
    %3246 = vmatpush1.bf16.xpose.msra.mxu0 0
    %3247 = vmatprep.subr.bf16.mxu0 0
    %3248 = vmatpush1.bf16.xpose.msra.mxu0 0
    %3249 = vmatprep.subr.bf16.mxu0 0
    %3250 = vmatpush1.bf16.xpose.msra.mxu0 0
    %3251 = vmatprep.subr.bf16.mxu0 0
    %3252 = vmatpush1.bf16.xpose.msra.mxu0 0
    %3253 = vmatprep.subr.bf16.mxu0 0
    %3254 = vmatpush1.bf16.xpose.msra.mxu0 0
    %3255 = vmatprep.subr.bf16.mxu0 0
    %3256 = vmatpush1.bf16.xpose.msra.mxu0 0
    %3257 = vmatprep.mubr.bf16.mxu0 0
    %3258 = vmatmul.mubr.bf16.gmra.mrb[0].mxu0 %v3220
    %v3259 = vpop.f32.mrb[0].mxu0
    %v3260 = vadd.f32 0.0, %v3259
    %v3261 = vpop.f32.mrb[0].mxu0
    %v3262 = vpop.f32.mrb[0].mxu0
    %v3263 = vpop.f32.mrb[0].mxu0
    %3264 = vdwg.mxu0
    %v3266 = vsel %vm938, %v3024, 0
    %v3269 = vsel %vm938, %v3032, 0
    %3271 = vmatprep.subr.bf16.mxu0 0
    %3272 = vmatpush1.bf16.xpose.msra.mxu0 %v3269
    %3273 = vmatprep.subr.bf16.mxu0 0
    %3274 = vmatpush1.bf16.xpose.msra.mxu0 0
    %3275 = vmatprep.subr.bf16.mxu0 0
    %3276 = vmatpush1.bf16.xpose.msra.mxu0 0
    %3277 = vmatprep.subr.bf16.mxu0 0
    %3278 = vmatpush1.bf16.xpose.msra.mxu0 0
    %3279 = vmatprep.subr.bf16.mxu0 0
    %3280 = vmatpush1.bf16.xpose.msra.mxu0 0
    %3281 = vmatprep.subr.bf16.mxu0 0
    %3282 = vmatpush1.bf16.xpose.msra.mxu0 0
    %3283 = vmatprep.subr.bf16.mxu0 0
    %3284 = vmatpush1.bf16.xpose.msra.mxu0 0
    %3285 = vmatprep.subr.bf16.mxu0 0
    %3286 = vmatpush1.bf16.xpose.msra.mxu0 0
    %3287 = vmatprep.subr.bf16.mxu0 0
    %3288 = vmatpush1.bf16.xpose.msra.mxu0 0
    %3289 = vmatprep.subr.bf16.mxu0 0
    %3290 = vmatpush1.bf16.xpose.msra.mxu0 0
    %3291 = vmatprep.subr.bf16.mxu0 0
    %3292 = vmatpush1.bf16.xpose.msra.mxu0 0
    %3293 = vmatprep.subr.bf16.mxu0 0
    %3294 = vmatpush1.bf16.xpose.msra.mxu0 0
    %3295 = vmatprep.subr.bf16.mxu0 0
    %3296 = vmatpush1.bf16.xpose.msra.mxu0 0
    %3297 = vmatprep.subr.bf16.mxu0 0
    %3298 = vmatpush1.bf16.xpose.msra.mxu0 0
    %3299 = vmatprep.subr.bf16.mxu0 0
    %3300 = vmatpush1.bf16.xpose.msra.mxu0 0
    %3301 = vmatprep.subr.bf16.mxu0 0
    %3302 = vmatpush1.bf16.xpose.msra.mxu0 0
    %3303 = vmatprep.mubr.bf16.mxu0 0
    %3304 = vmatmul.mubr.bf16.gmra.mrb[0].mxu0 %v3266
    %v3305 = vpop.f32.mrb[0].mxu0
    %v3306 = vadd.f32 0.0, %v3305
    %v3307 = vpop.f32.mrb[0].mxu0
    %v3308 = vpop.f32.mrb[0].mxu0
    %v3309 = vpop.f32.mrb[0].mxu0
    %3310 = vdwg.mxu0
    %v3312 = vsel %vm938, %v3025, 0
    %v3315 = vsel %vm938, %v3033, 0
    %3317 = vmatprep.subr.bf16.mxu0 0
    %3318 = vmatpush1.bf16.xpose.msra.mxu0 %v3315
    %3319 = vmatprep.subr.bf16.mxu0 0
    %3320 = vmatpush1.bf16.xpose.msra.mxu0 0
    %3321 = vmatprep.subr.bf16.mxu0 0
    %3322 = vmatpush1.bf16.xpose.msra.mxu0 0
    %3323 = vmatprep.subr.bf16.mxu0 0
    %3324 = vmatpush1.bf16.xpose.msra.mxu0 0
    %3325 = vmatprep.subr.bf16.mxu0 0
    %3326 = vmatpush1.bf16.xpose.msra.mxu0 0
    %3327 = vmatprep.subr.bf16.mxu0 0
    %3328 = vmatpush1.bf16.xpose.msra.mxu0 0
    %3329 = vmatprep.subr.bf16.mxu0 0
    %3330 = vmatpush1.bf16.xpose.msra.mxu0 0
    %3331 = vmatprep.subr.bf16.mxu0 0
    %3332 = vmatpush1.bf16.xpose.msra.mxu0 0
    %3333 = vmatprep.subr.bf16.mxu0 0
    %3334 = vmatpush1.bf16.xpose.msra.mxu0 0
    %3335 = vmatprep.subr.bf16.mxu0 0
    %3336 = vmatpush1.bf16.xpose.msra.mxu0 0
    %3337 = vmatprep.subr.bf16.mxu0 0
    %3338 = vmatpush1.bf16.xpose.msra.mxu0 0
    %3339 = vmatprep.subr.bf16.mxu0 0
    %3340 = vmatpush1.bf16.xpose.msra.mxu0 0
    %3341 = vmatprep.subr.bf16.mxu0 0
    %3342 = vmatpush1.bf16.xpose.msra.mxu0 0
    %3343 = vmatprep.subr.bf16.mxu0 0
    %3344 = vmatpush1.bf16.xpose.msra.mxu0 0
    %3345 = vmatprep.subr.bf16.mxu0 0
    %3346 = vmatpush1.bf16.xpose.msra.mxu0 0
    %3347 = vmatprep.subr.bf16.mxu0 0
    %3348 = vmatpush1.bf16.xpose.msra.mxu0 0
    %3349 = vmatprep.mubr.bf16.mxu0 0
    %3350 = vmatmul.mubr.bf16.gmra.mrb[0].mxu0 %v3312
    %v3351 = vpop.f32.mrb[0].mxu0
    %v3352 = vadd.f32 0.0, %v3351
    %v3353 = vpop.f32.mrb[0].mxu0
    %v3354 = vpop.f32.mrb[0].mxu0
    %v3355 = vpop.f32.mrb[0].mxu0
    %3356 = vdwg.mxu0
    %v3358 = vsel %vm938, %v3026, 0
    %v3361 = vsel %vm938, %v3034, 0
    %3363 = vmatprep.subr.bf16.mxu0 0
    %3364 = vmatpush1.bf16.xpose.msra.mxu0 %v3361
    %3365 = vmatprep.subr.bf16.mxu0 0
    %3366 = vmatpush1.bf16.xpose.msra.mxu0 0
    %3367 = vmatprep.subr.bf16.mxu0 0
    %3368 = vmatpush1.bf16.xpose.msra.mxu0 0
    %3369 = vmatprep.subr.bf16.mxu0 0
    %3370 = vmatpush1.bf16.xpose.msra.mxu0 0
    %3371 = vmatprep.subr.bf16.mxu0 0
    %3372 = vmatpush1.bf16.xpose.msra.mxu0 0
    %3373 = vmatprep.subr.bf16.mxu0 0
    %3374 = vmatpush1.bf16.xpose.msra.mxu0 0
    %3375 = vmatprep.subr.bf16.mxu0 0
    %3376 = vmatpush1.bf16.xpose.msra.mxu0 0
    %3377 = vmatprep.subr.bf16.mxu0 0
    %3378 = vmatpush1.bf16.xpose.msra.mxu0 0
    %3379 = vmatprep.subr.bf16.mxu0 0
    %3380 = vmatpush1.bf16.xpose.msra.mxu0 0
    %3381 = vmatprep.subr.bf16.mxu0 0
    %3382 = vmatpush1.bf16.xpose.msra.mxu0 0
    %3383 = vmatprep.subr.bf16.mxu0 0
    %3384 = vmatpush1.bf16.xpose.msra.mxu0 0
    %3385 = vmatprep.subr.bf16.mxu0 0
    %3386 = vmatpush1.bf16.xpose.msra.mxu0 0
    %3387 = vmatprep.subr.bf16.mxu0 0
    %3388 = vmatpush1.bf16.xpose.msra.mxu0 0
    %3389 = vmatprep.subr.bf16.mxu0 0
    %3390 = vmatpush1.bf16.xpose.msra.mxu0 0
    %3391 = vmatprep.subr.bf16.mxu0 0
    %3392 = vmatpush1.bf16.xpose.msra.mxu0 0
    %3393 = vmatprep.subr.bf16.mxu0 0
    %3394 = vmatpush1.bf16.xpose.msra.mxu0 0
    %3395 = vmatprep.mubr.bf16.mxu0 0
    %3396 = vmatmul.mubr.bf16.gmra.mrb[0].mxu0 %v3358
    %v3397 = vpop.f32.mrb[0].mxu0
    %v3398 = vadd.f32 0.0, %v3397
    %v3399 = vpop.f32.mrb[0].mxu0
    %v3400 = vpop.f32.mrb[0].mxu0
    %v3401 = vpop.f32.mrb[0].mxu0
    %3402 = vdwg.mxu0
    %v3403 = vmul.f32 %v3076, 0.35355338
    %v3404 = vmul.f32 %v3122, 0.35355338
    %v3405 = vmul.f32 %v3168, 0.35355338
    %v3406 = vmul.f32 %v3214, 0.35355338
    %v3407 = vmul.f32 %v3260, 0.35355338
    %v3408 = vmul.f32 %v3306, 0.35355338
    %v3409 = vmul.f32 %v3352, 0.35355338
    %v3410 = vmul.f32 %v3398, 0.35355338
    %v3411 = vsel %vm938, %v3403, -inf
    %3412 = vmax.xlane.f32.xlu0 %v3411
    %v3413 = vpop.xlane.xlu0 %3412
    %v3414 = vsel %vm938, %v3404, -inf
    %3415 = vmax.xlane.f32.xlu0 %v3414
    %v3416 = vpop.xlane.xlu0 %3415
    %v3417 = vsel %vm938, %v3405, -inf
    %3418 = vmax.xlane.f32.xlu0 %v3417
    %v3419 = vpop.xlane.xlu0 %3418
    %v3420 = vsel %vm938, %v3406, -inf
    %3421 = vmax.xlane.f32.xlu0 %v3420
    %v3422 = vpop.xlane.xlu0 %3421
    %v3423 = vsel %vm938, %v3407, -inf
    %3424 = vmax.xlane.f32.xlu0 %v3423
    %v3425 = vpop.xlane.xlu0 %3424
    %v3426 = vsel %vm938, %v3408, -inf
    %3427 = vmax.xlane.f32.xlu0 %v3426
    %v3428 = vpop.xlane.xlu0 %3427
    %v3429 = vsel %vm938, %v3409, -inf
    %3430 = vmax.xlane.f32.xlu0 %v3429
    %v3431 = vpop.xlane.xlu0 %3430
    %v3432 = vsel %vm938, %v3410, -inf
    %3433 = vmax.xlane.f32.xlu0 %v3432
    %v3434 = vpop.xlane.xlu0 %3433
    %v3435 = vsub.f32 %v3403, %v3413
    %v3436 = vsub.f32 %v3404, %v3416
    %v3437 = vsub.f32 %v3405, %v3419
    %v3438 = vsub.f32 %v3406, %v3422
    %v3439 = vsub.f32 %v3407, %v3425
    %v3440 = vsub.f32 %v3408, %v3428
    %v3441 = vsub.f32 %v3409, %v3431
    %v3442 = vsub.f32 %v3410, %v3434
    %v3443 = vmul.f32 %v3435, 1.442695
    %v3444 = vpow.pop %v3443
    %v3445 = vmul.f32 %v3436, 1.442695
    %v3446 = vpow.pop %v3445
    %v3447 = vmul.f32 %v3437, 1.442695
    %v3448 = vpow.pop %v3447
    %v3449 = vmul.f32 %v3438, 1.442695
    %v3450 = vpow.pop %v3449
    %v3451 = vmul.f32 %v3439, 1.442695
    %v3452 = vpow.pop %v3451
    %v3453 = vmul.f32 %v3440, 1.442695
    %v3454 = vpow.pop %v3453
    %v3455 = vmul.f32 %v3441, 1.442695
    %v3456 = vpow.pop %v3455
    %v3457 = vmul.f32 %v3442, 1.442695
    %v3458 = vpow.pop %v3457
    %v3459 = vsel %vm938, %v3444, 0.0
    %3460 = vadd.xlane.f32.xlu0 %v3459
    %v3461 = vpop.xlane.xlu0 %3460
    %v3462 = vsel %vm938, %v3446, 0.0
    %3463 = vadd.xlane.f32.xlu0 %v3462
    %v3464 = vpop.xlane.xlu0 %3463
    %v3465 = vsel %vm938, %v3448, 0.0
    %3466 = vadd.xlane.f32.xlu0 %v3465
    %v3467 = vpop.xlane.xlu0 %3466
    %v3468 = vsel %vm938, %v3450, 0.0
    %3469 = vadd.xlane.f32.xlu0 %v3468
    %v3470 = vpop.xlane.xlu0 %3469
    %v3471 = vsel %vm938, %v3452, 0.0
    %3472 = vadd.xlane.f32.xlu0 %v3471
    %v3473 = vpop.xlane.xlu0 %3472
    %v3474 = vsel %vm938, %v3454, 0.0
    %3475 = vadd.xlane.f32.xlu0 %v3474
    %v3476 = vpop.xlane.xlu0 %3475
    %v3477 = vsel %vm938, %v3456, 0.0
    %3478 = vadd.xlane.f32.xlu0 %v3477
    %v3479 = vpop.xlane.xlu0 %3478
    %v3480 = vsel %vm938, %v3458, 0.0
    %3481 = vadd.xlane.f32.xlu0 %v3480
    %v3482 = vpop.xlane.xlu0 %3481
    %v3483 = vrcp.pop %v3461
    %v3484 = vrcp.pop %v3464
    %v3485 = vrcp.pop %v3467
    %v3486 = vrcp.pop %v3470
    %v3487 = vrcp.pop %v3473
    %v3488 = vrcp.pop %v3476
    %v3489 = vrcp.pop %v3479
    %v3490 = vrcp.pop %v3482
    %v3491 = vmul.f32 %v3444, %v3483
    %v3492 = vmul.f32 %v3446, %v3484
    %v3493 = vmul.f32 %v3448, %v3485
    %v3494 = vmul.f32 %v3450, %v3486
    %v3495 = vmul.f32 %v3452, %v3487
    %v3496 = vmul.f32 %v3454, %v3488
    %v3497 = vmul.f32 %v3456, %v3489
    %v3498 = vmul.f32 %v3458, %v3490
    %v3499 = vpack.c.bf16 %v3491, %v3491
    %v3500 = vpack.c.bf16 %v3492, %v3492
    %v3501 = vpack.c.bf16 %v3493, %v3493
    %v3502 = vpack.c.bf16 %v3494, %v3494
    %v3503 = vpack.c.bf16 %v3495, %v3495
    %v3504 = vpack.c.bf16 %v3496, %v3496
    %v3505 = vpack.c.bf16 %v3497, %v3497
    %v3506 = vpack.c.bf16 %v3498, %v3498
    %3508 = vrot.lane.b32.xlu0 %v3027, 120
    %v3509 = vpop.permute.xlu0 %3508
    %v3511 = vsel %vm938, %v3499, 0
    %v3514 = vsel %vm1417, %v3509, 0
    %3516 = vmatprep.subr.bf16.mxu0 0
    %3517 = vmatpush1.bf16.msra.mxu0 %v3514
    %3518 = vmatprep.subr.bf16.mxu0 0
    %3519 = vmatpush1.bf16.msra.mxu0 0
    %3520 = vmatprep.subr.bf16.mxu0 0
    %3521 = vmatpush1.bf16.msra.mxu0 0
    %3522 = vmatprep.subr.bf16.mxu0 0
    %3523 = vmatpush1.bf16.msra.mxu0 0
    %3524 = vmatprep.subr.bf16.mxu0 0
    %3525 = vmatpush1.bf16.msra.mxu0 0
    %3526 = vmatprep.subr.bf16.mxu0 0
    %3527 = vmatpush1.bf16.msra.mxu0 0
    %3528 = vmatprep.subr.bf16.mxu0 0
    %3529 = vmatpush1.bf16.msra.mxu0 0
    %3530 = vmatprep.subr.bf16.mxu0 0
    %3531 = vmatpush1.bf16.msra.mxu0 0
    %3532 = vmatprep.subr.bf16.mxu0 0
    %3533 = vmatpush1.bf16.msra.mxu0 0
    %3534 = vmatprep.subr.bf16.mxu0 0
    %3535 = vmatpush1.bf16.msra.mxu0 0
    %3536 = vmatprep.subr.bf16.mxu0 0
    %3537 = vmatpush1.bf16.msra.mxu0 0
    %3538 = vmatprep.subr.bf16.mxu0 0
    %3539 = vmatpush1.bf16.msra.mxu0 0
    %3540 = vmatprep.subr.bf16.mxu0 0
    %3541 = vmatpush1.bf16.msra.mxu0 0
    %3542 = vmatprep.subr.bf16.mxu0 0
    %3543 = vmatpush1.bf16.msra.mxu0 0
    %3544 = vmatprep.subr.bf16.mxu0 0
    %3545 = vmatpush1.bf16.msra.mxu0 0
    %3546 = vmatprep.subr.bf16.mxu0 0
    %3547 = vmatpush1.bf16.msra.mxu0 0
    %3548 = vmatprep.mubr.bf16.mxu0 0
    %3549 = vmatmul.mubr.bf16.gmra.mrb[0].mxu0 %v3511
    %v3550 = vpop.f32.mrb[0].mxu0
    %v3551 = vadd.f32 0.0, %v3550
    %v3552 = vpop.f32.mrb[0].mxu0
    %v3553 = vpop.f32.mrb[0].mxu0
    %v3554 = vpop.f32.mrb[0].mxu0
    %3555 = vdwg.mxu0
    %3557 = vrot.lane.b32.xlu0 %v3028, 120
    %v3558 = vpop.permute.xlu0 %3557
    %v3560 = vsel %vm938, %v3500, 0
    %v3563 = vsel %vm1417, %v3558, 0
    %3565 = vmatprep.subr.bf16.mxu0 0
    %3566 = vmatpush1.bf16.msra.mxu0 %v3563
    %3567 = vmatprep.subr.bf16.mxu0 0
    %3568 = vmatpush1.bf16.msra.mxu0 0
    %3569 = vmatprep.subr.bf16.mxu0 0
    %3570 = vmatpush1.bf16.msra.mxu0 0
    %3571 = vmatprep.subr.bf16.mxu0 0
    %3572 = vmatpush1.bf16.msra.mxu0 0
    %3573 = vmatprep.subr.bf16.mxu0 0
    %3574 = vmatpush1.bf16.msra.mxu0 0
    %3575 = vmatprep.subr.bf16.mxu0 0
    %3576 = vmatpush1.bf16.msra.mxu0 0
    %3577 = vmatprep.subr.bf16.mxu0 0
    %3578 = vmatpush1.bf16.msra.mxu0 0
    %3579 = vmatprep.subr.bf16.mxu0 0
    %3580 = vmatpush1.bf16.msra.mxu0 0
    %3581 = vmatprep.subr.bf16.mxu0 0
    %3582 = vmatpush1.bf16.msra.mxu0 0
    %3583 = vmatprep.subr.bf16.mxu0 0
    %3584 = vmatpush1.bf16.msra.mxu0 0
    %3585 = vmatprep.subr.bf16.mxu0 0
    %3586 = vmatpush1.bf16.msra.mxu0 0
    %3587 = vmatprep.subr.bf16.mxu0 0
    %3588 = vmatpush1.bf16.msra.mxu0 0
    %3589 = vmatprep.subr.bf16.mxu0 0
    %3590 = vmatpush1.bf16.msra.mxu0 0
    %3591 = vmatprep.subr.bf16.mxu0 0
    %3592 = vmatpush1.bf16.msra.mxu0 0
    %3593 = vmatprep.subr.bf16.mxu0 0
    %3594 = vmatpush1.bf16.msra.mxu0 0
    %3595 = vmatprep.subr.bf16.mxu0 0
    %3596 = vmatpush1.bf16.msra.mxu0 0
    %3597 = vmatprep.mubr.bf16.mxu0 0
    %3598 = vmatmul.mubr.bf16.gmra.mrb[0].mxu0 %v3560
    %v3599 = vpop.f32.mrb[0].mxu0
    %v3600 = vadd.f32 0.0, %v3599
    %v3601 = vpop.f32.mrb[0].mxu0
    %v3602 = vpop.f32.mrb[0].mxu0
    %v3603 = vpop.f32.mrb[0].mxu0
    %3604 = vdwg.mxu0
    %3606 = vrot.lane.b32.xlu0 %v3029, 120
    %v3607 = vpop.permute.xlu0 %3606
    %v3609 = vsel %vm938, %v3501, 0
    %v3612 = vsel %vm1417, %v3607, 0
    %3614 = vmatprep.subr.bf16.mxu0 0
    %3615 = vmatpush1.bf16.msra.mxu0 %v3612
    %3616 = vmatprep.subr.bf16.mxu0 0
    %3617 = vmatpush1.bf16.msra.mxu0 0
    %3618 = vmatprep.subr.bf16.mxu0 0
    %3619 = vmatpush1.bf16.msra.mxu0 0
    %3620 = vmatprep.subr.bf16.mxu0 0
    %3621 = vmatpush1.bf16.msra.mxu0 0
    %3622 = vmatprep.subr.bf16.mxu0 0
    %3623 = vmatpush1.bf16.msra.mxu0 0
    %3624 = vmatprep.subr.bf16.mxu0 0
    %3625 = vmatpush1.bf16.msra.mxu0 0
    %3626 = vmatprep.subr.bf16.mxu0 0
    %3627 = vmatpush1.bf16.msra.mxu0 0
    %3628 = vmatprep.subr.bf16.mxu0 0
    %3629 = vmatpush1.bf16.msra.mxu0 0
    %3630 = vmatprep.subr.bf16.mxu0 0
    %3631 = vmatpush1.bf16.msra.mxu0 0
    %3632 = vmatprep.subr.bf16.mxu0 0
    %3633 = vmatpush1.bf16.msra.mxu0 0
    %3634 = vmatprep.subr.bf16.mxu0 0
    %3635 = vmatpush1.bf16.msra.mxu0 0
    %3636 = vmatprep.subr.bf16.mxu0 0
    %3637 = vmatpush1.bf16.msra.mxu0 0
    %3638 = vmatprep.subr.bf16.mxu0 0
    %3639 = vmatpush1.bf16.msra.mxu0 0
    %3640 = vmatprep.subr.bf16.mxu0 0
    %3641 = vmatpush1.bf16.msra.mxu0 0
    %3642 = vmatprep.subr.bf16.mxu0 0
    %3643 = vmatpush1.bf16.msra.mxu0 0
    %3644 = vmatprep.subr.bf16.mxu0 0
    %3645 = vmatpush1.bf16.msra.mxu0 0
    %3646 = vmatprep.mubr.bf16.mxu0 0
    %3647 = vmatmul.mubr.bf16.gmra.mrb[0].mxu0 %v3609
    %v3648 = vpop.f32.mrb[0].mxu0
    %v3649 = vadd.f32 0.0, %v3648
    %v3650 = vpop.f32.mrb[0].mxu0
    %v3651 = vpop.f32.mrb[0].mxu0
    %v3652 = vpop.f32.mrb[0].mxu0
    %3653 = vdwg.mxu0
    %3655 = vrot.lane.b32.xlu0 %v3030, 120
    %v3656 = vpop.permute.xlu0 %3655
    %v3658 = vsel %vm938, %v3502, 0
    %v3661 = vsel %vm1417, %v3656, 0
    %3663 = vmatprep.subr.bf16.mxu0 0
    %3664 = vmatpush1.bf16.msra.mxu0 %v3661
    %3665 = vmatprep.subr.bf16.mxu0 0
    %3666 = vmatpush1.bf16.msra.mxu0 0
    %3667 = vmatprep.subr.bf16.mxu0 0
    %3668 = vmatpush1.bf16.msra.mxu0 0
    %3669 = vmatprep.subr.bf16.mxu0 0
    %3670 = vmatpush1.bf16.msra.mxu0 0
    %3671 = vmatprep.subr.bf16.mxu0 0
    %3672 = vmatpush1.bf16.msra.mxu0 0
    %3673 = vmatprep.subr.bf16.mxu0 0
    %3674 = vmatpush1.bf16.msra.mxu0 0
    %3675 = vmatprep.subr.bf16.mxu0 0
    %3676 = vmatpush1.bf16.msra.mxu0 0
    %3677 = vmatprep.subr.bf16.mxu0 0
    %3678 = vmatpush1.bf16.msra.mxu0 0
    %3679 = vmatprep.subr.bf16.mxu0 0
    %3680 = vmatpush1.bf16.msra.mxu0 0
    %3681 = vmatprep.subr.bf16.mxu0 0
    %3682 = vmatpush1.bf16.msra.mxu0 0
    %3683 = vmatprep.subr.bf16.mxu0 0
    %3684 = vmatpush1.bf16.msra.mxu0 0
    %3685 = vmatprep.subr.bf16.mxu0 0
    %3686 = vmatpush1.bf16.msra.mxu0 0
    %3687 = vmatprep.subr.bf16.mxu0 0
    %3688 = vmatpush1.bf16.msra.mxu0 0
    %3689 = vmatprep.subr.bf16.mxu0 0
    %3690 = vmatpush1.bf16.msra.mxu0 0
    %3691 = vmatprep.subr.bf16.mxu0 0
    %3692 = vmatpush1.bf16.msra.mxu0 0
    %3693 = vmatprep.subr.bf16.mxu0 0
    %3694 = vmatpush1.bf16.msra.mxu0 0
    %3695 = vmatprep.mubr.bf16.mxu0 0
    %3696 = vmatmul.mubr.bf16.gmra.mrb[0].mxu0 %v3658
    %v3697 = vpop.f32.mrb[0].mxu0
    %v3698 = vadd.f32 0.0, %v3697
    %v3699 = vpop.f32.mrb[0].mxu0
    %v3700 = vpop.f32.mrb[0].mxu0
    %v3701 = vpop.f32.mrb[0].mxu0
    %3702 = vdwg.mxu0
    %3704 = vrot.lane.b32.xlu0 %v3031, 120
    %v3705 = vpop.permute.xlu0 %3704
    %v3707 = vsel %vm938, %v3503, 0
    %v3710 = vsel %vm1417, %v3705, 0
    %3712 = vmatprep.subr.bf16.mxu0 0
    %3713 = vmatpush1.bf16.msra.mxu0 %v3710
    %3714 = vmatprep.subr.bf16.mxu0 0
    %3715 = vmatpush1.bf16.msra.mxu0 0
    %3716 = vmatprep.subr.bf16.mxu0 0
    %3717 = vmatpush1.bf16.msra.mxu0 0
    %3718 = vmatprep.subr.bf16.mxu0 0
    %3719 = vmatpush1.bf16.msra.mxu0 0
    %3720 = vmatprep.subr.bf16.mxu0 0
    %3721 = vmatpush1.bf16.msra.mxu0 0
    %3722 = vmatprep.subr.bf16.mxu0 0
    %3723 = vmatpush1.bf16.msra.mxu0 0
    %3724 = vmatprep.subr.bf16.mxu0 0
    %3725 = vmatpush1.bf16.msra.mxu0 0
    %3726 = vmatprep.subr.bf16.mxu0 0
    %3727 = vmatpush1.bf16.msra.mxu0 0
    %3728 = vmatprep.subr.bf16.mxu0 0
    %3729 = vmatpush1.bf16.msra.mxu0 0
    %3730 = vmatprep.subr.bf16.mxu0 0
    %3731 = vmatpush1.bf16.msra.mxu0 0
    %3732 = vmatprep.subr.bf16.mxu0 0
    %3733 = vmatpush1.bf16.msra.mxu0 0
    %3734 = vmatprep.subr.bf16.mxu0 0
    %3735 = vmatpush1.bf16.msra.mxu0 0
    %3736 = vmatprep.subr.bf16.mxu0 0
    %3737 = vmatpush1.bf16.msra.mxu0 0
    %3738 = vmatprep.subr.bf16.mxu0 0
    %3739 = vmatpush1.bf16.msra.mxu0 0
    %3740 = vmatprep.subr.bf16.mxu0 0
    %3741 = vmatpush1.bf16.msra.mxu0 0
    %3742 = vmatprep.subr.bf16.mxu0 0
    %3743 = vmatpush1.bf16.msra.mxu0 0
    %3744 = vmatprep.mubr.bf16.mxu0 0
    %3745 = vmatmul.mubr.bf16.gmra.mrb[0].mxu0 %v3707
    %v3746 = vpop.f32.mrb[0].mxu0
    %v3747 = vadd.f32 0.0, %v3746
    %v3748 = vpop.f32.mrb[0].mxu0
    %v3749 = vpop.f32.mrb[0].mxu0
    %v3750 = vpop.f32.mrb[0].mxu0
    %3751 = vdwg.mxu0
    %3753 = vrot.lane.b32.xlu0 %v3032, 120
    %v3754 = vpop.permute.xlu0 %3753
    %v3756 = vsel %vm938, %v3504, 0
    %v3759 = vsel %vm1417, %v3754, 0
    %3761 = vmatprep.subr.bf16.mxu0 0
    %3762 = vmatpush1.bf16.msra.mxu0 %v3759
    %3763 = vmatprep.subr.bf16.mxu0 0
    %3764 = vmatpush1.bf16.msra.mxu0 0
    %3765 = vmatprep.subr.bf16.mxu0 0
    %3766 = vmatpush1.bf16.msra.mxu0 0
    %3767 = vmatprep.subr.bf16.mxu0 0
    %3768 = vmatpush1.bf16.msra.mxu0 0
    %3769 = vmatprep.subr.bf16.mxu0 0
    %3770 = vmatpush1.bf16.msra.mxu0 0
    %3771 = vmatprep.subr.bf16.mxu0 0
    %3772 = vmatpush1.bf16.msra.mxu0 0
    %3773 = vmatprep.subr.bf16.mxu0 0
    %3774 = vmatpush1.bf16.msra.mxu0 0
    %3775 = vmatprep.subr.bf16.mxu0 0
    %3776 = vmatpush1.bf16.msra.mxu0 0
    %3777 = vmatprep.subr.bf16.mxu0 0
    %3778 = vmatpush1.bf16.msra.mxu0 0
    %3779 = vmatprep.subr.bf16.mxu0 0
    %3780 = vmatpush1.bf16.msra.mxu0 0
    %3781 = vmatprep.subr.bf16.mxu0 0
    %3782 = vmatpush1.bf16.msra.mxu0 0
    %3783 = vmatprep.subr.bf16.mxu0 0
    %3784 = vmatpush1.bf16.msra.mxu0 0
    %3785 = vmatprep.subr.bf16.mxu0 0
    %3786 = vmatpush1.bf16.msra.mxu0 0
    %3787 = vmatprep.subr.bf16.mxu0 0
    %3788 = vmatpush1.bf16.msra.mxu0 0
    %3789 = vmatprep.subr.bf16.mxu0 0
    %3790 = vmatpush1.bf16.msra.mxu0 0
    %3791 = vmatprep.subr.bf16.mxu0 0
    %3792 = vmatpush1.bf16.msra.mxu0 0
    %3793 = vmatprep.mubr.bf16.mxu0 0
    %3794 = vmatmul.mubr.bf16.gmra.mrb[0].mxu0 %v3756
    %v3795 = vpop.f32.mrb[0].mxu0
    %v3796 = vadd.f32 0.0, %v3795
    %v3797 = vpop.f32.mrb[0].mxu0
    %v3798 = vpop.f32.mrb[0].mxu0
    %v3799 = vpop.f32.mrb[0].mxu0
    %3800 = vdwg.mxu0
    %3802 = vrot.lane.b32.xlu0 %v3033, 120
    %v3803 = vpop.permute.xlu0 %3802
    %v3805 = vsel %vm938, %v3505, 0
    %v3808 = vsel %vm1417, %v3803, 0
    %3810 = vmatprep.subr.bf16.mxu0 0
    %3811 = vmatpush1.bf16.msra.mxu0 %v3808
    %3812 = vmatprep.subr.bf16.mxu0 0
    %3813 = vmatpush1.bf16.msra.mxu0 0
    %3814 = vmatprep.subr.bf16.mxu0 0
    %3815 = vmatpush1.bf16.msra.mxu0 0
    %3816 = vmatprep.subr.bf16.mxu0 0
    %3817 = vmatpush1.bf16.msra.mxu0 0
    %3818 = vmatprep.subr.bf16.mxu0 0
    %3819 = vmatpush1.bf16.msra.mxu0 0
    %3820 = vmatprep.subr.bf16.mxu0 0
    %3821 = vmatpush1.bf16.msra.mxu0 0
    %3822 = vmatprep.subr.bf16.mxu0 0
    %3823 = vmatpush1.bf16.msra.mxu0 0
    %3824 = vmatprep.subr.bf16.mxu0 0
    %3825 = vmatpush1.bf16.msra.mxu0 0
    %3826 = vmatprep.subr.bf16.mxu0 0
    %3827 = vmatpush1.bf16.msra.mxu0 0
    %3828 = vmatprep.subr.bf16.mxu0 0
    %3829 = vmatpush1.bf16.msra.mxu0 0
    %3830 = vmatprep.subr.bf16.mxu0 0
    %3831 = vmatpush1.bf16.msra.mxu0 0
    %3832 = vmatprep.subr.bf16.mxu0 0
    %3833 = vmatpush1.bf16.msra.mxu0 0
    %3834 = vmatprep.subr.bf16.mxu0 0
    %3835 = vmatpush1.bf16.msra.mxu0 0
    %3836 = vmatprep.subr.bf16.mxu0 0
    %3837 = vmatpush1.bf16.msra.mxu0 0
    %3838 = vmatprep.subr.bf16.mxu0 0
    %3839 = vmatpush1.bf16.msra.mxu0 0
    %3840 = vmatprep.subr.bf16.mxu0 0
    %3841 = vmatpush1.bf16.msra.mxu0 0
    %3842 = vmatprep.mubr.bf16.mxu0 0
    %3843 = vmatmul.mubr.bf16.gmra.mrb[0].mxu0 %v3805
    %v3844 = vpop.f32.mrb[0].mxu0
    %v3845 = vadd.f32 0.0, %v3844
    %v3846 = vpop.f32.mrb[0].mxu0
    %v3847 = vpop.f32.mrb[0].mxu0
    %v3848 = vpop.f32.mrb[0].mxu0
    %3849 = vdwg.mxu0
    %3851 = vrot.lane.b32.xlu0 %v3034, 120
    %v3852 = vpop.permute.xlu0 %3851
    %v3854 = vsel %vm938, %v3506, 0
    %v3857 = vsel %vm1417, %v3852, 0
    %3859 = vmatprep.subr.bf16.mxu0 0
    %3860 = vmatpush1.bf16.msra.mxu0 %v3857
    %3861 = vmatprep.subr.bf16.mxu0 0
    %3862 = vmatpush1.bf16.msra.mxu0 0
    %3863 = vmatprep.subr.bf16.mxu0 0
    %3864 = vmatpush1.bf16.msra.mxu0 0
    %3865 = vmatprep.subr.bf16.mxu0 0
    %3866 = vmatpush1.bf16.msra.mxu0 0
    %3867 = vmatprep.subr.bf16.mxu0 0
    %3868 = vmatpush1.bf16.msra.mxu0 0
    %3869 = vmatprep.subr.bf16.mxu0 0
    %3870 = vmatpush1.bf16.msra.mxu0 0
    %3871 = vmatprep.subr.bf16.mxu0 0
    %3872 = vmatpush1.bf16.msra.mxu0 0
    %3873 = vmatprep.subr.bf16.mxu0 0
    %3874 = vmatpush1.bf16.msra.mxu0 0
    %3875 = vmatprep.subr.bf16.mxu0 0
    %3876 = vmatpush1.bf16.msra.mxu0 0
    %3877 = vmatprep.subr.bf16.mxu0 0
    %3878 = vmatpush1.bf16.msra.mxu0 0
    %3879 = vmatprep.subr.bf16.mxu0 0
    %3880 = vmatpush1.bf16.msra.mxu0 0
    %3881 = vmatprep.subr.bf16.mxu0 0
    %3882 = vmatpush1.bf16.msra.mxu0 0
    %3883 = vmatprep.subr.bf16.mxu0 0
    %3884 = vmatpush1.bf16.msra.mxu0 0
    %3885 = vmatprep.subr.bf16.mxu0 0
    %3886 = vmatpush1.bf16.msra.mxu0 0
    %3887 = vmatprep.subr.bf16.mxu0 0
    %3888 = vmatpush1.bf16.msra.mxu0 0
    %3889 = vmatprep.subr.bf16.mxu0 0
    %3890 = vmatpush1.bf16.msra.mxu0 0
    %3891 = vmatprep.mubr.bf16.mxu0 0
    %3892 = vmatmul.mubr.bf16.gmra.mrb[0].mxu0 %v3854
    %v3893 = vpop.f32.mrb[0].mxu0
    %v3894 = vadd.f32 0.0, %v3893
    %v3895 = vpop.f32.mrb[0].mxu0
    %v3896 = vpop.f32.mrb[0].mxu0
    %v3897 = vpop.f32.mrb[0].mxu0
    %3898 = vdwg.mxu0
    %v3899 = vpack.c.bf16 %v3551, %v3551
    %v3900 = vpack.c.bf16 %v3600, %v3600
    %v3901 = vpack.c.bf16 %v3649, %v3649
    %v3902 = vpack.c.bf16 %v3698, %v3698
    %v3903 = vpack.c.bf16 %v3747, %v3747
    %v3904 = vpack.c.bf16 %v3796, %v3796
    %v3905 = vpack.c.bf16 %v3845, %v3845
    %v3906 = vpack.c.bf16 %v3894, %v3894
    %v3908 = vsel %vm938, %v3899, 0
    %v3911 = vsel %vm1417, %v2231, 0
    %3913 = vmatprep.subr.bf16.mxu0 0
    %3914 = vmatpush1.bf16.msra.mxu0 %v3911
    %3915 = vmatprep.subr.bf16.mxu0 0
    %3916 = vmatpush1.bf16.msra.mxu0 0
    %3917 = vmatprep.subr.bf16.mxu0 0
    %3918 = vmatpush1.bf16.msra.mxu0 0
    %3919 = vmatprep.subr.bf16.mxu0 0
    %3920 = vmatpush1.bf16.msra.mxu0 0
    %3921 = vmatprep.subr.bf16.mxu0 0
    %3922 = vmatpush1.bf16.msra.mxu0 0
    %3923 = vmatprep.subr.bf16.mxu0 0
    %3924 = vmatpush1.bf16.msra.mxu0 0
    %3925 = vmatprep.subr.bf16.mxu0 0
    %3926 = vmatpush1.bf16.msra.mxu0 0
    %3927 = vmatprep.subr.bf16.mxu0 0
    %3928 = vmatpush1.bf16.msra.mxu0 0
    %3929 = vmatprep.subr.bf16.mxu0 0
    %3930 = vmatpush1.bf16.msra.mxu0 0
    %3931 = vmatprep.subr.bf16.mxu0 0
    %3932 = vmatpush1.bf16.msra.mxu0 0
    %3933 = vmatprep.subr.bf16.mxu0 0
    %3934 = vmatpush1.bf16.msra.mxu0 0
    %3935 = vmatprep.subr.bf16.mxu0 0
    %3936 = vmatpush1.bf16.msra.mxu0 0
    %3937 = vmatprep.subr.bf16.mxu0 0
    %3938 = vmatpush1.bf16.msra.mxu0 0
    %3939 = vmatprep.subr.bf16.mxu0 0
    %3940 = vmatpush1.bf16.msra.mxu0 0
    %3941 = vmatprep.subr.bf16.mxu0 0
    %3942 = vmatpush1.bf16.msra.mxu0 0
    %3943 = vmatprep.subr.bf16.mxu0 0
    %3944 = vmatpush1.bf16.msra.mxu0 0
    %3945 = vmatprep.mubr.bf16.mxu0 0
    %3946 = vmatmul.mubr.bf16.gmra.mrb[0].mxu0 %v3908
    %v3947 = vpop.f32.mrb[0].mxu0
    %v3948 = vadd.f32 0.0, %v3947
    %v3949 = vpop.f32.mrb[0].mxu0
    %v3950 = vpop.f32.mrb[0].mxu0
    %v3951 = vpop.f32.mrb[0].mxu0
    %3952 = vdwg.mxu0
    %v3954 = vsel %vm938, %v3900, 0
    %v3957 = vsel %vm1417, %v2232, 0
    %3959 = vmatprep.subr.bf16.mxu0 0
    %3960 = vmatpush1.bf16.msra.mxu0 %v3957
    %3961 = vmatprep.subr.bf16.mxu0 0
    %3962 = vmatpush1.bf16.msra.mxu0 0
    %3963 = vmatprep.subr.bf16.mxu0 0
    %3964 = vmatpush1.bf16.msra.mxu0 0
    %3965 = vmatprep.subr.bf16.mxu0 0
    %3966 = vmatpush1.bf16.msra.mxu0 0
    %3967 = vmatprep.subr.bf16.mxu0 0
    %3968 = vmatpush1.bf16.msra.mxu0 0
    %3969 = vmatprep.subr.bf16.mxu0 0
    %3970 = vmatpush1.bf16.msra.mxu0 0
    %3971 = vmatprep.subr.bf16.mxu0 0
    %3972 = vmatpush1.bf16.msra.mxu0 0
    %3973 = vmatprep.subr.bf16.mxu0 0
    %3974 = vmatpush1.bf16.msra.mxu0 0
    %3975 = vmatprep.subr.bf16.mxu0 0
    %3976 = vmatpush1.bf16.msra.mxu0 0
    %3977 = vmatprep.subr.bf16.mxu0 0
    %3978 = vmatpush1.bf16.msra.mxu0 0
    %3979 = vmatprep.subr.bf16.mxu0 0
    %3980 = vmatpush1.bf16.msra.mxu0 0
    %3981 = vmatprep.subr.bf16.mxu0 0
    %3982 = vmatpush1.bf16.msra.mxu0 0
    %3983 = vmatprep.subr.bf16.mxu0 0
    %3984 = vmatpush1.bf16.msra.mxu0 0
    %3985 = vmatprep.subr.bf16.mxu0 0
    %3986 = vmatpush1.bf16.msra.mxu0 0
    %3987 = vmatprep.subr.bf16.mxu0 0
    %3988 = vmatpush1.bf16.msra.mxu0 0
    %3989 = vmatprep.subr.bf16.mxu0 0
    %3990 = vmatpush1.bf16.msra.mxu0 0
    %3991 = vmatprep.mubr.bf16.mxu0 0
    %3992 = vmatmul.mubr.bf16.gmra.mrb[0].mxu0 %v3954
    %v3993 = vpop.f32.mrb[0].mxu0
    %v3994 = vadd.f32 0.0, %v3993
    %v3995 = vpop.f32.mrb[0].mxu0
    %v3996 = vpop.f32.mrb[0].mxu0
    %v3997 = vpop.f32.mrb[0].mxu0
    %3998 = vdwg.mxu0
    %v4000 = vsel %vm938, %v3901, 0
    %v4003 = vsel %vm1417, %v2233, 0
    %4005 = vmatprep.subr.bf16.mxu0 0
    %4006 = vmatpush1.bf16.msra.mxu0 %v4003
    %4007 = vmatprep.subr.bf16.mxu0 0
    %4008 = vmatpush1.bf16.msra.mxu0 0
    %4009 = vmatprep.subr.bf16.mxu0 0
    %4010 = vmatpush1.bf16.msra.mxu0 0
    %4011 = vmatprep.subr.bf16.mxu0 0
    %4012 = vmatpush1.bf16.msra.mxu0 0
    %4013 = vmatprep.subr.bf16.mxu0 0
    %4014 = vmatpush1.bf16.msra.mxu0 0
    %4015 = vmatprep.subr.bf16.mxu0 0
    %4016 = vmatpush1.bf16.msra.mxu0 0
    %4017 = vmatprep.subr.bf16.mxu0 0
    %4018 = vmatpush1.bf16.msra.mxu0 0
    %4019 = vmatprep.subr.bf16.mxu0 0
    %4020 = vmatpush1.bf16.msra.mxu0 0
    %4021 = vmatprep.subr.bf16.mxu0 0
    %4022 = vmatpush1.bf16.msra.mxu0 0
    %4023 = vmatprep.subr.bf16.mxu0 0
    %4024 = vmatpush1.bf16.msra.mxu0 0
    %4025 = vmatprep.subr.bf16.mxu0 0
    %4026 = vmatpush1.bf16.msra.mxu0 0
    %4027 = vmatprep.subr.bf16.mxu0 0
    %4028 = vmatpush1.bf16.msra.mxu0 0
    %4029 = vmatprep.subr.bf16.mxu0 0
    %4030 = vmatpush1.bf16.msra.mxu0 0
    %4031 = vmatprep.subr.bf16.mxu0 0
    %4032 = vmatpush1.bf16.msra.mxu0 0
    %4033 = vmatprep.subr.bf16.mxu0 0
    %4034 = vmatpush1.bf16.msra.mxu0 0
    %4035 = vmatprep.subr.bf16.mxu0 0
    %4036 = vmatpush1.bf16.msra.mxu0 0
    %4037 = vmatprep.mubr.bf16.mxu0 0
    %4038 = vmatmul.mubr.bf16.gmra.mrb[0].mxu0 %v4000
    %v4039 = vpop.f32.mrb[0].mxu0
    %v4040 = vadd.f32 0.0, %v4039
    %v4041 = vpop.f32.mrb[0].mxu0
    %v4042 = vpop.f32.mrb[0].mxu0
    %v4043 = vpop.f32.mrb[0].mxu0
    %4044 = vdwg.mxu0
    %v4046 = vsel %vm938, %v3902, 0
    %v4049 = vsel %vm1417, %v2234, 0
    %4051 = vmatprep.subr.bf16.mxu0 0
    %4052 = vmatpush1.bf16.msra.mxu0 %v4049
    %4053 = vmatprep.subr.bf16.mxu0 0
    %4054 = vmatpush1.bf16.msra.mxu0 0
    %4055 = vmatprep.subr.bf16.mxu0 0
    %4056 = vmatpush1.bf16.msra.mxu0 0
    %4057 = vmatprep.subr.bf16.mxu0 0
    %4058 = vmatpush1.bf16.msra.mxu0 0
    %4059 = vmatprep.subr.bf16.mxu0 0
    %4060 = vmatpush1.bf16.msra.mxu0 0
    %4061 = vmatprep.subr.bf16.mxu0 0
    %4062 = vmatpush1.bf16.msra.mxu0 0
    %4063 = vmatprep.subr.bf16.mxu0 0
    %4064 = vmatpush1.bf16.msra.mxu0 0
    %4065 = vmatprep.subr.bf16.mxu0 0
    %4066 = vmatpush1.bf16.msra.mxu0 0
    %4067 = vmatprep.subr.bf16.mxu0 0
    %4068 = vmatpush1.bf16.msra.mxu0 0
    %4069 = vmatprep.subr.bf16.mxu0 0
    %4070 = vmatpush1.bf16.msra.mxu0 0
    %4071 = vmatprep.subr.bf16.mxu0 0
    %4072 = vmatpush1.bf16.msra.mxu0 0
    %4073 = vmatprep.subr.bf16.mxu0 0
    %4074 = vmatpush1.bf16.msra.mxu0 0
    %4075 = vmatprep.subr.bf16.mxu0 0
    %4076 = vmatpush1.bf16.msra.mxu0 0
    %4077 = vmatprep.subr.bf16.mxu0 0
    %4078 = vmatpush1.bf16.msra.mxu0 0
    %4079 = vmatprep.subr.bf16.mxu0 0
    %4080 = vmatpush1.bf16.msra.mxu0 0
    %4081 = vmatprep.subr.bf16.mxu0 0
    %4082 = vmatpush1.bf16.msra.mxu0 0
    %4083 = vmatprep.mubr.bf16.mxu0 0
    %4084 = vmatmul.mubr.bf16.gmra.mrb[0].mxu0 %v4046
    %v4085 = vpop.f32.mrb[0].mxu0
    %v4086 = vadd.f32 0.0, %v4085
    %v4087 = vpop.f32.mrb[0].mxu0
    %v4088 = vpop.f32.mrb[0].mxu0
    %v4089 = vpop.f32.mrb[0].mxu0
    %4090 = vdwg.mxu0
    %v4092 = vsel %vm938, %v3903, 0
    %4094 = vmatprep.subr.bf16.mxu0 0
    %4095 = vmatpush1.bf16.msra.mxu0 %v3911
    %4096 = vmatprep.subr.bf16.mxu0 0
    %4097 = vmatpush1.bf16.msra.mxu0 0
    %4098 = vmatprep.subr.bf16.mxu0 0
    %4099 = vmatpush1.bf16.msra.mxu0 0
    %4100 = vmatprep.subr.bf16.mxu0 0
    %4101 = vmatpush1.bf16.msra.mxu0 0
    %4102 = vmatprep.subr.bf16.mxu0 0
    %4103 = vmatpush1.bf16.msra.mxu0 0
    %4104 = vmatprep.subr.bf16.mxu0 0
    %4105 = vmatpush1.bf16.msra.mxu0 0
    %4106 = vmatprep.subr.bf16.mxu0 0
    %4107 = vmatpush1.bf16.msra.mxu0 0
    %4108 = vmatprep.subr.bf16.mxu0 0
    %4109 = vmatpush1.bf16.msra.mxu0 0
    %4110 = vmatprep.subr.bf16.mxu0 0
    %4111 = vmatpush1.bf16.msra.mxu0 0
    %4112 = vmatprep.subr.bf16.mxu0 0
    %4113 = vmatpush1.bf16.msra.mxu0 0
    %4114 = vmatprep.subr.bf16.mxu0 0
    %4115 = vmatpush1.bf16.msra.mxu0 0
    %4116 = vmatprep.subr.bf16.mxu0 0
    %4117 = vmatpush1.bf16.msra.mxu0 0
    %4118 = vmatprep.subr.bf16.mxu0 0
    %4119 = vmatpush1.bf16.msra.mxu0 0
    %4120 = vmatprep.subr.bf16.mxu0 0
    %4121 = vmatpush1.bf16.msra.mxu0 0
    %4122 = vmatprep.subr.bf16.mxu0 0
    %4123 = vmatpush1.bf16.msra.mxu0 0
    %4124 = vmatprep.subr.bf16.mxu0 0
    %4125 = vmatpush1.bf16.msra.mxu0 0
    %4126 = vmatprep.mubr.bf16.mxu0 0
    %4127 = vmatmul.mubr.bf16.gmra.mrb[0].mxu0 %v4092
    %v4128 = vpop.f32.mrb[0].mxu0
    %v4129 = vadd.f32 0.0, %v4128
    %v4130 = vpop.f32.mrb[0].mxu0
    %v4131 = vpop.f32.mrb[0].mxu0
    %v4132 = vpop.f32.mrb[0].mxu0
    %4133 = vdwg.mxu0
    %v4135 = vsel %vm938, %v3904, 0
    %4137 = vmatprep.subr.bf16.mxu0 0
    %4138 = vmatpush1.bf16.msra.mxu0 %v3957
    %4139 = vmatprep.subr.bf16.mxu0 0
    %4140 = vmatpush1.bf16.msra.mxu0 0
    %4141 = vmatprep.subr.bf16.mxu0 0
    %4142 = vmatpush1.bf16.msra.mxu0 0
    %4143 = vmatprep.subr.bf16.mxu0 0
    %4144 = vmatpush1.bf16.msra.mxu0 0
    %4145 = vmatprep.subr.bf16.mxu0 0
    %4146 = vmatpush1.bf16.msra.mxu0 0
    %4147 = vmatprep.subr.bf16.mxu0 0
    %4148 = vmatpush1.bf16.msra.mxu0 0
    %4149 = vmatprep.subr.bf16.mxu0 0
    %4150 = vmatpush1.bf16.msra.mxu0 0
    %4151 = vmatprep.subr.bf16.mxu0 0
    %4152 = vmatpush1.bf16.msra.mxu0 0
    %4153 = vmatprep.subr.bf16.mxu0 0
    %4154 = vmatpush1.bf16.msra.mxu0 0
    %4155 = vmatprep.subr.bf16.mxu0 0
    %4156 = vmatpush1.bf16.msra.mxu0 0
    %4157 = vmatprep.subr.bf16.mxu0 0
    %4158 = vmatpush1.bf16.msra.mxu0 0
    %4159 = vmatprep.subr.bf16.mxu0 0
    %4160 = vmatpush1.bf16.msra.mxu0 0
    %4161 = vmatprep.subr.bf16.mxu0 0
    %4162 = vmatpush1.bf16.msra.mxu0 0
    %4163 = vmatprep.subr.bf16.mxu0 0
    %4164 = vmatpush1.bf16.msra.mxu0 0
    %4165 = vmatprep.subr.bf16.mxu0 0
    %4166 = vmatpush1.bf16.msra.mxu0 0
    %4167 = vmatprep.subr.bf16.mxu0 0
    %4168 = vmatpush1.bf16.msra.mxu0 0
    %4169 = vmatprep.mubr.bf16.mxu0 0
    %4170 = vmatmul.mubr.bf16.gmra.mrb[0].mxu0 %v4135
    %v4171 = vpop.f32.mrb[0].mxu0
    %v4172 = vadd.f32 0.0, %v4171
    %v4173 = vpop.f32.mrb[0].mxu0
    %v4174 = vpop.f32.mrb[0].mxu0
    %v4175 = vpop.f32.mrb[0].mxu0
    %4176 = vdwg.mxu0
    %v4178 = vsel %vm938, %v3905, 0
    %4180 = vmatprep.subr.bf16.mxu0 0
    %4181 = vmatpush1.bf16.msra.mxu0 %v4003
    %4182 = vmatprep.subr.bf16.mxu0 0
    %4183 = vmatpush1.bf16.msra.mxu0 0
    %4184 = vmatprep.subr.bf16.mxu0 0
    %4185 = vmatpush1.bf16.msra.mxu0 0
    %4186 = vmatprep.subr.bf16.mxu0 0
    %4187 = vmatpush1.bf16.msra.mxu0 0
    %4188 = vmatprep.subr.bf16.mxu0 0
    %4189 = vmatpush1.bf16.msra.mxu0 0
    %4190 = vmatprep.subr.bf16.mxu0 0
    %4191 = vmatpush1.bf16.msra.mxu0 0
    %4192 = vmatprep.subr.bf16.mxu0 0
    %4193 = vmatpush1.bf16.msra.mxu0 0
    %4194 = vmatprep.subr.bf16.mxu0 0
    %4195 = vmatpush1.bf16.msra.mxu0 0
    %4196 = vmatprep.subr.bf16.mxu0 0
    %4197 = vmatpush1.bf16.msra.mxu0 0
    %4198 = vmatprep.subr.bf16.mxu0 0
    %4199 = vmatpush1.bf16.msra.mxu0 0
    %4200 = vmatprep.subr.bf16.mxu0 0
    %4201 = vmatpush1.bf16.msra.mxu0 0
    %4202 = vmatprep.subr.bf16.mxu0 0
    %4203 = vmatpush1.bf16.msra.mxu0 0
    %4204 = vmatprep.subr.bf16.mxu0 0
    %4205 = vmatpush1.bf16.msra.mxu0 0
    %4206 = vmatprep.subr.bf16.mxu0 0
    %4207 = vmatpush1.bf16.msra.mxu0 0
    %4208 = vmatprep.subr.bf16.mxu0 0
    %4209 = vmatpush1.bf16.msra.mxu0 0
    %4210 = vmatprep.subr.bf16.mxu0 0
    %4211 = vmatpush1.bf16.msra.mxu0 0
    %4212 = vmatprep.mubr.bf16.mxu0 0
    %4213 = vmatmul.mubr.bf16.gmra.mrb[0].mxu0 %v4178
    %v4214 = vpop.f32.mrb[0].mxu0
    %v4215 = vadd.f32 0.0, %v4214
    %v4216 = vpop.f32.mrb[0].mxu0
    %v4217 = vpop.f32.mrb[0].mxu0
    %v4218 = vpop.f32.mrb[0].mxu0
    %4219 = vdwg.mxu0
    %v4221 = vsel %vm938, %v3906, 0
    %4223 = vmatprep.subr.bf16.mxu0 0
    %4224 = vmatpush1.bf16.msra.mxu0 %v4049
    %4225 = vmatprep.subr.bf16.mxu0 0
    %4226 = vmatpush1.bf16.msra.mxu0 0
    %4227 = vmatprep.subr.bf16.mxu0 0
    %4228 = vmatpush1.bf16.msra.mxu0 0
    %4229 = vmatprep.subr.bf16.mxu0 0
    %4230 = vmatpush1.bf16.msra.mxu0 0
    %4231 = vmatprep.subr.bf16.mxu0 0
    %4232 = vmatpush1.bf16.msra.mxu0 0
    %4233 = vmatprep.subr.bf16.mxu0 0
    %4234 = vmatpush1.bf16.msra.mxu0 0
    %4235 = vmatprep.subr.bf16.mxu0 0
    %4236 = vmatpush1.bf16.msra.mxu0 0
    %4237 = vmatprep.subr.bf16.mxu0 0
    %4238 = vmatpush1.bf16.msra.mxu0 0
    %4239 = vmatprep.subr.bf16.mxu0 0
    %4240 = vmatpush1.bf16.msra.mxu0 0
    %4241 = vmatprep.subr.bf16.mxu0 0
    %4242 = vmatpush1.bf16.msra.mxu0 0
    %4243 = vmatprep.subr.bf16.mxu0 0
    %4244 = vmatpush1.bf16.msra.mxu0 0
    %4245 = vmatprep.subr.bf16.mxu0 0
    %4246 = vmatpush1.bf16.msra.mxu0 0
    %4247 = vmatprep.subr.bf16.mxu0 0
    %4248 = vmatpush1.bf16.msra.mxu0 0
    %4249 = vmatprep.subr.bf16.mxu0 0
    %4250 = vmatpush1.bf16.msra.mxu0 0
    %4251 = vmatprep.subr.bf16.mxu0 0
    %4252 = vmatpush1.bf16.msra.mxu0 0
    %4253 = vmatprep.subr.bf16.mxu0 0
    %4254 = vmatpush1.bf16.msra.mxu0 0
    %4255 = vmatprep.mubr.bf16.mxu0 0
    %4256 = vmatmul.mubr.bf16.gmra.mrb[0].mxu0 %v4221
    %v4257 = vpop.f32.mrb[0].mxu0
    %v4258 = vadd.f32 0.0, %v4257
    %v4259 = vpop.f32.mrb[0].mxu0
    %v4260 = vpop.f32.mrb[0].mxu0
    %v4261 = vpop.f32.mrb[0].mxu0
    %4262 = vdwg.mxu0
    %v4263 = vsel %vm161, %v3948, 0.0
    %v4264 = vsel %vm161, %v3994, 0.0
    %v4265 = vadd.f32 %v4263, %v4264
    %v4266 = vsel %vm161, %v4040, 0.0
    %v4267 = vadd.f32 %v4265, %v4266
    %v4268 = vsel %vm161, %v4086, 0.0
    %v4269 = vadd.f32 %v4267, %v4268
    %v4270 = vsel %vm161, %v4129, 0.0
    %v4271 = vsel %vm161, %v4172, 0.0
    %v4272 = vadd.f32 %v4270, %v4271
    %v4273 = vsel %vm161, %v4215, 0.0
    %v4274 = vadd.f32 %v4272, %v4273
    %v4275 = vsel %vm161, %v4258, 0.0
    %v4276 = vadd.f32 %v4274, %v4275
    %v4277 = vld [vmem:[%s13] sm:$0x1]
    %v4279 = vlaneseq
    %v4280 = vshrl.u32 %v4279, 7
    %v4281 = vsub.s32 0, %v4280
    %v4282 = vrot.slane %v4277, %v4281
    %v4284 = vadd.f32 %v4269, %v4282
    %v4285 = vadd.f32 %v4276, %v4282
    %v4286 = vadd.f32 %v73, %v2189
    %v4287 = vadd.f32 %v74, %v2190
    %v4288 = vadd.f32 %v4286, %v4284
    %v4289 = vadd.f32 %v4287, %v4285
    %v4290 = vld [vmem:[%s18] sm:$0x1]
    %v4291 = vld [vmem:[%s19] sm:$0x1]
    %v4292 = vsel %vm161, %v4288, 0.0
    %4293 = vadd.xlane.f32.xlu0 %v4292
    %v4294 = vpop.xlane.xlu0 %4293
    %v4295 = vsel %vm161, %v4289, 0.0
    %4296 = vadd.xlane.f32.xlu0 %v4295
    %v4297 = vpop.xlane.xlu0 %4296
    %v4298 = vrcp.pop 32.0
    %v4299 = vmul.f32 %v4294, %v4298
    %v4300 = vmul.f32 %v4297, %v4298
    %v4301 = vsub.f32 %v4288, %v4299
    %v4302 = vsub.f32 %v4289, %v4300
    %v4303 = vmul.f32 %v4301, %v4301
    %v4304 = vmul.f32 %v4302, %v4302
    %v4305 = vsel %vm161, %v4303, 0.0
    %4306 = vadd.xlane.f32.xlu0 %v4305
    %v4307 = vpop.xlane.xlu0 %4306
    %v4308 = vsel %vm161, %v4304, 0.0
    %4309 = vadd.xlane.f32.xlu0 %v4308
    %v4310 = vpop.xlane.xlu0 %4309
    %v4311 = vmul.f32 %v4307, %v4298
    %v4312 = vmul.f32 %v4310, %v4298
    %v4313 = vadd.f32 %v4311, 1e-05
    %v4314 = vadd.f32 %v4312, 1e-05
    %v4315 = vrsqrt.pop %v4313
    %v4316 = vrsqrt.pop %v4314
    %v4317 = vmul.f32 %v4301, %v4315
    %v4318 = vmul.f32 %v4302, %v4316
    %v4320 = vlaneseq
    %v4321 = vshrl.u32 %v4320, 7
    %v4322 = vsub.s32 0, %v4321
    %v4323 = vrot.slane %v4290, %v4322
    %v4325 = vmul.f32 %v4317, %v4323
    %v4326 = vmul.f32 %v4318, %v4323
    %v4328 = vlaneseq
    %v4329 = vshrl.u32 %v4328, 7
    %v4330 = vsub.s32 0, %v4329
    %v4331 = vrot.slane %v4291, %v4330
    %v4333 = vadd.f32 %v4325, %v4331
    %v4334 = vadd.f32 %v4326, %v4331
    %v4335 = vpack.c.bf16 %v4333, %v4333
    %v4336 = vpack.c.bf16 %v4334, %v4334
    %v4337 = vld [vmem:[%s14] sm:$0xf]
    %v4338 = vld [vmem:[%s14 + $0x4] sm:$0xf]
    %v4339 = vld [vmem:[%s14 + $0x8] sm:$0xf]
    %v4340 = vld [vmem:[%s14 + $0xc] sm:$0xf]
    %v4341 = vld [vmem:[%s15] sm:$0x1]
    %v4343 = vlaneseq
    %v4344 = vshrl.u32 %v4343, 7
    %v4345 = vsub.s32 0, %v4344
    %v4346 = vrot.slane %v4341, %v4345
    %v4352 = vunpack.c.l.b16 %v4337
    %v4353 = vunpack.c.l.b16 %v4338
    %v4354 = vunpack.c.l.b16 %v4339
    %v4355 = vunpack.c.l.b16 %v4340
    %v4356 = vpack.c.b16 %v4353, %v4352
    %v4357 = vpack.c.b16 %v4355, %v4354
    %v4361 = vsel %vm161, %v4335, 0
    %4363 = vmatprep.subr.bf16.mxu0 0
    %4364 = vmatpush1.bf16.msra.mxu0 %v4356
    %4365 = vmatprep.subr.bf16.mxu0 0
    %4366 = vmatpush1.bf16.msra.mxu0 %v4357
    %4367 = vmatprep.subr.bf16.mxu0 0
    %4368 = vmatpush1.bf16.msra.mxu0 0
    %4369 = vmatprep.subr.bf16.mxu0 0
    %4370 = vmatpush1.bf16.msra.mxu0 0
    %4371 = vmatprep.subr.bf16.mxu0 0
    %4372 = vmatpush1.bf16.msra.mxu0 0
    %4373 = vmatprep.subr.bf16.mxu0 0
    %4374 = vmatpush1.bf16.msra.mxu0 0
    %4375 = vmatprep.subr.bf16.mxu0 0
    %4376 = vmatpush1.bf16.msra.mxu0 0
    %4377 = vmatprep.subr.bf16.mxu0 0
    %4378 = vmatpush1.bf16.msra.mxu0 0
    %4379 = vmatprep.subr.bf16.mxu0 0
    %4380 = vmatpush1.bf16.msra.mxu0 0
    %4381 = vmatprep.subr.bf16.mxu0 0
    %4382 = vmatpush1.bf16.msra.mxu0 0
    %4383 = vmatprep.subr.bf16.mxu0 0
    %4384 = vmatpush1.bf16.msra.mxu0 0
    %4385 = vmatprep.subr.bf16.mxu0 0
    %4386 = vmatpush1.bf16.msra.mxu0 0
    %4387 = vmatprep.subr.bf16.mxu0 0
    %4388 = vmatpush1.bf16.msra.mxu0 0
    %4389 = vmatprep.subr.bf16.mxu0 0
    %4390 = vmatpush1.bf16.msra.mxu0 0
    %4391 = vmatprep.subr.bf16.mxu0 0
    %4392 = vmatpush1.bf16.msra.mxu0 0
    %4393 = vmatprep.subr.bf16.mxu0 0
    %4394 = vmatpush1.bf16.msra.mxu0 0
    %4395 = vmatprep.mubr.bf16.mxu0 0
    %4396 = vmatmul.mubr.bf16.gmra.mrb[0].mxu0 %v4361
    %v4397 = vpop.f32.mrb[0].mxu0
    %v4398 = vadd.f32 %v4346, %v4397
    %v4399 = vpop.f32.mrb[0].mxu0
    %v4400 = vpop.f32.mrb[0].mxu0
    %v4401 = vpop.f32.mrb[0].mxu0
    %4402 = vdwg.mxu0
    %v4404 = vsel %vm161, %v4336, 0
    %4406 = vmatprep.subr.bf16.mxu0 0
    %4407 = vmatpush1.bf16.msra.mxu0 %v4356
    %4408 = vmatprep.subr.bf16.mxu0 0
    %4409 = vmatpush1.bf16.msra.mxu0 %v4357
    %4410 = vmatprep.subr.bf16.mxu0 0
    %4411 = vmatpush1.bf16.msra.mxu0 0
    %4412 = vmatprep.subr.bf16.mxu0 0
    %4413 = vmatpush1.bf16.msra.mxu0 0
    %4414 = vmatprep.subr.bf16.mxu0 0
    %4415 = vmatpush1.bf16.msra.mxu0 0
    %4416 = vmatprep.subr.bf16.mxu0 0
    %4417 = vmatpush1.bf16.msra.mxu0 0
    %4418 = vmatprep.subr.bf16.mxu0 0
    %4419 = vmatpush1.bf16.msra.mxu0 0
    %4420 = vmatprep.subr.bf16.mxu0 0
    %4421 = vmatpush1.bf16.msra.mxu0 0
    %4422 = vmatprep.subr.bf16.mxu0 0
    %4423 = vmatpush1.bf16.msra.mxu0 0
    %4424 = vmatprep.subr.bf16.mxu0 0
    %4425 = vmatpush1.bf16.msra.mxu0 0
    %4426 = vmatprep.subr.bf16.mxu0 0
    %4427 = vmatpush1.bf16.msra.mxu0 0
    %4428 = vmatprep.subr.bf16.mxu0 0
    %4429 = vmatpush1.bf16.msra.mxu0 0
    %4430 = vmatprep.subr.bf16.mxu0 0
    %4431 = vmatpush1.bf16.msra.mxu0 0
    %4432 = vmatprep.subr.bf16.mxu0 0
    %4433 = vmatpush1.bf16.msra.mxu0 0
    %4434 = vmatprep.subr.bf16.mxu0 0
    %4435 = vmatpush1.bf16.msra.mxu0 0
    %4436 = vmatprep.subr.bf16.mxu0 0
    %4437 = vmatpush1.bf16.msra.mxu0 0
    %4438 = vmatprep.mubr.bf16.mxu0 0
    %4439 = vmatmul.mubr.bf16.gmra.mrb[0].mxu0 %v4404
    %v4440 = vpop.f32.mrb[0].mxu0
    %v4441 = vadd.f32 %v4346, %v4440
    %v4442 = vpop.f32.mrb[0].mxu0
    %v4443 = vpop.f32.mrb[0].mxu0
    %v4444 = vpop.f32.mrb[0].mxu0
    %4445 = vdwg.mxu0
    %v4446 = vmax.f32 %v4398, 0.0
    %v4447 = vmax.f32 %v4441, 0.0
    %v4448 = vpack.c.bf16 %v4446, %v4446
    %v4449 = vpack.c.bf16 %v4447, %v4447
    %v4450 = vld [vmem:[%s16] sm:$0xf]
    %v4451 = vld [vmem:[%s16 + $0x4] sm:$0xf]
    %v4452 = vld [vmem:[%s16 + $0x8] sm:$0xf]
    %v4453 = vld [vmem:[%s16 + $0xc] sm:$0xf]
    %v4454 = vld [vmem:[%s16 + $0x10] sm:$0xf]
    %v4455 = vld [vmem:[%s16 + $0x14] sm:$0xf]
    %v4456 = vld [vmem:[%s16 + $0x18] sm:$0xf]
    %v4457 = vld [vmem:[%s16 + $0x1c] sm:$0xf]
    %v4458 = vld [vmem:[%s17] sm:$0x1]
    %v4460 = vlaneseq
    %v4461 = vshrl.u32 %v4460, 7
    %v4462 = vsub.s32 0, %v4461
    %v4463 = vrot.slane %v4458, %v4462
    %v4473 = vunpack.c.l.b16 %v4450
    %v4474 = vunpack.c.l.b16 %v4451
    %v4475 = vunpack.c.l.b16 %v4452
    %v4476 = vunpack.c.l.b16 %v4453
    %v4477 = vunpack.c.l.b16 %v4454
    %v4478 = vunpack.c.l.b16 %v4455
    %v4479 = vunpack.c.l.b16 %v4456
    %v4480 = vunpack.c.l.b16 %v4457
    %v4481 = vpack.c.b16 %v4474, %v4473
    %v4482 = vpack.c.b16 %v4476, %v4475
    %v4483 = vpack.c.b16 %v4478, %v4477
    %v4484 = vpack.c.b16 %v4480, %v4479
    %vm4489 = vcmask 523264
    %v4491 = vsel %vm4489, %v4448, 0
    %4493 = vmatprep.subr.bf16.mxu0 0
    %4494 = vmatpush1.bf16.msra.mxu0 %v4481
    %4495 = vmatprep.subr.bf16.mxu0 0
    %4496 = vmatpush1.bf16.msra.mxu0 %v4482
    %4497 = vmatprep.subr.bf16.mxu0 0
    %4498 = vmatpush1.bf16.msra.mxu0 %v4483
    %4499 = vmatprep.subr.bf16.mxu0 0
    %4500 = vmatpush1.bf16.msra.mxu0 %v4484
    %4501 = vmatprep.subr.bf16.mxu0 0
    %4502 = vmatpush1.bf16.msra.mxu0 0
    %4503 = vmatprep.subr.bf16.mxu0 0
    %4504 = vmatpush1.bf16.msra.mxu0 0
    %4505 = vmatprep.subr.bf16.mxu0 0
    %4506 = vmatpush1.bf16.msra.mxu0 0
    %4507 = vmatprep.subr.bf16.mxu0 0
    %4508 = vmatpush1.bf16.msra.mxu0 0
    %4509 = vmatprep.subr.bf16.mxu0 0
    %4510 = vmatpush1.bf16.msra.mxu0 0
    %4511 = vmatprep.subr.bf16.mxu0 0
    %4512 = vmatpush1.bf16.msra.mxu0 0
    %4513 = vmatprep.subr.bf16.mxu0 0
    %4514 = vmatpush1.bf16.msra.mxu0 0
    %4515 = vmatprep.subr.bf16.mxu0 0
    %4516 = vmatpush1.bf16.msra.mxu0 0
    %4517 = vmatprep.subr.bf16.mxu0 0
    %4518 = vmatpush1.bf16.msra.mxu0 0
    %4519 = vmatprep.subr.bf16.mxu0 0
    %4520 = vmatpush1.bf16.msra.mxu0 0
    %4521 = vmatprep.subr.bf16.mxu0 0
    %4522 = vmatpush1.bf16.msra.mxu0 0
    %4523 = vmatprep.subr.bf16.mxu0 0
    %4524 = vmatpush1.bf16.msra.mxu0 0
    %4525 = vmatprep.mubr.bf16.mxu0 0
    %4526 = vmatmul.mubr.bf16.gmra.mrb[0].mxu0 %v4491
    %v4527 = vpop.f32.mrb[0].mxu0
    %v4528 = vadd.f32 %v4463, %v4527
    %v4529 = vpop.f32.mrb[0].mxu0
    %v4530 = vpop.f32.mrb[0].mxu0
    %v4531 = vpop.f32.mrb[0].mxu0
    %4532 = vdwg.mxu0
    %v4534 = vsel %vm4489, %v4449, 0
    %4536 = vmatprep.subr.bf16.mxu0 0
    %4537 = vmatpush1.bf16.msra.mxu0 %v4481
    %4538 = vmatprep.subr.bf16.mxu0 0
    %4539 = vmatpush1.bf16.msra.mxu0 %v4482
    %4540 = vmatprep.subr.bf16.mxu0 0
    %4541 = vmatpush1.bf16.msra.mxu0 %v4483
    %4542 = vmatprep.subr.bf16.mxu0 0
    %4543 = vmatpush1.bf16.msra.mxu0 %v4484
    %4544 = vmatprep.subr.bf16.mxu0 0
    %4545 = vmatpush1.bf16.msra.mxu0 0
    %4546 = vmatprep.subr.bf16.mxu0 0
    %4547 = vmatpush1.bf16.msra.mxu0 0
    %4548 = vmatprep.subr.bf16.mxu0 0
    %4549 = vmatpush1.bf16.msra.mxu0 0
    %4550 = vmatprep.subr.bf16.mxu0 0
    %4551 = vmatpush1.bf16.msra.mxu0 0
    %4552 = vmatprep.subr.bf16.mxu0 0
    %4553 = vmatpush1.bf16.msra.mxu0 0
    %4554 = vmatprep.subr.bf16.mxu0 0
    %4555 = vmatpush1.bf16.msra.mxu0 0
    %4556 = vmatprep.subr.bf16.mxu0 0
    %4557 = vmatpush1.bf16.msra.mxu0 0
    %4558 = vmatprep.subr.bf16.mxu0 0
    %4559 = vmatpush1.bf16.msra.mxu0 0
    %4560 = vmatprep.subr.bf16.mxu0 0
    %4561 = vmatpush1.bf16.msra.mxu0 0
    %4562 = vmatprep.subr.bf16.mxu0 0
    %4563 = vmatpush1.bf16.msra.mxu0 0
    %4564 = vmatprep.subr.bf16.mxu0 0
    %4565 = vmatpush1.bf16.msra.mxu0 0
    %4566 = vmatprep.subr.bf16.mxu0 0
    %4567 = vmatpush1.bf16.msra.mxu0 0
    %4568 = vmatprep.mubr.bf16.mxu0 0
    %4569 = vmatmul.mubr.bf16.gmra.mrb[0].mxu0 %v4534
    %v4570 = vpop.f32.mrb[0].mxu0
    %v4571 = vadd.f32 %v4463, %v4570
    %v4572 = vpop.f32.mrb[0].mxu0
    %v4573 = vpop.f32.mrb[0].mxu0
    %v4574 = vpop.f32.mrb[0].mxu0
    %4575 = vdwg.mxu0
    %v4576 = vadd.f32 %v4333, %v4528
    %v4577 = vadd.f32 %v4334, %v4571
    %v4578 = vld [vmem:[%s20] sm:$0x1]
    %v4579 = vld [vmem:[%s21] sm:$0x1]
    %v4580 = vsel %vm161, %v4576, 0.0
    %4581 = vadd.xlane.f32.xlu0 %v4580
    %v4582 = vpop.xlane.xlu0 %4581
    %v4583 = vsel %vm161, %v4577, 0.0
    %4584 = vadd.xlane.f32.xlu0 %v4583
    %v4585 = vpop.xlane.xlu0 %4584
    %v4586 = vmul.f32 %v4582, %v4298
    %v4587 = vmul.f32 %v4585, %v4298
    %v4588 = vsub.f32 %v4576, %v4586
    %v4589 = vsub.f32 %v4577, %v4587
    %v4590 = vmul.f32 %v4588, %v4588
    %v4591 = vmul.f32 %v4589, %v4589
    %v4592 = vsel %vm161, %v4590, 0.0
    %4593 = vadd.xlane.f32.xlu0 %v4592
    %v4594 = vpop.xlane.xlu0 %4593
    %v4595 = vsel %vm161, %v4591, 0.0
    %4596 = vadd.xlane.f32.xlu0 %v4595
    %v4597 = vpop.xlane.xlu0 %4596
    %v4598 = vmul.f32 %v4594, %v4298
    %v4599 = vmul.f32 %v4597, %v4298
    %v4600 = vadd.f32 %v4598, 1e-05
    %v4601 = vadd.f32 %v4599, 1e-05
    %v4602 = vrsqrt.pop %v4600
    %v4603 = vrsqrt.pop %v4601
    %v4604 = vmul.f32 %v4588, %v4602
    %v4605 = vmul.f32 %v4589, %v4603
    %v4607 = vlaneseq
    %v4608 = vshrl.u32 %v4607, 7
    %v4609 = vsub.s32 0, %v4608
    %v4610 = vrot.slane %v4578, %v4609
    %v4612 = vmul.f32 %v4604, %v4610
    %v4613 = vmul.f32 %v4605, %v4610
    %v4615 = vlaneseq
    %v4616 = vshrl.u32 %v4615, 7
    %v4617 = vsub.s32 0, %v4616
    %v4618 = vrot.slane %v4579, %v4617
    %v4620 = vadd.f32 %v4612, %v4618
    %v4621 = vadd.f32 %v4613, %v4618
    %4622 = vst.msk [vmem:[#allocation2] sm:$0xff] %vm161, %v4620
    %4623 = vst.msk [vmem:[#allocation2 + $0x8] sm:$0xff] %vm161, %v4621
    // Predicated region
    $region90: #{tpu_custom_call.1} parent=1 // pred_check
      _
    $region91: #{tpu_custom_call.1} parent=1 // pred_check_branch
      %4625 = sbr.rel (0) target = $region93
    $region92: #{tpu_custom_call.1} parent=1 // pred_region
      %s4627 = ssub.s32 256, 256
      %4628 = vsyncadd [#allocation3], %s4627
      %s4629 = sshll.u32 [#allocation2], 4
      %s4630 = int_to_ptr.vmem [resolvable:$true] %s4629
      %4635 = dma.vmem_to_hbm [thread:$0]  %s4630, 256, %s22, [#allocation3], 128, 128, 8
    $region93: #{tpu_custom_call.1} parent=1 // pred_fallthru
      _
    // Predicated region
    $region94: #{tpu_custom_call.1} parent=1 // pred_check
      _
    $region95: #{tpu_custom_call.1} parent=1 // pred_check_branch
      %4637 = sbr.rel (0) target = $region97
    $region96: #{tpu_custom_call.1} parent=1 // pred_region
      %4638 = dma.done [#allocation3], 256
    $region97: #{tpu_custom_call.1} parent=1 // pred_fallthru
      _
    %4639 = vsyncpa [#allocation3], 1

</llo_original>
